<compile_context>
chip_gen: v6e
topology: v6e:2x2x1
jax: 0.10.0
libtpu: 0.0.40
codegen_flags: <defaults>
</compile_context>

<pallas_src>
import functools
import math

import jax
import jax.numpy as jnp
from jax.experimental import pallas as pl
from jax.experimental.pallas import tpu as pltpu

# ---- bert-mini config (vocab / positions shrunk for the synthetic test) ----
HIDDEN = 256
N_LAYERS = 4
N_HEADS = 4
HEAD_DIM = HIDDEN // N_HEADS
INTERMEDIATE = 1024
I_CHUNK = 256                      # FFN intermediate chunk width (lane-aligned, 4 chunks)
LN_EPS = 1e-12
NEG_INF = -1e9

_VMEM_LIMIT = 32 * 1024 * 1024     # safe scoped-VMEM budget on v5e / v6e / v7x


def _gelu_tanh(x):
    # TODO(synk): HF BERT uses exact erf-GELU; tanh approximation used for robust Mosaic lowering.
    c = math.sqrt(2.0 / math.pi)
    return 0.5 * x * (1.0 + jnp.tanh(c * (x + 0.044715 * x * x * x)))


def _layernorm_f32(y, g, b, eps):
    mu = jnp.mean(y, axis=-1, keepdims=True)
    yc = y - mu
    var = jnp.mean(yc * yc, axis=-1, keepdims=True)
    return yc * jax.lax.rsqrt(var + eps) * g + b


# ------------------------- fused encoder kernel -------------------------

def _encoder_kernel(x_ref, mask_ref, eg_ref, eb_ref,
                    qkv_w_ref, qkv_b_ref, ao_w_ref, ao_b_ref, aln_g_ref, aln_b_ref,
                    i_w_ref, i_b_ref, o_w_ref, o_b_ref, fln_g_ref, fln_b_ref,
                    h_ref, *, eps):
    """One (batch element, layer) grid step.  h_ref is the VMEM-resident layer carry."""
    l = pl.program_id(1)

    # Layer 0: embedding LayerNorm initializes the resident activation block.
    @pl.when(l == 0)
    def _():
        x = x_ref[...].astype(jnp.float32)
        h_ref[...] = _layernorm_f32(x, eg_ref[...], eb_ref[...], eps).astype(h_ref.dtype)

    h = h_ref[...]                                   # (S, 256) bf16, input to this layer
    mask = mask_ref[...]                             # (1, S) f32 additive key mask

    # ---- fused QKV projection (Q already pre-scaled by 1/sqrt(Dh)) ----
    qkv = jnp.dot(h, qkv_w_ref[...], preferred_element_type=jnp.float32) + qkv_b_ref[...]
    qkv = qkv.astype(jnp.bfloat16)                   # (S, 768), stays in vregs

    # ---- 4-head attention, static unroll; head outputs cast to bf16 before concat ----
    # TODO(synk): add query-row tiling (flash-style) once S grows beyond ~128.
    outs = []
    for hd in range(N_HEADS):
        q = qkv[:, hd * HEAD_DIM:(hd + 1) * HEAD_DIM]                              # (S, Dh)
        k = qkv[:, HIDDEN + hd * HEAD_DIM:HIDDEN + (hd + 1) * HEAD_DIM]            # (S, Dh)
        v = qkv[:, 2 * HIDDEN + hd * HEAD_DIM:2 * HIDDEN + (hd + 1) * HEAD_DIM]    # (S, Dh)
        s = jax.lax.dot_general(q, k, (((1,), (1,)), ((), ())),
                                preferred_element_type=jnp.float32)                # (S, S)
        s = s + mask
        mx = jnp.max(s, axis=-1, keepdims=True)
        e = jnp.exp(s - mx)
        p = e * pl.reciprocal(jnp.sum(e, axis=-1, keepdims=True), approx=True)
        outs.append(jnp.dot(p.astype(jnp.bfloat16), v,
                            preferred_element_type=jnp.float32).astype(jnp.bfloat16))
    ctx = jnp.concatenate(outs, axis=-1)             # (S, 256) bf16, lane-dense

    # ---- attention output projection + residual + LayerNorm (residual from vregs) ----
    y = jnp.dot(ctx, ao_w_ref[...], preferred_element_type=jnp.float32)
    y = y + ao_b_ref[...] + h.astype(jnp.float32)
    h1 = _layernorm_f32(y, aln_g_ref[...], aln_b_ref[...], eps)       # (S, 256) f32
    h1_bf = h1.astype(jnp.bfloat16)

    # ---- FFN with chunked INTERMEDIATE dim: no full (S, 1024) f32 intermediate ----
    acc = jnp.zeros(h1.shape, jnp.float32)
    for c in range(INTERMEDIATE // I_CHUNK):
        lo, hi = c * I_CHUNK, (c + 1) * I_CHUNK
        t = jnp.dot(h1_bf, i_w_ref[:, lo:hi], preferred_element_type=jnp.float32)
        t = t + i_b_ref[:, lo:hi]
        # bf16 GELU targets v6e/v7x (bf16 VPU/EUP); v5e promotes internally.
        t = _gelu_tanh(t.astype(jnp.bfloat16))
        acc = acc + jnp.dot(t, o_w_ref[lo:hi, :], preferred_element_type=jnp.float32)
    y2 = acc + o_b_ref[...] + h1                      # residual add in f32, still in vregs
    h_ref[...] = _layernorm_f32(y2, fln_g_ref[...], fln_b_ref[...], eps).astype(h_ref.dtype)


def encoder_forward(x_emb, add_mask, p):
    """x_emb: (B, S, 256) f32 raw embedding sums; add_mask: (B, 1, S) f32 -> (B, S, 256) bf16."""
    B, S, H = x_emb.shape
    act_map = lambda b, l: (b, 0, 0)      # per-batch block, layer-invariant (VMEM-resident)
    w_map = lambda b, l: (l, 0, 0)        # per-layer weight slab
    g_map = lambda b, l: (0, 0)           # global (embedding LN) params

    return pl.pallas_call(
        functools.partial(_encoder_kernel, eps=LN_EPS),
        out_shape=jax.ShapeDtypeStruct((B, S, H), jnp.bfloat16),
        grid=(B, N_LAYERS),
        in_specs=[
            pl.BlockSpec((None, S, H), act_map),                 # x_emb
            pl.BlockSpec((None, 1, S), act_map),                 # additive mask
            pl.BlockSpec((1, H), g_map),                         # emb_ln_g
            pl.BlockSpec((1, H), g_map),                         # emb_ln_b
            pl.BlockSpec((None, H, 3 * H), w_map),               # qkv_w (Q pre-scaled)
            pl.BlockSpec((None, 1, 3 * H), w_map),               # qkv_b
            pl.BlockSpec((None, H, H), w_map),                   # ao_w
            pl.BlockSpec((None, 1, H), w_map),                   # ao_b
            pl.BlockSpec((None, 1, H), w_map),                   # attn_ln_g
            pl.BlockSpec((None, 1, H), w_map),                   # attn_ln_b
            pl.BlockSpec((None, H, INTERMEDIATE), w_map),        # i_w
            pl.BlockSpec((None, 1, INTERMEDIATE), w_map),        # i_b
            pl.BlockSpec((None, INTERMEDIATE, H), w_map),        # o_w
            pl.BlockSpec((None, 1, H), w_map),                   # o_b
            pl.BlockSpec((None, 1, H), w_map),                   # ffn_ln_g
            pl.BlockSpec((None, 1, H), w_map),                   # ffn_ln_b
        ],
        out_specs=pl.BlockSpec((None, S, H), act_map),
        compiler_params=pltpu.CompilerParams(
            dimension_semantics=("parallel", "arbitrary"),
            vmem_limit_bytes=_VMEM_LIMIT),
    )(x_emb, add_mask, p["emb_ln_g"], p["emb_ln_b"],
      p["qkv_w"], p["qkv_b"], p["ao_w"], p["ao_b"], p["attn_ln_g"], p["attn_ln_b"],
      p["i_w"], p["i_b"], p["o_w"], p["o_b"], p["ffn_ln_g"], p["ffn_ln_b"])


# ------------------------- parameters -------------------------

def init_params(key, vocab_size, max_pos, num_labels):
    keys = iter(jax.random.split(key, 64))

    def w(shape, scale=0.02):
        return (scale * jax.random.normal(next(keys), shape)).astype(jnp.float32)

    def zeros(n):
        return jnp.zeros((n,), jnp.float32)

    def ones(n):
        return jnp.ones((n,), jnp.float32)

    params = {
        "word_emb": w((vocab_size, HIDDEN)),
        "pos_emb": w((max_pos, HIDDEN)),
        "type_emb": w((2, HIDDEN)),
        "emb_ln_g": ones(HIDDEN),
        "emb_ln_b": zeros(HIDDEN),
        "layers": [],
        "pooler_w": w((HIDDEN, HIDDEN)),
        "pooler_b": zeros(HIDDEN),
        "cls_w": w((HIDDEN, num_labels)),
        "cls_b": zeros(num_labels),
    }
    for _ in range(N_LAYERS):
        params["layers"].append({
            "q_w": w((HIDDEN, HIDDEN)), "q_b": zeros(HIDDEN),
            "k_w": w((HIDDEN, HIDDEN)), "k_b": zeros(HIDDEN),
            "v_w": w((HIDDEN, HIDDEN)), "v_b": zeros(HIDDEN),
            "ao_w": w((HIDDEN, HIDDEN)), "ao_b": zeros(HIDDEN),
            "attn_ln_g": ones(HIDDEN), "attn_ln_b": zeros(HIDDEN),
            "i_w": w((HIDDEN, INTERMEDIATE)), "i_b": zeros(INTERMEDIATE),
            "o_w": w((INTERMEDIATE, HIDDEN)), "o_b": zeros(HIDDEN),
            "ffn_ln_g": ones(HIDDEN), "ffn_ln_b": zeros(HIDDEN),
        })
    return params


def prepare_params(params):
    """One-time prep: fuse Q/K/V (fold 1/sqrt(Dh) into Q), stack per-layer weights along a
    leading N_LAYERS axis, cast MXU weights to bf16, keep biases / LN params in f32."""
    scale = 1.0 / math.sqrt(HEAD_DIM)
    Ls = params["layers"]

    def stack(fn):
        return jnp.stack([fn(L) for L in Ls], axis=0)

    return {
        "word_emb": params["word_emb"],
        "pos_emb": params["pos_emb"],
        "type_emb": params["type_emb"],
        "emb_ln_g": params["emb_ln_g"].reshape(1, HIDDEN),
        "emb_ln_b": params["emb_ln_b"].reshape(1, HIDDEN),
        "pooler_w": params["pooler_w"], "pooler_b": params["pooler_b"],
        "cls_w": params["cls_w"], "cls_b": params["cls_b"],
        "qkv_w": stack(lambda L: jnp.concatenate(
            [L["q_w"] * scale, L["k_w"], L["v_w"]], axis=1)).astype(jnp.bfloat16),
        "qkv_b": stack(lambda L: jnp.concatenate(
            [L["q_b"] * scale, L["k_b"], L["v_b"]], axis=0).reshape(1, 3 * HIDDEN)),
        "ao_w": stack(lambda L: L["ao_w"]).astype(jnp.bfloat16),
        "ao_b": stack(lambda L: L["ao_b"].reshape(1, HIDDEN)),
        "attn_ln_g": stack(lambda L: L["attn_ln_g"].reshape(1, HIDDEN)),
        "attn_ln_b": stack(lambda L: L["attn_ln_b"].reshape(1, HIDDEN)),
        "i_w": stack(lambda L: L["i_w"]).astype(jnp.bfloat16),
        "i_b": stack(lambda L: L["i_b"].reshape(1, INTERMEDIATE)),
        "o_w": stack(lambda L: L["o_w"]).astype(jnp.bfloat16),
        "o_b": stack(lambda L: L["o_b"].reshape(1, HIDDEN)),
        "ffn_ln_g": stack(lambda L: L["ffn_ln_g"].reshape(1, HIDDEN)),
        "ffn_ln_b": stack(lambda L: L["ffn_ln_b"].reshape(1, HIDDEN)),
    }


# ------------------------- forward pass -------------------------

def bert_fine_tune_mini_forward(params, input_ids, attention_mask):
    B, S = input_ids.shape

    # Embedding gather (glue, plain JAX); token_type_ids = 0.
    x = (params["word_emb"][input_ids]
         + params["pos_emb"][None, :S, :]
         + params["type_emb"][0][None, None, :])                 # (B, S, 256) f32

    # HF-style additive key mask kept tiny: (B, 1, S) f32, broadcast inside the kernel.
    add_mask = ((1.0 - attention_mask.astype(jnp.float32)) * NEG_INF)[:, None, :]

    # Whole 4-layer encoder (+ embedding LayerNorm) in ONE pallas_call.
    h = encoder_forward(x, add_mask, params)                     # (B, S, 256) bf16

    # Pooler + classifier: tiny (B, 256) matmuls, below the (8, 128) tile -> plain JAX in f32.
    cls_tok = h[:, 0, :].astype(jnp.float32)
    pooled = jnp.tanh(cls_tok @ params["pooler_w"] + params["pooler_b"])
    logits = pooled @ params["cls_w"] + params["cls_b"]
    return logits


# ------------------------- demo -------------------------

if __name__ == "__main__":
    B, S = 2, 8
    VOCAB = 128
    MAX_POS = 32
    NUM_LABELS = 3

    key = jax.random.PRNGKey(0)
    pkey, ikey = jax.random.split(key)

    raw_params = init_params(pkey, VOCAB, MAX_POS, NUM_LABELS)
    params = prepare_params(raw_params)

    input_ids = jax.random.randint(ikey, (B, S), 0, VOCAB, dtype=jnp.int32)
    lengths = jnp.array([S, 5], dtype=jnp.int32)
    attention_mask = (jnp.arange(S)[None, :] < lengths[:, None]).astype(jnp.int32)

    forward = jax.jit(bert_fine_tune_mini_forward)
    logits = forward(params, input_ids, attention_mask)
    jax.block_until_ready(logits)

    assert logits.shape == (B, NUM_LABELS), logits.shape
    assert bool(jnp.all(jnp.isfinite(logits)))
    print("KERNEL_OK")
</pallas_src>

<mosaic_0001>
module attributes {stable_mosaic.version = 11 : i64} {
  func.func @_encoder_kernel(%arg0: i32, %arg1: i32, %arg2: memref<1x8x256xf32, #tpu.memory_space<vmem>>, %arg3: memref<1x1x8xf32, #tpu.memory_space<vmem>>, %arg4: memref<1x256xf32, #tpu.memory_space<vmem>>, %arg5: memref<1x256xf32, #tpu.memory_space<vmem>>, %arg6: memref<1x256x768xbf16, #tpu.memory_space<vmem>>, %arg7: memref<1x1x768xf32, #tpu.memory_space<vmem>>, %arg8: memref<1x256x256xbf16, #tpu.memory_space<vmem>>, %arg9: memref<1x1x256xf32, #tpu.memory_space<vmem>>, %arg10: memref<1x1x256xf32, #tpu.memory_space<vmem>>, %arg11: memref<1x1x256xf32, #tpu.memory_space<vmem>>, %arg12: memref<1x256x1024xbf16, #tpu.memory_space<vmem>>, %arg13: memref<1x1x1024xf32, #tpu.memory_space<vmem>>, %arg14: memref<1x1024x256xbf16, #tpu.memory_space<vmem>>, %arg15: memref<1x1x256xf32, #tpu.memory_space<vmem>>, %arg16: memref<1x1x256xf32, #tpu.memory_space<vmem>>, %arg17: memref<1x1x256xf32, #tpu.memory_space<vmem>>, %arg18: memref<1x8x256xbf16, #tpu.memory_space<vmem>>) attributes {dimension_semantics = [#tpu.dimension_semantics<parallel>, #tpu.dimension_semantics<arbitrary>], iteration_bounds = array<i64: 2, 4>, scalar_prefetch = 0 : i64, scratch_operands = 0 : i64, tpu.core_type = #tpu.core_type<tc>, window_params = [{transform_indices = @transform_0, window_bounds = array<i64: 1, 8, 256>}, {transform_indices = @transform_1, window_bounds = array<i64: 1, 1, 8>}, {pipeline_mode = #tpu.pipeline_mode<synchronous>, transform_indices = @transform_2, window_bounds = array<i64: 1, 256>}, {pipeline_mode = #tpu.pipeline_mode<synchronous>, transform_indices = @transform_3, window_bounds = array<i64: 1, 256>}, {transform_indices = @transform_4, window_bounds = array<i64: 1, 256, 768>}, {transform_indices = @transform_5, window_bounds = array<i64: 1, 1, 768>}, {transform_indices = @transform_6, window_bounds = array<i64: 1, 256, 256>}, {transform_indices = @transform_7, window_bounds = array<i64: 1, 1, 256>}, {transform_indices = @transform_8, window_bounds = array<i64: 1, 1, 256>}, {transform_indices = @transform_9, window_bounds = array<i64: 1, 1, 256>}, {transform_indices = @transform_10, window_bounds = array<i64: 1, 256, 1024>}, {transform_indices = @transform_11, window_bounds = array<i64: 1, 1, 1024>}, {transform_indices = @transform_12, window_bounds = array<i64: 1, 1024, 256>}, {transform_indices = @transform_13, window_bounds = array<i64: 1, 1, 256>}, {transform_indices = @transform_14, window_bounds = array<i64: 1, 1, 256>}, {transform_indices = @transform_15, window_bounds = array<i64: 1, 1, 256>}, {transform_indices = @transform_16, window_bounds = array<i64: 1, 8, 256>}]} {
    %c0_i32 = arith.constant 0 : i32
    %0 = arith.cmpi eq, %arg1, %c0_i32 : i32
    %1 = arith.extui %0 : i1 to i32
    %c0_i32_0 = arith.constant 0 : i32
    %2 = arith.cmpi ne, %1, %c0_i32_0 : i32
    scf.if %2 {
      %c0_121 = arith.constant 0 : index
      %c0_122 = arith.constant 0 : index
      %c0_123 = arith.constant 0 : index
      %260 = vector.load %arg2[%c0_121, %c0_122, %c0_123] : memref<1x8x256xf32, #tpu.memory_space<vmem>>, vector<1x8x256xf32>
      %261 = vector.shape_cast %260 : vector<1x8x256xf32> to vector<8x256xf32>
      %c0_124 = arith.constant 0 : index
      %c0_125 = arith.constant 0 : index
      %262 = vector.load %arg4[%c0_124, %c0_125] : memref<1x256xf32, #tpu.memory_space<vmem>>, vector<1x256xf32>
      %c0_126 = arith.constant 0 : index
      %c0_127 = arith.constant 0 : index
      %263 = vector.load %arg5[%c0_126, %c0_127] : memref<1x256xf32, #tpu.memory_space<vmem>>, vector<1x256xf32>
      %cst_128 = arith.constant dense<0.000000e+00> : vector<8xf32>
      %264 = vector.multi_reduction <add>, %261, %cst_128 [1] : vector<8x256xf32> to vector<8xf32>
      %265 = vector.shape_cast %264 : vector<8xf32> to vector<8x1xf32>
      %cst_129 = arith.constant 2.560000e+02 : f32
      %266 = vector.broadcast %cst_129 : f32 to vector<8x1xf32>
      %267 = arith.divf %265, %266 : vector<8x1xf32>
      %268 = vector.broadcast %267 : vector<8x1xf32> to vector<8x256xf32>
      %269 = arith.subf %261, %268 : vector<8x256xf32>
      %270 = arith.mulf %269, %269 : vector<8x256xf32>
      %cst_130 = arith.constant dense<0.000000e+00> : vector<8xf32>
      %271 = vector.multi_reduction <add>, %270, %cst_130 [1] : vector<8x256xf32> to vector<8xf32>
      %272 = vector.shape_cast %271 : vector<8xf32> to vector<8x1xf32>
      %cst_131 = arith.constant 2.560000e+02 : f32
      %273 = vector.broadcast %cst_131 : f32 to vector<8x1xf32>
      %274 = arith.divf %272, %273 : vector<8x1xf32>
      %cst_132 = arith.constant 9.99999996E-13 : f32
      %275 = vector.broadcast %cst_132 : f32 to vector<8x1xf32>
      %276 = arith.addf %274, %275 : vector<8x1xf32>
      %277 = math.rsqrt %276 : vector<8x1xf32>
      %278 = vector.broadcast %277 : vector<8x1xf32> to vector<8x256xf32>
      %279 = arith.mulf %269, %278 : vector<8x256xf32>
      %280 = vector.broadcast %262 : vector<1x256xf32> to vector<8x256xf32>
      %281 = arith.mulf %279, %280 : vector<8x256xf32>
      %282 = vector.broadcast %263 : vector<1x256xf32> to vector<8x256xf32>
      %283 = arith.addf %281, %282 : vector<8x256xf32>
      %284 = arith.truncf %283 : vector<8x256xf32> to vector<8x256xbf16>
      %c0_133 = arith.constant 0 : index
      %c0_134 = arith.constant 0 : index
      %c0_135 = arith.constant 0 : index
      %285 = vector.load %arg18[%c0_133, %c0_134, %c0_135] : memref<1x8x256xbf16, #tpu.memory_space<vmem>>, vector<1x8x256xbf16>
      %286 = vector.shape_cast %285 : vector<1x8x256xbf16> to vector<8x256xbf16>
      %287 = vector.shape_cast %284 : vector<8x256xbf16> to vector<1x8x256xbf16>
      tpu.vector_store %arg18[%c0_133, %c0_134, %c0_135], %287 {strides = array<i32>} : memref<1x8x256xbf16, #tpu.memory_space<vmem>>, vector<1x8x256xbf16>,
    } else {
    }
    %c0 = arith.constant 0 : index
    %c0_1 = arith.constant 0 : index
    %c0_2 = arith.constant 0 : index
    %3 = vector.load %arg18[%c0, %c0_1, %c0_2] : memref<1x8x256xbf16, #tpu.memory_space<vmem>>, vector<1x8x256xbf16>
    %4 = vector.shape_cast %3 : vector<1x8x256xbf16> to vector<8x256xbf16>
    %c0_3 = arith.constant 0 : index
    %c0_4 = arith.constant 0 : index
    %c0_5 = arith.constant 0 : index
    %5 = vector.load %arg3[%c0_3, %c0_4, %c0_5] : memref<1x1x8xf32, #tpu.memory_space<vmem>>, vector<1x1x8xf32>
    %6 = vector.shape_cast %5 : vector<1x1x8xf32> to vector<1x8xf32>
    %c0_6 = arith.constant 0 : index
    %c0_7 = arith.constant 0 : index
    %c0_8 = arith.constant 0 : index
    %7 = vector.load %arg6[%c0_6, %c0_7, %c0_8] : memref<1x256x768xbf16, #tpu.memory_space<vmem>>, vector<1x256x768xbf16>
    %8 = vector.shape_cast %7 : vector<1x256x768xbf16> to vector<256x768xbf16>
    %cst = arith.constant dense<0.000000e+00> : vector<8x768xf32>
    %9 = tpu.matmul %4, %8, %cst {dimension_numbers = #tpu.dot_dimension_numbers<[1], [0], [0], [1], [0, 0, 1, 1], [], []>} : vector<8x256xbf16>, vector<256x768xbf16>, vector<8x768xf32> -> vector<8x768xf32>
    %c0_9 = arith.constant 0 : index
    %c0_10 = arith.constant 0 : index
    %c0_11 = arith.constant 0 : index
    %10 = vector.load %arg7[%c0_9, %c0_10, %c0_11] : memref<1x1x768xf32, #tpu.memory_space<vmem>>, vector<1x1x768xf32>
    %11 = vector.shape_cast %10 : vector<1x1x768xf32> to vector<1x768xf32>
    %12 = vector.broadcast %11 : vector<1x768xf32> to vector<8x768xf32>
    %13 = arith.addf %9, %12 : vector<8x768xf32>
    %14 = arith.truncf %13 : vector<8x768xf32> to vector<8x768xbf16>
    %15 = vector.extract_strided_slice %14 {offsets = [0, 0], sizes = [8, 64], strides = [1, 1]} : vector<8x768xbf16> to vector<8x64xbf16>
    %16 = vector.extract_strided_slice %14 {offsets = [0, 256], sizes = [8, 64], strides = [1, 1]} : vector<8x768xbf16> to vector<8x64xbf16>
    %17 = vector.extract_strided_slice %14 {offsets = [0, 512], sizes = [8, 64], strides = [1, 1]} : vector<8x768xbf16> to vector<8x64xbf16>
    %cst_12 = arith.constant dense<0.000000e+00> : vector<8x8xf32>
    %18 = tpu.matmul %15, %16, %cst_12 {dimension_numbers = #tpu.dot_dimension_numbers<[1], [1], [0], [0], [0, 0, 1, 0], [], []>} : vector<8x64xbf16>, vector<8x64xbf16>, vector<8x8xf32> -> vector<8x8xf32>
    %19 = vector.broadcast %6 : vector<1x8xf32> to vector<8x8xf32>
    %20 = arith.addf %18, %19 : vector<8x8xf32>
    %cst_13 = arith.constant dense<0xFF800000> : vector<8xf32>
    %21 = vector.multi_reduction <maximumf>, %20, %cst_13 [1] : vector<8x8xf32> to vector<8xf32>
    %22 = vector.shape_cast %21 : vector<8xf32> to vector<8x1xf32>
    %23 = vector.broadcast %22 : vector<8x1xf32> to vector<8x8xf32>
    %24 = arith.subf %20, %23 : vector<8x8xf32>
    %25 = math.exp %24 : vector<8x8xf32>
    %cst_14 = arith.constant dense<0.000000e+00> : vector<8xf32>
    %26 = vector.multi_reduction <add>, %25, %cst_14 [1] : vector<8x8xf32> to vector<8xf32>
    %27 = vector.shape_cast %26 : vector<8xf32> to vector<8x1xf32>
    %28 = tpu.reciprocal %27 {approx = true} : vector<8x1xf32> -> vector<8x1xf32>
    %29 = vector.broadcast %28 : vector<8x1xf32> to vector<8x8xf32>
    %30 = arith.mulf %25, %29 : vector<8x8xf32>
    %31 = arith.truncf %30 : vector<8x8xf32> to vector<8x8xbf16>
    %cst_15 = arith.constant dense<0.000000e+00> : vector<8x64xf32>
    %32 = tpu.matmul %31, %17, %cst_15 {dimension_numbers = #tpu.dot_dimension_numbers<[1], [0], [0], [1], [0, 0, 1, 1], [], []>} : vector<8x8xbf16>, vector<8x64xbf16>, vector<8x64xf32> -> vector<8x64xf32>
    %33 = arith.truncf %32 : vector<8x64xf32> to vector<8x64xbf16>
    %34 = vector.extract_strided_slice %14 {offsets = [0, 64], sizes = [8, 64], strides = [1, 1]} : vector<8x768xbf16> to vector<8x64xbf16>
    %35 = vector.extract_strided_slice %14 {offsets = [0, 320], sizes = [8, 64], strides = [1, 1]} : vector<8x768xbf16> to vector<8x64xbf16>
    %36 = vector.extract_strided_slice %14 {offsets = [0, 576], sizes = [8, 64], strides = [1, 1]} : vector<8x768xbf16> to vector<8x64xbf16>
    %cst_16 = arith.constant dense<0.000000e+00> : vector<8x8xf32>
    %37 = tpu.matmul %34, %35, %cst_16 {dimension_numbers = #tpu.dot_dimension_numbers<[1], [1], [0], [0], [0, 0, 1, 0], [], []>} : vector<8x64xbf16>, vector<8x64xbf16>, vector<8x8xf32> -> vector<8x8xf32>
    %38 = vector.broadcast %6 : vector<1x8xf32> to vector<8x8xf32>
    %39 = arith.addf %37, %38 : vector<8x8xf32>
    %cst_17 = arith.constant dense<0xFF800000> : vector<8xf32>
    %40 = vector.multi_reduction <maximumf>, %39, %cst_17 [1] : vector<8x8xf32> to vector<8xf32>
    %41 = vector.shape_cast %40 : vector<8xf32> to vector<8x1xf32>
    %42 = vector.broadcast %41 : vector<8x1xf32> to vector<8x8xf32>
    %43 = arith.subf %39, %42 : vector<8x8xf32>
    %44 = math.exp %43 : vector<8x8xf32>
    %cst_18 = arith.constant dense<0.000000e+00> : vector<8xf32>
    %45 = vector.multi_reduction <add>, %44, %cst_18 [1] : vector<8x8xf32> to vector<8xf32>
    %46 = vector.shape_cast %45 : vector<8xf32> to vector<8x1xf32>
    %47 = tpu.reciprocal %46 {approx = true} : vector<8x1xf32> -> vector<8x1xf32>
    %48 = vector.broadcast %47 : vector<8x1xf32> to vector<8x8xf32>
    %49 = arith.mulf %44, %48 : vector<8x8xf32>
    %50 = arith.truncf %49 : vector<8x8xf32> to vector<8x8xbf16>
    %cst_19 = arith.constant dense<0.000000e+00> : vector<8x64xf32>
    %51 = tpu.matmul %50, %36, %cst_19 {dimension_numbers = #tpu.dot_dimension_numbers<[1], [0], [0], [1], [0, 0, 1, 1], [], []>} : vector<8x8xbf16>, vector<8x64xbf16>, vector<8x64xf32> -> vector<8x64xf32>
    %52 = arith.truncf %51 : vector<8x64xf32> to vector<8x64xbf16>
    %53 = vector.extract_strided_slice %14 {offsets = [0, 128], sizes = [8, 64], strides = [1, 1]} : vector<8x768xbf16> to vector<8x64xbf16>
    %54 = vector.extract_strided_slice %14 {offsets = [0, 384], sizes = [8, 64], strides = [1, 1]} : vector<8x768xbf16> to vector<8x64xbf16>
    %55 = vector.extract_strided_slice %14 {offsets = [0, 640], sizes = [8, 64], strides = [1, 1]} : vector<8x768xbf16> to vector<8x64xbf16>
    %cst_20 = arith.constant dense<0.000000e+00> : vector<8x8xf32>
    %56 = tpu.matmul %53, %54, %cst_20 {dimension_numbers = #tpu.dot_dimension_numbers<[1], [1], [0], [0], [0, 0, 1, 0], [], []>} : vector<8x64xbf16>, vector<8x64xbf16>, vector<8x8xf32> -> vector<8x8xf32>
    %57 = vector.broadcast %6 : vector<1x8xf32> to vector<8x8xf32>
    %58 = arith.addf %56, %57 : vector<8x8xf32>
    %cst_21 = arith.constant dense<0xFF800000> : vector<8xf32>
    %59 = vector.multi_reduction <maximumf>, %58, %cst_21 [1] : vector<8x8xf32> to vector<8xf32>
    %60 = vector.shape_cast %59 : vector<8xf32> to vector<8x1xf32>
    %61 = vector.broadcast %60 : vector<8x1xf32> to vector<8x8xf32>
    %62 = arith.subf %58, %61 : vector<8x8xf32>
    %63 = math.exp %62 : vector<8x8xf32>
    %cst_22 = arith.constant dense<0.000000e+00> : vector<8xf32>
    %64 = vector.multi_reduction <add>, %63, %cst_22 [1] : vector<8x8xf32> to vector<8xf32>
    %65 = vector.shape_cast %64 : vector<8xf32> to vector<8x1xf32>
    %66 = tpu.reciprocal %65 {approx = true} : vector<8x1xf32> -> vector<8x1xf32>
    %67 = vector.broadcast %66 : vector<8x1xf32> to vector<8x8xf32>
    %68 = arith.mulf %63, %67 : vector<8x8xf32>
    %69 = arith.truncf %68 : vector<8x8xf32> to vector<8x8xbf16>
    %cst_23 = arith.constant dense<0.000000e+00> : vector<8x64xf32>
    %70 = tpu.matmul %69, %55, %cst_23 {dimension_numbers = #tpu.dot_dimension_numbers<[1], [0], [0], [1], [0, 0, 1, 1], [], []>} : vector<8x8xbf16>, vector<8x64xbf16>, vector<8x64xf32> -> vector<8x64xf32>
    %71 = arith.truncf %70 : vector<8x64xf32> to vector<8x64xbf16>
    %72 = vector.extract_strided_slice %14 {offsets = [0, 192], sizes = [8, 64], strides = [1, 1]} : vector<8x768xbf16> to vector<8x64xbf16>
    %73 = vector.extract_strided_slice %14 {offsets = [0, 448], sizes = [8, 64], strides = [1, 1]} : vector<8x768xbf16> to vector<8x64xbf16>
    %74 = vector.extract_strided_slice %14 {offsets = [0, 704], sizes = [8, 64], strides = [1, 1]} : vector<8x768xbf16> to vector<8x64xbf16>
    %cst_24 = arith.constant dense<0.000000e+00> : vector<8x8xf32>
    %75 = tpu.matmul %72, %73, %cst_24 {dimension_numbers = #tpu.dot_dimension_numbers<[1], [1], [0], [0], [0, 0, 1, 0], [], []>} : vector<8x64xbf16>, vector<8x64xbf16>, vector<8x8xf32> -> vector<8x8xf32>
    %76 = vector.broadcast %6 : vector<1x8xf32> to vector<8x8xf32>
    %77 = arith.addf %75, %76 : vector<8x8xf32>
    %cst_25 = arith.constant dense<0xFF800000> : vector<8xf32>
    %78 = vector.multi_reduction <maximumf>, %77, %cst_25 [1] : vector<8x8xf32> to vector<8xf32>
    %79 = vector.shape_cast %78 : vector<8xf32> to vector<8x1xf32>
    %80 = vector.broadcast %79 : vector<8x1xf32> to vector<8x8xf32>
    %81 = arith.subf %77, %80 : vector<8x8xf32>
    %82 = math.exp %81 : vector<8x8xf32>
    %cst_26 = arith.constant dense<0.000000e+00> : vector<8xf32>
    %83 = vector.multi_reduction <add>, %82, %cst_26 [1] : vector<8x8xf32> to vector<8xf32>
    %84 = vector.shape_cast %83 : vector<8xf32> to vector<8x1xf32>
    %85 = tpu.reciprocal %84 {approx = true} : vector<8x1xf32> -> vector<8x1xf32>
    %86 = vector.broadcast %85 : vector<8x1xf32> to vector<8x8xf32>
    %87 = arith.mulf %82, %86 : vector<8x8xf32>
    %88 = arith.truncf %87 : vector<8x8xf32> to vector<8x8xbf16>
    %cst_27 = arith.constant dense<0.000000e+00> : vector<8x64xf32>
    %89 = tpu.matmul %88, %74, %cst_27 {dimension_numbers = #tpu.dot_dimension_numbers<[1], [0], [0], [1], [0, 0, 1, 1], [], []>} : vector<8x8xbf16>, vector<8x64xbf16>, vector<8x64xf32> -> vector<8x64xf32>
    %90 = arith.truncf %89 : vector<8x64xf32> to vector<8x64xbf16>
    %91 = tpu.concatenate %33, %52, %71, %90 in 1 : vector<8x64xbf16>, vector<8x64xbf16>, vector<8x64xbf16>, vector<8x64xbf16> -> vector<8x256xbf16>
    %c0_28 = arith.constant 0 : index
    %c0_29 = arith.constant 0 : index
    %c0_30 = arith.constant 0 : index
    %92 = vector.load %arg8[%c0_28, %c0_29, %c0_30] : memref<1x256x256xbf16, #tpu.memory_space<vmem>>, vector<1x256x256xbf16>
    %93 = vector.shape_cast %92 : vector<1x256x256xbf16> to vector<256x256xbf16>
    %cst_31 = arith.constant dense<0.000000e+00> : vector<8x256xf32>
    %94 = tpu.matmul %91, %93, %cst_31 {dimension_numbers = #tpu.dot_dimension_numbers<[1], [0], [0], [1], [0, 0, 1, 1], [], []>} : vector<8x256xbf16>, vector<256x256xbf16>, vector<8x256xf32> -> vector<8x256xf32>
    %c0_32 = arith.constant 0 : index
    %c0_33 = arith.constant 0 : index
    %c0_34 = arith.constant 0 : index
    %95 = vector.load %arg9[%c0_32, %c0_33, %c0_34] : memref<1x1x256xf32, #tpu.memory_space<vmem>>, vector<1x1x256xf32>
    %96 = vector.shape_cast %95 : vector<1x1x256xf32> to vector<1x256xf32>
    %97 = vector.broadcast %96 : vector<1x256xf32> to vector<8x256xf32>
    %98 = arith.addf %94, %97 : vector<8x256xf32>
    %99 = arith.extf %4 : vector<8x256xbf16> to vector<8x256xf32>
    %100 = arith.addf %98, %99 : vector<8x256xf32>
    %c0_35 = arith.constant 0 : index
    %c0_36 = arith.constant 0 : index
    %c0_37 = arith.constant 0 : index
    %101 = vector.load %arg10[%c0_35, %c0_36, %c0_37] : memref<1x1x256xf32, #tpu.memory_space<vmem>>, vector<1x1x256xf32>
    %102 = vector.shape_cast %101 : vector<1x1x256xf32> to vector<1x256xf32>
    %c0_38 = arith.constant 0 : index
    %c0_39 = arith.constant 0 : index
    %c0_40 = arith.constant 0 : index
    %103 = vector.load %arg11[%c0_38, %c0_39, %c0_40] : memref<1x1x256xf32, #tpu.memory_space<vmem>>, vector<1x1x256xf32>
    %104 = vector.shape_cast %103 : vector<1x1x256xf32> to vector<1x256xf32>
    %cst_41 = arith.constant dense<0.000000e+00> : vector<8xf32>
    %105 = vector.multi_reduction <add>, %100, %cst_41 [1] : vector<8x256xf32> to vector<8xf32>
    %106 = vector.shape_cast %105 : vector<8xf32> to vector<8x1xf32>
    %cst_42 = arith.constant 2.560000e+02 : f32
    %107 = vector.broadcast %cst_42 : f32 to vector<8x1xf32>
    %108 = arith.divf %106, %107 : vector<8x1xf32>
    %109 = vector.broadcast %108 : vector<8x1xf32> to vector<8x256xf32>
    %110 = arith.subf %100, %109 : vector<8x256xf32>
    %111 = arith.mulf %110, %110 : vector<8x256xf32>
    %cst_43 = arith.constant dense<0.000000e+00> : vector<8xf32>
    %112 = vector.multi_reduction <add>, %111, %cst_43 [1] : vector<8x256xf32> to vector<8xf32>
    %113 = vector.shape_cast %112 : vector<8xf32> to vector<8x1xf32>
    %cst_44 = arith.constant 2.560000e+02 : f32
    %114 = vector.broadcast %cst_44 : f32 to vector<8x1xf32>
    %115 = arith.divf %113, %114 : vector<8x1xf32>
    %cst_45 = arith.constant 9.99999996E-13 : f32
    %116 = vector.broadcast %cst_45 : f32 to vector<8x1xf32>
    %117 = arith.addf %115, %116 : vector<8x1xf32>
    %118 = math.rsqrt %117 : vector<8x1xf32>
    %119 = vector.broadcast %118 : vector<8x1xf32> to vector<8x256xf32>
    %120 = arith.mulf %110, %119 : vector<8x256xf32>
    %121 = vector.broadcast %102 : vector<1x256xf32> to vector<8x256xf32>
    %122 = arith.mulf %120, %121 : vector<8x256xf32>
    %123 = vector.broadcast %104 : vector<1x256xf32> to vector<8x256xf32>
    %124 = arith.addf %122, %123 : vector<8x256xf32>
    %125 = arith.truncf %124 : vector<8x256xf32> to vector<8x256xbf16>
    %cst_46 = arith.constant 0.000000e+00 : f32
    %126 = vector.broadcast %cst_46 : f32 to vector<8x256xf32>
    %c0_47 = arith.constant 0 : index
    %c0_48 = arith.constant 0 : index
    %c0_49 = arith.constant 0 : index
    %127 = vector.load %arg12[%c0_47, %c0_48, %c0_49] : memref<1x256x1024xbf16, #tpu.memory_space<vmem>>, vector<1x256x256xbf16>
    %128 = vector.shape_cast %127 : vector<1x256x256xbf16> to vector<256x256xbf16>
    %cst_50 = arith.constant dense<0.000000e+00> : vector<8x256xf32>
    %129 = tpu.matmul %125, %128, %cst_50 {dimension_numbers = #tpu.dot_dimension_numbers<[1], [0], [0], [1], [0, 0, 1, 1], [], []>} : vector<8x256xbf16>, vector<256x256xbf16>, vector<8x256xf32> -> vector<8x256xf32>
    %c0_51 = arith.constant 0 : index
    %c0_52 = arith.constant 0 : index
    %c0_53 = arith.constant 0 : index
    %130 = vector.load %arg13[%c0_51, %c0_52, %c0_53] : memref<1x1x1024xf32, #tpu.memory_space<vmem>>, vector<1x1x256xf32>
    %131 = vector.shape_cast %130 : vector<1x1x256xf32> to vector<1x256xf32>
    %132 = vector.broadcast %131 : vector<1x256xf32> to vector<8x256xf32>
    %133 = arith.addf %129, %132 : vector<8x256xf32>
    %134 = arith.truncf %133 : vector<8x256xf32> to vector<8x256xbf16>
    %cst_54 = arith.constant 5.000000e-01 : bf16
    %135 = vector.broadcast %cst_54 : bf16 to vector<8x256xbf16>
    %136 = arith.mulf %135, %134 : vector<8x256xbf16>
    %cst_55 = arith.constant 4.467770e-02 : bf16
    %137 = vector.broadcast %cst_55 : bf16 to vector<8x256xbf16>
    %138 = arith.mulf %137, %134 : vector<8x256xbf16>
    %139 = arith.mulf %138, %134 : vector<8x256xbf16>
    %140 = arith.mulf %139, %134 : vector<8x256xbf16>
    %141 = arith.addf %134, %140 : vector<8x256xbf16>
    %cst_56 = arith.constant 7.968750e-01 : bf16
    %142 = vector.broadcast %cst_56 : bf16 to vector<8x256xbf16>
    %143 = arith.mulf %142, %141 : vector<8x256xbf16>
    %144 = math.tanh %143 : vector<8x256xbf16>
    %cst_57 = arith.constant 1.000000e+00 : bf16
    %145 = vector.broadcast %cst_57 : bf16 to vector<8x256xbf16>
    %146 = arith.addf %145, %144 : vector<8x256xbf16>
    %147 = arith.mulf %136, %146 : vector<8x256xbf16>
    %c0_58 = arith.constant 0 : index
    %c0_59 = arith.constant 0 : index
    %c0_60 = arith.constant 0 : index
    %148 = vector.load %arg14[%c0_58, %c0_59, %c0_60] : memref<1x1024x256xbf16, #tpu.memory_space<vmem>>, vector<1x256x256xbf16>
    %149 = vector.shape_cast %148 : vector<1x256x256xbf16> to vector<256x256xbf16>
    %cst_61 = arith.constant dense<0.000000e+00> : vector<8x256xf32>
    %150 = tpu.matmul %147, %149, %cst_61 {dimension_numbers = #tpu.dot_dimension_numbers<[1], [0], [0], [1], [0, 0, 1, 1], [], []>} : vector<8x256xbf16>, vector<256x256xbf16>, vector<8x256xf32> -> vector<8x256xf32>
    %151 = arith.addf %126, %150 : vector<8x256xf32>
    %c0_62 = arith.constant 0 : index
    %c0_63 = arith.constant 0 : index
    %c256 = arith.constant 256 : index
    %152 = vector.load %arg12[%c0_62, %c0_63, %c256] : memref<1x256x1024xbf16, #tpu.memory_space<vmem>>, vector<1x256x256xbf16>
    %153 = vector.shape_cast %152 : vector<1x256x256xbf16> to vector<256x256xbf16>
    %cst_64 = arith.constant dense<0.000000e+00> : vector<8x256xf32>
    %154 = tpu.matmul %125, %153, %cst_64 {dimension_numbers = #tpu.dot_dimension_numbers<[1], [0], [0], [1], [0, 0, 1, 1], [], []>} : vector<8x256xbf16>, vector<256x256xbf16>, vector<8x256xf32> -> vector<8x256xf32>
    %c0_65 = arith.constant 0 : index
    %c0_66 = arith.constant 0 : index
    %c256_67 = arith.constant 256 : index
    %155 = vector.load %arg13[%c0_65, %c0_66, %c256_67] : memref<1x1x1024xf32, #tpu.memory_space<vmem>>, vector<1x1x256xf32>
    %156 = vector.shape_cast %155 : vector<1x1x256xf32> to vector<1x256xf32>
    %157 = vector.broadcast %156 : vector<1x256xf32> to vector<8x256xf32>
    %158 = arith.addf %154, %157 : vector<8x256xf32>
    %159 = arith.truncf %158 : vector<8x256xf32> to vector<8x256xbf16>
    %cst_68 = arith.constant 5.000000e-01 : bf16
    %160 = vector.broadcast %cst_68 : bf16 to vector<8x256xbf16>
    %161 = arith.mulf %160, %159 : vector<8x256xbf16>
    %cst_69 = arith.constant 4.467770e-02 : bf16
    %162 = vector.broadcast %cst_69 : bf16 to vector<8x256xbf16>
    %163 = arith.mulf %162, %159 : vector<8x256xbf16>
    %164 = arith.mulf %163, %159 : vector<8x256xbf16>
    %165 = arith.mulf %164, %159 : vector<8x256xbf16>
    %166 = arith.addf %159, %165 : vector<8x256xbf16>
    %cst_70 = arith.constant 7.968750e-01 : bf16
    %167 = vector.broadcast %cst_70 : bf16 to vector<8x256xbf16>
    %168 = arith.mulf %167, %166 : vector<8x256xbf16>
    %169 = math.tanh %168 : vector<8x256xbf16>
    %cst_71 = arith.constant 1.000000e+00 : bf16
    %170 = vector.broadcast %cst_71 : bf16 to vector<8x256xbf16>
    %171 = arith.addf %170, %169 : vector<8x256xbf16>
    %172 = arith.mulf %161, %171 : vector<8x256xbf16>
    %c0_72 = arith.constant 0 : index
    %c256_73 = arith.constant 256 : index
    %c0_74 = arith.constant 0 : index
    %173 = vector.load %arg14[%c0_72, %c256_73, %c0_74] : memref<1x1024x256xbf16, #tpu.memory_space<vmem>>, vector<1x256x256xbf16>
    %174 = vector.shape_cast %173 : vector<1x256x256xbf16> to vector<256x256xbf16>
    %cst_75 = arith.constant dense<0.000000e+00> : vector<8x256xf32>
    %175 = tpu.matmul %172, %174, %cst_75 {dimension_numbers = #tpu.dot_dimension_numbers<[1], [0], [0], [1], [0, 0, 1, 1], [], []>} : vector<8x256xbf16>, vector<256x256xbf16>, vector<8x256xf32> -> vector<8x256xf32>
    %176 = arith.addf %151, %175 : vector<8x256xf32>
    %c0_76 = arith.constant 0 : index
    %c0_77 = arith.constant 0 : index
    %c512 = arith.constant 512 : index
    %177 = vector.load %arg12[%c0_76, %c0_77, %c512] : memref<1x256x1024xbf16, #tpu.memory_space<vmem>>, vector<1x256x256xbf16>
    %178 = vector.shape_cast %177 : vector<1x256x256xbf16> to vector<256x256xbf16>
    %cst_78 = arith.constant dense<0.000000e+00> : vector<8x256xf32>
    %179 = tpu.matmul %125, %178, %cst_78 {dimension_numbers = #tpu.dot_dimension_numbers<[1], [0], [0], [1], [0, 0, 1, 1], [], []>} : vector<8x256xbf16>, vector<256x256xbf16>, vector<8x256xf32> -> vector<8x256xf32>
    %c0_79 = arith.constant 0 : index
    %c0_80 = arith.constant 0 : index
    %c512_81 = arith.constant 512 : index
    %180 = vector.load %arg13[%c0_79, %c0_80, %c512_81] : memref<1x1x1024xf32, #tpu.memory_space<vmem>>, vector<1x1x256xf32>
    %181 = vector.shape_cast %180 : vector<1x1x256xf32> to vector<1x256xf32>
    %182 = vector.broadcast %181 : vector<1x256xf32> to vector<8x256xf32>
    %183 = arith.addf %179, %182 : vector<8x256xf32>
    %184 = arith.truncf %183 : vector<8x256xf32> to vector<8x256xbf16>
    %cst_82 = arith.constant 5.000000e-01 : bf16
    %185 = vector.broadcast %cst_82 : bf16 to vector<8x256xbf16>
    %186 = arith.mulf %185, %184 : vector<8x256xbf16>
    %cst_83 = arith.constant 4.467770e-02 : bf16
    %187 = vector.broadcast %cst_83 : bf16 to vector<8x256xbf16>
    %188 = arith.mulf %187, %184 : vector<8x256xbf16>
    %189 = arith.mulf %188, %184 : vector<8x256xbf16>
    %190 = arith.mulf %189, %184 : vector<8x256xbf16>
    %191 = arith.addf %184, %190 : vector<8x256xbf16>
    %cst_84 = arith.constant 7.968750e-01 : bf16
    %192 = vector.broadcast %cst_84 : bf16 to vector<8x256xbf16>
    %193 = arith.mulf %192, %191 : vector<8x256xbf16>
    %194 = math.tanh %193 : vector<8x256xbf16>
    %cst_85 = arith.constant 1.000000e+00 : bf16
    %195 = vector.broadcast %cst_85 : bf16 to vector<8x256xbf16>
    %196 = arith.addf %195, %194 : vector<8x256xbf16>
    %197 = arith.mulf %186, %196 : vector<8x256xbf16>
    %c0_86 = arith.constant 0 : index
    %c512_87 = arith.constant 512 : index
    %c0_88 = arith.constant 0 : index
    %198 = vector.load %arg14[%c0_86, %c512_87, %c0_88] : memref<1x1024x256xbf16, #tpu.memory_space<vmem>>, vector<1x256x256xbf16>
    %199 = vector.shape_cast %198 : vector<1x256x256xbf16> to vector<256x256xbf16>
    %cst_89 = arith.constant dense<0.000000e+00> : vector<8x256xf32>
    %200 = tpu.matmul %197, %199, %cst_89 {dimension_numbers = #tpu.dot_dimension_numbers<[1], [0], [0], [1], [0, 0, 1, 1], [], []>} : vector<8x256xbf16>, vector<256x256xbf16>, vector<8x256xf32> -> vector<8x256xf32>
    %201 = arith.addf %176, %200 : vector<8x256xf32>
    %c0_90 = arith.constant 0 : index
    %c0_91 = arith.constant 0 : index
    %c768 = arith.constant 768 : index
    %202 = vector.load %arg12[%c0_90, %c0_91, %c768] : memref<1x256x1024xbf16, #tpu.memory_space<vmem>>, vector<1x256x256xbf16>
    %203 = vector.shape_cast %202 : vector<1x256x256xbf16> to vector<256x256xbf16>
    %cst_92 = arith.constant dense<0.000000e+00> : vector<8x256xf32>
    %204 = tpu.matmul %125, %203, %cst_92 {dimension_numbers = #tpu.dot_dimension_numbers<[1], [0], [0], [1], [0, 0, 1, 1], [], []>} : vector<8x256xbf16>, vector<256x256xbf16>, vector<8x256xf32> -> vector<8x256xf32>
    %c0_93 = arith.constant 0 : index
    %c0_94 = arith.constant 0 : index
    %c768_95 = arith.constant 768 : index
    %205 = vector.load %arg13[%c0_93, %c0_94, %c768_95] : memref<1x1x1024xf32, #tpu.memory_space<vmem>>, vector<1x1x256xf32>
    %206 = vector.shape_cast %205 : vector<1x1x256xf32> to vector<1x256xf32>
    %207 = vector.broadcast %206 : vector<1x256xf32> to vector<8x256xf32>
    %208 = arith.addf %204, %207 : vector<8x256xf32>
    %209 = arith.truncf %208 : vector<8x256xf32> to vector<8x256xbf16>
    %cst_96 = arith.constant 5.000000e-01 : bf16
    %210 = vector.broadcast %cst_96 : bf16 to vector<8x256xbf16>
    %211 = arith.mulf %210, %209 : vector<8x256xbf16>
    %cst_97 = arith.constant 4.467770e-02 : bf16
    %212 = vector.broadcast %cst_97 : bf16 to vector<8x256xbf16>
    %213 = arith.mulf %212, %209 : vector<8x256xbf16>
    %214 = arith.mulf %213, %209 : vector<8x256xbf16>
    %215 = arith.mulf %214, %209 : vector<8x256xbf16>
    %216 = arith.addf %209, %215 : vector<8x256xbf16>
    %cst_98 = arith.constant 7.968750e-01 : bf16
    %217 = vector.broadcast %cst_98 : bf16 to vector<8x256xbf16>
    %218 = arith.mulf %217, %216 : vector<8x256xbf16>
    %219 = math.tanh %218 : vector<8x256xbf16>
    %cst_99 = arith.constant 1.000000e+00 : bf16
    %220 = vector.broadcast %cst_99 : bf16 to vector<8x256xbf16>
    %221 = arith.addf %220, %219 : vector<8x256xbf16>
    %222 = arith.mulf %211, %221 : vector<8x256xbf16>
    %c0_100 = arith.constant 0 : index
    %c768_101 = arith.constant 768 : index
    %c0_102 = arith.constant 0 : index
    %223 = vector.load %arg14[%c0_100, %c768_101, %c0_102] : memref<1x1024x256xbf16, #tpu.memory_space<vmem>>, vector<1x256x256xbf16>
    %224 = vector.shape_cast %223 : vector<1x256x256xbf16> to vector<256x256xbf16>
    %cst_103 = arith.constant dense<0.000000e+00> : vector<8x256xf32>
    %225 = tpu.matmul %222, %224, %cst_103 {dimension_numbers = #tpu.dot_dimension_numbers<[1], [0], [0], [1], [0, 0, 1, 1], [], []>} : vector<8x256xbf16>, vector<256x256xbf16>, vector<8x256xf32> -> vector<8x256xf32>
    %226 = arith.addf %201, %225 : vector<8x256xf32>
    %c0_104 = arith.constant 0 : index
    %c0_105 = arith.constant 0 : index
    %c0_106 = arith.constant 0 : index
    %227 = vector.load %arg15[%c0_104, %c0_105, %c0_106] : memref<1x1x256xf32, #tpu.memory_space<vmem>>, vector<1x1x256xf32>
    %228 = vector.shape_cast %227 : vector<1x1x256xf32> to vector<1x256xf32>
    %229 = vector.broadcast %228 : vector<1x256xf32> to vector<8x256xf32>
    %230 = arith.addf %226, %229 : vector<8x256xf32>
    %231 = arith.addf %230, %124 : vector<8x256xf32>
    %c0_107 = arith.constant 0 : index
    %c0_108 = arith.constant 0 : index
    %c0_109 = arith.constant 0 : index
    %232 = vector.load %arg16[%c0_107, %c0_108, %c0_109] : memref<1x1x256xf32, #tpu.memory_space<vmem>>, vector<1x1x256xf32>
    %233 = vector.shape_cast %232 : vector<1x1x256xf32> to vector<1x256xf32>
    %c0_110 = arith.constant 0 : index
    %c0_111 = arith.constant 0 : index
    %c0_112 = arith.constant 0 : index
    %234 = vector.load %arg17[%c0_110, %c0_111, %c0_112] : memref<1x1x256xf32, #tpu.memory_space<vmem>>, vector<1x1x256xf32>
    %235 = vector.shape_cast %234 : vector<1x1x256xf32> to vector<1x256xf32>
    %cst_113 = arith.constant dense<0.000000e+00> : vector<8xf32>
    %236 = vector.multi_reduction <add>, %231, %cst_113 [1] : vector<8x256xf32> to vector<8xf32>
    %237 = vector.shape_cast %236 : vector<8xf32> to vector<8x1xf32>
    %cst_114 = arith.constant 2.560000e+02 : f32
    %238 = vector.broadcast %cst_114 : f32 to vector<8x1xf32>
    %239 = arith.divf %237, %238 : vector<8x1xf32>
    %240 = vector.broadcast %239 : vector<8x1xf32> to vector<8x256xf32>
    %241 = arith.subf %231, %240 : vector<8x256xf32>
    %242 = arith.mulf %241, %241 : vector<8x256xf32>
    %cst_115 = arith.constant dense<0.000000e+00> : vector<8xf32>
    %243 = vector.multi_reduction <add>, %242, %cst_115 [1] : vector<8x256xf32> to vector<8xf32>
    %244 = vector.shape_cast %243 : vector<8xf32> to vector<8x1xf32>
    %cst_116 = arith.constant 2.560000e+02 : f32
    %245 = vector.broadcast %cst_116 : f32 to vector<8x1xf32>
    %246 = arith.divf %244, %245 : vector<8x1xf32>
    %cst_117 = arith.constant 9.99999996E-13 : f32
    %247 = vector.broadcast %cst_117 : f32 to vector<8x1xf32>
    %248 = arith.addf %246, %247 : vector<8x1xf32>
    %249 = math.rsqrt %248 : vector<8x1xf32>
    %250 = vector.broadcast %249 : vector<8x1xf32> to vector<8x256xf32>
    %251 = arith.mulf %241, %250 : vector<8x256xf32>
    %252 = vector.broadcast %233 : vector<1x256xf32> to vector<8x256xf32>
    %253 = arith.mulf %251, %252 : vector<8x256xf32>
    %254 = vector.broadcast %235 : vector<1x256xf32> to vector<8x256xf32>
    %255 = arith.addf %253, %254 : vector<8x256xf32>
    %256 = arith.truncf %255 : vector<8x256xf32> to vector<8x256xbf16>
    %c0_118 = arith.constant 0 : index
    %c0_119 = arith.constant 0 : index
    %c0_120 = arith.constant 0 : index
    %257 = vector.load %arg18[%c0_118, %c0_119, %c0_120] : memref<1x8x256xbf16, #tpu.memory_space<vmem>>, vector<1x8x256xbf16>
    %258 = vector.shape_cast %257 : vector<1x8x256xbf16> to vector<8x256xbf16>
    %259 = vector.shape_cast %256 : vector<8x256xbf16> to vector<1x8x256xbf16>
    tpu.vector_store %arg18[%c0_118, %c0_119, %c0_120], %259 {strides = array<i32>} : memref<1x8x256xbf16, #tpu.memory_space<vmem>>, vector<1x8x256xbf16>,
    return
  }
  func.func @transform_0(%arg0: i32, %arg1: i32) -> (i32, i32, i32) {
    %c0_i32 = arith.constant 0 : i32
    %c0_i32_0 = arith.constant 0 : i32
    %c0_i32_1 = arith.constant 0 : i32
    return %arg0, %c0_i32, %c0_i32_0 : i32, i32, i32
  }
  func.func @transform_1(%arg0: i32, %arg1: i32) -> (i32, i32, i32) {
    %c0_i32 = arith.constant 0 : i32
    %c0_i32_0 = arith.constant 0 : i32
    %c0_i32_1 = arith.constant 0 : i32
    return %arg0, %c0_i32, %c0_i32_0 : i32, i32, i32
  }
  func.func @transform_2(%arg0: i32, %arg1: i32) -> (i32, i32) {
    %c0_i32 = arith.constant 0 : i32
    %c0_i32_0 = arith.constant 0 : i32
    %c0_i32_1 = arith.constant 0 : i32
    return %c0_i32, %c0_i32_0 : i32, i32
  }
  func.func @transform_3(%arg0: i32, %arg1: i32) -> (i32, i32) {
    %c0_i32 = arith.constant 0 : i32
    %c0_i32_0 = arith.constant 0 : i32
    %c0_i32_1 = arith.constant 0 : i32
    return %c0_i32, %c0_i32_0 : i32, i32
  }
  func.func @transform_4(%arg0: i32, %arg1: i32) -> (i32, i32, i32) {
    %c0_i32 = arith.constant 0 : i32
    %c0_i32_0 = arith.constant 0 : i32
    %c0_i32_1 = arith.constant 0 : i32
    return %arg1, %c0_i32, %c0_i32_0 : i32, i32, i32
  }
  func.func @transform_5(%arg0: i32, %arg1: i32) -> (i32, i32, i32) {
    %c0_i32 = arith.constant 0 : i32
    %c0_i32_0 = arith.constant 0 : i32
    %c0_i32_1 = arith.constant 0 : i32
    return %arg1, %c0_i32, %c0_i32_0 : i32, i32, i32
  }
  func.func @transform_6(%arg0: i32, %arg1: i32) -> (i32, i32, i32) {
    %c0_i32 = arith.constant 0 : i32
    %c0_i32_0 = arith.constant 0 : i32
    %c0_i32_1 = arith.constant 0 : i32
    return %arg1, %c0_i32, %c0_i32_0 : i32, i32, i32
  }
  func.func @transform_7(%arg0: i32, %arg1: i32) -> (i32, i32, i32) {
    %c0_i32 = arith.constant 0 : i32
    %c0_i32_0 = arith.constant 0 : i32
    %c0_i32_1 = arith.constant 0 : i32
    return %arg1, %c0_i32, %c0_i32_0 : i32, i32, i32
  }
  func.func @transform_8(%arg0: i32, %arg1: i32) -> (i32, i32, i32) {
    %c0_i32 = arith.constant 0 : i32
    %c0_i32_0 = arith.constant 0 : i32
    %c0_i32_1 = arith.constant 0 : i32
    return %arg1, %c0_i32, %c0_i32_0 : i32, i32, i32
  }
  func.func @transform_9(%arg0: i32, %arg1: i32) -> (i32, i32, i32) {
    %c0_i32 = arith.constant 0 : i32
    %c0_i32_0 = arith.constant 0 : i32
    %c0_i32_1 = arith.constant 0 : i32
    return %arg1, %c0_i32, %c0_i32_0 : i32, i32, i32
  }
  func.func @transform_10(%arg0: i32, %arg1: i32) -> (i32, i32, i32) {
    %c0_i32 = arith.constant 0 : i32
    %c0_i32_0 = arith.constant 0 : i32
    %c0_i32_1 = arith.constant 0 : i32
    return %arg1, %c0_i32, %c0_i32_0 : i32, i32, i32
  }
  func.func @transform_11(%arg0: i32, %arg1: i32) -> (i32, i32, i32) {
    %c0_i32 = arith.constant 0 : i32
    %c0_i32_0 = arith.constant 0 : i32
    %c0_i32_1 = arith.constant 0 : i32
    return %arg1, %c0_i32, %c0_i32_0 : i32, i32, i32
  }
  func.func @transform_12(%arg0: i32, %arg1: i32) -> (i32, i32, i32) {
    %c0_i32 = arith.constant 0 : i32
    %c0_i32_0 = arith.constant 0 : i32
    %c0_i32_1 = arith.constant 0 : i32
    return %arg1, %c0_i32, %c0_i32_0 : i32, i32, i32
  }
  func.func @transform_13(%arg0: i32, %arg1: i32) -> (i32, i32, i32) {
    %c0_i32 = arith.constant 0 : i32
    %c0_i32_0 = arith.constant 0 : i32
    %c0_i32_1 = arith.constant 0 : i32
    return %arg1, %c0_i32, %c0_i32_0 : i32, i32, i32
  }
  func.func @transform_14(%arg0: i32, %arg1: i32) -> (i32, i32, i32) {
    %c0_i32 = arith.constant 0 : i32
    %c0_i32_0 = arith.constant 0 : i32
    %c0_i32_1 = arith.constant 0 : i32
    return %arg1, %c0_i32, %c0_i32_0 : i32, i32, i32
  }
  func.func @transform_15(%arg0: i32, %arg1: i32) -> (i32, i32, i32) {
    %c0_i32 = arith.constant 0 : i32
    %c0_i32_0 = arith.constant 0 : i32
    %c0_i32_1 = arith.constant 0 : i32
    return %arg1, %c0_i32, %c0_i32_0 : i32, i32, i32
  }
  func.func @transform_16(%arg0: i32, %arg1: i32) -> (i32, i32, i32) {
    %c0_i32 = arith.constant 0 : i32
    %c0_i32_0 = arith.constant 0 : i32
    %c0_i32_1 = arith.constant 0 : i32
    return %arg0, %c0_i32, %c0_i32_0 : i32, i32, i32
  }
}

</mosaic_0001>

<llo_original>
// kernel: bert_fine_tune_mini_forward.1
$region0: #{bert_fine_tune_mini_forward.1}
  #allocation0 [shape = 'u32[]', space=smem, size = 0x4, offset = 0x4, fixed_abs, tag = 'smem constant byte address 0x4 - core index']
  #allocation1 [shape = 'u32[144,128]{1,0:T(1,128)}', space=vmem, size = 0x12000, scoped, tag = 'internal scratch']
  %s0 = inlined_call_operand.vmem [shape: f32[2,8,256], index: 0, kind: input, shape index: {}]
  %s1 = inlined_call_operand.vmem [shape: f32[2,1,8], index: 1, kind: input, shape index: {}]
  %s2 = inlined_call_operand.hbm [shape: f32[1,256], index: 2, kind: input, shape index: {}]
  %s3 = inlined_call_operand.hbm [shape: f32[1,256], index: 3, kind: input, shape index: {}]
  %s4 = inlined_call_operand.hbm [shape: bf16[4,256,768], index: 4, kind: input, shape index: {}]
  %s5 = inlined_call_operand.hbm [shape: f32[4,1,768], index: 5, kind: input, shape index: {}]
  %s6 = inlined_call_operand.hbm [shape: bf16[4,256,256], index: 6, kind: input, shape index: {}]
  %s7 = inlined_call_operand.hbm [shape: f32[4,1,256], index: 7, kind: input, shape index: {}]
  %s8 = inlined_call_operand.hbm [shape: f32[4,1,256], index: 8, kind: input, shape index: {}]
  %s9 = inlined_call_operand.hbm [shape: f32[4,1,256], index: 9, kind: input, shape index: {}]
  %s10 = inlined_call_operand.hbm [shape: bf16[4,256,1024], index: 10, kind: input, shape index: {}]
  %s11 = inlined_call_operand.hbm [shape: f32[4,1,1024], index: 11, kind: input, shape index: {}]
  %s12 = inlined_call_operand.hbm [shape: bf16[4,1024,256], index: 12, kind: input, shape index: {}]
  %s13 = inlined_call_operand.hbm [shape: f32[4,1,256], index: 13, kind: input, shape index: {}]
  %s14 = inlined_call_operand.hbm [shape: f32[4,1,256], index: 14, kind: input, shape index: {}]
  %s15 = inlined_call_operand.hbm [shape: f32[4,1,256], index: 15, kind: input, shape index: {}]
  %s16 = inlined_call_operand.vmem [shape: bf16[2,8,256], index: 16, kind: output, shape index: {}]
  %s17 = sld [smem:[#allocation0]]
  $region157: #{bert_fine_tune_mini_forward.1} parent=0
    _
  %s19 = ssub.s32 1, %s17
  %s20 = scalar_select 0, %s19, %s17
  $region1: #{bert_fine_tune_mini_forward.1} parent=0
    #allocation2 [shape = 'u8[1024]{0}', space=vmem, size = 0x400, scoped, tag = 'input window, operand 2, single buffered']
    #allocation3 [shape = 's32[2]{0}', space=sflag, size = 0x8, scoped, tag = 'scoped memory for bert_fine_tune_mini_forward.1']
    #allocation4 [shape = 'u8[1024]{0}', space=vmem, size = 0x400, scoped, tag = 'input window, operand 3, single buffered']
    #allocation5 [shape = 's32[1]{0}', space=sflag, size = 0x4, scoped, tag = 'scoped memory for bert_fine_tune_mini_forward.1']
    #allocation6 [shape = 'u8[786432]{0}', space=vmem, size = 0xc0000, scoped, tag = 'input window, operand 4']
    #allocation7 [shape = 'u8[6144]{0}', space=vmem, size = 0x1800, scoped, tag = 'input window, operand 5']
    #allocation8 [shape = 'u8[262144]{0}', space=vmem, size = 0x40000, scoped, tag = 'input window, operand 6']
    #allocation9 [shape = 'u8[2048]{0}', space=vmem, size = 0x800, scoped, tag = 'input window, operand 7']
    #allocation10 [shape = 'u8[2048]{0}', space=vmem, size = 0x800, scoped, tag = 'input window, operand 8']
    #allocation11 [shape = 'u8[2048]{0}', space=vmem, size = 0x800, scoped, tag = 'input window, operand 9']
    #allocation12 [shape = 'u8[1048576]{0}', space=vmem, size = 0x100000, scoped, tag = 'input window, operand 10']
    #allocation13 [shape = 'u8[8192]{0}', space=vmem, size = 0x2000, scoped, tag = 'input window, operand 11']
    #allocation14 [shape = 'u8[1048576]{0}', space=vmem, size = 0x100000, scoped, tag = 'input window, operand 12']
    #allocation15 [shape = 'u8[2048]{0}', space=vmem, size = 0x800, scoped, tag = 'input window, operand 13']
    #allocation16 [shape = 'u8[2048]{0}', space=vmem, size = 0x800, scoped, tag = 'input window, operand 14']
    #allocation17 [shape = 'u8[2048]{0}', space=vmem, size = 0x800, scoped, tag = 'input window, operand 15']
    %21 = vsyncpa [#allocation3], 0
    %22 = vsyncpa [#allocation5], 0
    loop: start=0, step=1, limit=10
    $region2: #{bert_fine_tune_mini_forward.1} parent=1 // loop_pre_header
      _
    $region3: #{bert_fine_tune_mini_forward.1} parent=1 // loop_header
      %s24 = sphi 0, %s28
      %p25 = scmp.ge.s32.totalorder %s24, 10
      %s31 = sphi 0, %s43
      %s32 = sphi 0, %s39
      %s33 = sphi 0, %s31
      %s34 = sphi 0, %s32
      %s35 = sphi 0, %s33
      %s36 = sphi 0, %s34
      %s46 = sphi 0, %s48
      %s49 = sphi 0, %s46
      %s50 = sphi 0, %s49
      %s66 = sphi 0, %s50
      %s72 = sphi 0, %s74
      %s75 = sphi 0, %s72
      %s76 = sphi 0, %s75
      %s92 = sphi 0, %s76
      %s96 = sphi 0, %s96
      %s98 = sphi 0, %s96
      %s99 = sphi 0, %s98
      %s113 = sphi 0, %s99
      %s117 = sphi 0, %s117
      %s119 = sphi 0, %s117
      %s120 = sphi 0, %s119
      %s134 = sphi 0, %s120
      %s140 = sphi 0, %s142
      %s143 = sphi 0, %s140
      %s144 = sphi 0, %s143
      %s160 = sphi 0, %s144
      %s166 = sphi 0, %s168
      %s169 = sphi 0, %s166
      %s170 = sphi 0, %s169
      %s186 = sphi 0, %s170
      %s192 = sphi 0, %s194
      %s195 = sphi 0, %s192
      %s196 = sphi 0, %s195
      %s212 = sphi 0, %s196
      %s218 = sphi 0, %s220
      %s221 = sphi 0, %s218
      %s222 = sphi 0, %s221
      %s238 = sphi 0, %s222
      %s244 = sphi 0, %s246
      %s247 = sphi 0, %s244
      %s248 = sphi 0, %s247
      %s264 = sphi 0, %s248
      %s270 = sphi 0, %s272
      %s273 = sphi 0, %s270
      %s274 = sphi 0, %s273
      %s290 = sphi 0, %s274
      %s296 = sphi 0, %s298
      %s299 = sphi 0, %s296
      %s300 = sphi 0, %s299
      %s316 = sphi 0, %s300
      %s322 = sphi 0, %s324
      %s325 = sphi 0, %s322
      %s326 = sphi 0, %s325
      %s342 = sphi 0, %s326
      %s348 = sphi 0, %s350
      %s351 = sphi 0, %s348
      %s352 = sphi 0, %s351
      %s368 = sphi 0, %s352
      %s374 = sphi 0, %s376
      %s377 = sphi 0, %s374
      %s378 = sphi 0, %s377
      %s394 = sphi 0, %s378
      %s400 = sphi 0, %s402
      %s403 = sphi 0, %s400
      %s404 = sphi 0, %s403
      %s420 = sphi 0, %s404
      %s426 = sphi 0, %s428
      %s429 = sphi 0, %s426
      %s430 = sphi 0, %s429
      %s446 = sphi 0, %s430
      %s452 = sphi 0, %s454
      %s455 = sphi 0, %s452
      %s456 = sphi 0, %s455
      %s472 = sphi 0, %s456
    $region4: #{bert_fine_tune_mini_forward.1} parent=1 // loop_header_branch
      %27 = sbr.rel (%p25) target = $region8
    $region5: #{bert_fine_tune_mini_forward.1} parent=1 // loop_body
      %s29 = ssub.s32 %s24, 1
      %s30 = ssub.s32 %s24, 2
      %s37 = sadd.s32 1, %s32
      %p38 = scmp.ge.s32.totalorder %s37, 4
      %s39 = scalar_select %p38, 0, %s37
      %s40 = sadd.s32 1, %s31
      %s41 = scalar_select %p38, %s40, %s31
      %p42 = scmp.ge.s32.totalorder %s41, 2
      %s43 = scalar_select %p42, 0, %s41
      %s44 = ssub.s32 %s31, %s43
      %p45 = scmp.eq.s32.totalorder %s44, 0
      %s47 = sadd.s32 %s46, 1
      %s48 = scalar_select %p45, %s46, %s47
      %p51 = pneg %p45
      %p52 = scmp.eq.s32.totalorder %s24, 7
      %p53 = por %p51, %p52
      %p54 = scmp.ne.s32.totalorder %s46, %s49
      %p55 = scmp.eq.s32.totalorder %s24, 0
      %p56 = por %p54, %p55
      %p57 = scmp.ne.s32.totalorder %s46, %s49
      %p58 = scmp.eq.s32.totalorder %s29, 7
      %p59 = por %p57, %p58
      %p60 = scmp.ne.s32.totalorder %s49, %s50
      %p61 = scmp.eq.s32.totalorder %s29, 0
      %p62 = por %p60, %p61
      %p63 = scmp.ne.s32.totalorder %s49, %s50
      %p64 = scmp.eq.s32.totalorder %s30, 7
      %p65 = por %p63, %p64
      %p67 = scmp.ne.s32.totalorder %s50, %s66
      %p68 = scmp.eq.s32.totalorder %s30, 0
      %p69 = por %p67, %p68
      %s70 = ssub.s32 %s31, %s43
      %p71 = scmp.eq.s32.totalorder %s70, 0
      %s73 = sadd.s32 %s72, 1
      %s74 = scalar_select %p71, %s72, %s73
      %p77 = pneg %p71
      %p78 = scmp.eq.s32.totalorder %s24, 7
      %p79 = por %p77, %p78
      %p80 = scmp.ne.s32.totalorder %s72, %s75
      %p81 = scmp.eq.s32.totalorder %s24, 0
      %p82 = por %p80, %p81
      %p83 = scmp.ne.s32.totalorder %s72, %s75
      %p84 = scmp.eq.s32.totalorder %s29, 7
      %p85 = por %p83, %p84
      %p86 = scmp.ne.s32.totalorder %s75, %s76
      %p87 = scmp.eq.s32.totalorder %s29, 0
      %p88 = por %p86, %p87
      %p89 = scmp.ne.s32.totalorder %s75, %s76
      %p90 = scmp.eq.s32.totalorder %s30, 7
      %p91 = por %p89, %p90
      %p93 = scmp.ne.s32.totalorder %s76, %s92
      %p94 = scmp.eq.s32.totalorder %s30, 0
      %p95 = por %p93, %p94
      %s97 = sadd.s32 %s96, 1
      %p100 = scmp.eq.s32.totalorder %s24, 7
      %p101 = scmp.ne.s32.totalorder %s96, %s98
      %p102 = scmp.eq.s32.totalorder %s24, 0
      %p103 = por %p101, %p102
      %p104 = scmp.ne.s32.totalorder %s96, %s98
      %p105 = scmp.eq.s32.totalorder %s29, 7
      %p106 = por %p104, %p105
      %p107 = scmp.ne.s32.totalorder %s98, %s99
      %p108 = scmp.eq.s32.totalorder %s29, 0
      %p109 = por %p107, %p108
      %p110 = scmp.ne.s32.totalorder %s98, %s99
      %p111 = scmp.eq.s32.totalorder %s30, 7
      %p112 = por %p110, %p111
      %p114 = scmp.ne.s32.totalorder %s99, %s113
      %p115 = scmp.eq.s32.totalorder %s30, 0
      %p116 = por %p114, %p115
      %s118 = sadd.s32 %s117, 1
      %p121 = scmp.eq.s32.totalorder %s24, 7
      %p122 = scmp.ne.s32.totalorder %s117, %s119
      %p123 = scmp.eq.s32.totalorder %s24, 0
      %p124 = por %p122, %p123
      %p125 = scmp.ne.s32.totalorder %s117, %s119
      %p126 = scmp.eq.s32.totalorder %s29, 7
      %p127 = por %p125, %p126
      %p128 = scmp.ne.s32.totalorder %s119, %s120
      %p129 = scmp.eq.s32.totalorder %s29, 0
      %p130 = por %p128, %p129
      %p131 = scmp.ne.s32.totalorder %s119, %s120
      %p132 = scmp.eq.s32.totalorder %s30, 7
      %p133 = por %p131, %p132
      %p135 = scmp.ne.s32.totalorder %s120, %s134
      %p136 = scmp.eq.s32.totalorder %s30, 0
      %p137 = por %p135, %p136
      %s138 = ssub.s32 %s32, %s39
      %p139 = scmp.eq.s32.totalorder %s138, 0
      %s141 = sadd.s32 %s140, 1
      %s142 = scalar_select %p139, %s140, %s141
      %p145 = pneg %p139
      %p146 = scmp.eq.s32.totalorder %s24, 7
      %p147 = por %p145, %p146
      %p148 = scmp.ne.s32.totalorder %s140, %s143
      %p149 = scmp.eq.s32.totalorder %s24, 0
      %p150 = por %p148, %p149
      %p151 = scmp.ne.s32.totalorder %s140, %s143
      %p152 = scmp.eq.s32.totalorder %s29, 7
      %p153 = por %p151, %p152
      %p154 = scmp.ne.s32.totalorder %s143, %s144
      %p155 = scmp.eq.s32.totalorder %s29, 0
      %p156 = por %p154, %p155
      %p157 = scmp.ne.s32.totalorder %s143, %s144
      %p158 = scmp.eq.s32.totalorder %s30, 7
      %p159 = por %p157, %p158
      %p161 = scmp.ne.s32.totalorder %s144, %s160
      %p162 = scmp.eq.s32.totalorder %s30, 0
      %p163 = por %p161, %p162
      %s164 = ssub.s32 %s32, %s39
      %p165 = scmp.eq.s32.totalorder %s164, 0
      %s167 = sadd.s32 %s166, 1
      %s168 = scalar_select %p165, %s166, %s167
      %p171 = pneg %p165
      %p172 = scmp.eq.s32.totalorder %s24, 7
      %p173 = por %p171, %p172
      %p174 = scmp.ne.s32.totalorder %s166, %s169
      %p175 = scmp.eq.s32.totalorder %s24, 0
      %p176 = por %p174, %p175
      %p177 = scmp.ne.s32.totalorder %s166, %s169
      %p178 = scmp.eq.s32.totalorder %s29, 7
      %p179 = por %p177, %p178
      %p180 = scmp.ne.s32.totalorder %s169, %s170
      %p181 = scmp.eq.s32.totalorder %s29, 0
      %p182 = por %p180, %p181
      %p183 = scmp.ne.s32.totalorder %s169, %s170
      %p184 = scmp.eq.s32.totalorder %s30, 7
      %p185 = por %p183, %p184
      %p187 = scmp.ne.s32.totalorder %s170, %s186
      %p188 = scmp.eq.s32.totalorder %s30, 0
      %p189 = por %p187, %p188
      %s190 = ssub.s32 %s32, %s39
      %p191 = scmp.eq.s32.totalorder %s190, 0
      %s193 = sadd.s32 %s192, 1
      %s194 = scalar_select %p191, %s192, %s193
      %p197 = pneg %p191
      %p198 = scmp.eq.s32.totalorder %s24, 7
      %p199 = por %p197, %p198
      %p200 = scmp.ne.s32.totalorder %s192, %s195
      %p201 = scmp.eq.s32.totalorder %s24, 0
      %p202 = por %p200, %p201
      %p203 = scmp.ne.s32.totalorder %s192, %s195
      %p204 = scmp.eq.s32.totalorder %s29, 7
      %p205 = por %p203, %p204
      %p206 = scmp.ne.s32.totalorder %s195, %s196
      %p207 = scmp.eq.s32.totalorder %s29, 0
      %p208 = por %p206, %p207
      %p209 = scmp.ne.s32.totalorder %s195, %s196
      %p210 = scmp.eq.s32.totalorder %s30, 7
      %p211 = por %p209, %p210
      %p213 = scmp.ne.s32.totalorder %s196, %s212
      %p214 = scmp.eq.s32.totalorder %s30, 0
      %p215 = por %p213, %p214
      %s216 = ssub.s32 %s32, %s39
      %p217 = scmp.eq.s32.totalorder %s216, 0
      %s219 = sadd.s32 %s218, 1
      %s220 = scalar_select %p217, %s218, %s219
      %p223 = pneg %p217
      %p224 = scmp.eq.s32.totalorder %s24, 7
      %p225 = por %p223, %p224
      %p226 = scmp.ne.s32.totalorder %s218, %s221
      %p227 = scmp.eq.s32.totalorder %s24, 0
      %p228 = por %p226, %p227
      %p229 = scmp.ne.s32.totalorder %s218, %s221
      %p230 = scmp.eq.s32.totalorder %s29, 7
      %p231 = por %p229, %p230
      %p232 = scmp.ne.s32.totalorder %s221, %s222
      %p233 = scmp.eq.s32.totalorder %s29, 0
      %p234 = por %p232, %p233
      %p235 = scmp.ne.s32.totalorder %s221, %s222
      %p236 = scmp.eq.s32.totalorder %s30, 7
      %p237 = por %p235, %p236
      %p239 = scmp.ne.s32.totalorder %s222, %s238
      %p240 = scmp.eq.s32.totalorder %s30, 0
      %p241 = por %p239, %p240
      %s242 = ssub.s32 %s32, %s39
      %p243 = scmp.eq.s32.totalorder %s242, 0
      %s245 = sadd.s32 %s244, 1
      %s246 = scalar_select %p243, %s244, %s245
      %p249 = pneg %p243
      %p250 = scmp.eq.s32.totalorder %s24, 7
      %p251 = por %p249, %p250
      %p252 = scmp.ne.s32.totalorder %s244, %s247
      %p253 = scmp.eq.s32.totalorder %s24, 0
      %p254 = por %p252, %p253
      %p255 = scmp.ne.s32.totalorder %s244, %s247
      %p256 = scmp.eq.s32.totalorder %s29, 7
      %p257 = por %p255, %p256
      %p258 = scmp.ne.s32.totalorder %s247, %s248
      %p259 = scmp.eq.s32.totalorder %s29, 0
      %p260 = por %p258, %p259
      %p261 = scmp.ne.s32.totalorder %s247, %s248
      %p262 = scmp.eq.s32.totalorder %s30, 7
      %p263 = por %p261, %p262
      %p265 = scmp.ne.s32.totalorder %s248, %s264
      %p266 = scmp.eq.s32.totalorder %s30, 0
      %p267 = por %p265, %p266
      %s268 = ssub.s32 %s32, %s39
      %p269 = scmp.eq.s32.totalorder %s268, 0
      %s271 = sadd.s32 %s270, 1
      %s272 = scalar_select %p269, %s270, %s271
      %p275 = pneg %p269
      %p276 = scmp.eq.s32.totalorder %s24, 7
      %p277 = por %p275, %p276
      %p278 = scmp.ne.s32.totalorder %s270, %s273
      %p279 = scmp.eq.s32.totalorder %s24, 0
      %p280 = por %p278, %p279
      %p281 = scmp.ne.s32.totalorder %s270, %s273
      %p282 = scmp.eq.s32.totalorder %s29, 7
      %p283 = por %p281, %p282
      %p284 = scmp.ne.s32.totalorder %s273, %s274
      %p285 = scmp.eq.s32.totalorder %s29, 0
      %p286 = por %p284, %p285
      %p287 = scmp.ne.s32.totalorder %s273, %s274
      %p288 = scmp.eq.s32.totalorder %s30, 7
      %p289 = por %p287, %p288
      %p291 = scmp.ne.s32.totalorder %s274, %s290
      %p292 = scmp.eq.s32.totalorder %s30, 0
      %p293 = por %p291, %p292
      %s294 = ssub.s32 %s32, %s39
      %p295 = scmp.eq.s32.totalorder %s294, 0
      %s297 = sadd.s32 %s296, 1
      %s298 = scalar_select %p295, %s296, %s297
      %p301 = pneg %p295
      %p302 = scmp.eq.s32.totalorder %s24, 7
      %p303 = por %p301, %p302
      %p304 = scmp.ne.s32.totalorder %s296, %s299
      %p305 = scmp.eq.s32.totalorder %s24, 0
      %p306 = por %p304, %p305
      %p307 = scmp.ne.s32.totalorder %s296, %s299
      %p308 = scmp.eq.s32.totalorder %s29, 7
      %p309 = por %p307, %p308
      %p310 = scmp.ne.s32.totalorder %s299, %s300
      %p311 = scmp.eq.s32.totalorder %s29, 0
      %p312 = por %p310, %p311
      %p313 = scmp.ne.s32.totalorder %s299, %s300
      %p314 = scmp.eq.s32.totalorder %s30, 7
      %p315 = por %p313, %p314
      %p317 = scmp.ne.s32.totalorder %s300, %s316
      %p318 = scmp.eq.s32.totalorder %s30, 0
      %p319 = por %p317, %p318
      %s320 = ssub.s32 %s32, %s39
      %p321 = scmp.eq.s32.totalorder %s320, 0
      %s323 = sadd.s32 %s322, 1
      %s324 = scalar_select %p321, %s322, %s323
      %p327 = pneg %p321
      %p328 = scmp.eq.s32.totalorder %s24, 7
      %p329 = por %p327, %p328
      %p330 = scmp.ne.s32.totalorder %s322, %s325
      %p331 = scmp.eq.s32.totalorder %s24, 0
      %p332 = por %p330, %p331
      %p333 = scmp.ne.s32.totalorder %s322, %s325
      %p334 = scmp.eq.s32.totalorder %s29, 7
      %p335 = por %p333, %p334
      %p336 = scmp.ne.s32.totalorder %s325, %s326
      %p337 = scmp.eq.s32.totalorder %s29, 0
      %p338 = por %p336, %p337
      %p339 = scmp.ne.s32.totalorder %s325, %s326
      %p340 = scmp.eq.s32.totalorder %s30, 7
      %p341 = por %p339, %p340
      %p343 = scmp.ne.s32.totalorder %s326, %s342
      %p344 = scmp.eq.s32.totalorder %s30, 0
      %p345 = por %p343, %p344
      %s346 = ssub.s32 %s32, %s39
      %p347 = scmp.eq.s32.totalorder %s346, 0
      %s349 = sadd.s32 %s348, 1
      %s350 = scalar_select %p347, %s348, %s349
      %p353 = pneg %p347
      %p354 = scmp.eq.s32.totalorder %s24, 7
      %p355 = por %p353, %p354
      %p356 = scmp.ne.s32.totalorder %s348, %s351
      %p357 = scmp.eq.s32.totalorder %s24, 0
      %p358 = por %p356, %p357
      %p359 = scmp.ne.s32.totalorder %s348, %s351
      %p360 = scmp.eq.s32.totalorder %s29, 7
      %p361 = por %p359, %p360
      %p362 = scmp.ne.s32.totalorder %s351, %s352
      %p363 = scmp.eq.s32.totalorder %s29, 0
      %p364 = por %p362, %p363
      %p365 = scmp.ne.s32.totalorder %s351, %s352
      %p366 = scmp.eq.s32.totalorder %s30, 7
      %p367 = por %p365, %p366
      %p369 = scmp.ne.s32.totalorder %s352, %s368
      %p370 = scmp.eq.s32.totalorder %s30, 0
      %p371 = por %p369, %p370
      %s372 = ssub.s32 %s32, %s39
      %p373 = scmp.eq.s32.totalorder %s372, 0
      %s375 = sadd.s32 %s374, 1
      %s376 = scalar_select %p373, %s374, %s375
      %p379 = pneg %p373
      %p380 = scmp.eq.s32.totalorder %s24, 7
      %p381 = por %p379, %p380
      %p382 = scmp.ne.s32.totalorder %s374, %s377
      %p383 = scmp.eq.s32.totalorder %s24, 0
      %p384 = por %p382, %p383
      %p385 = scmp.ne.s32.totalorder %s374, %s377
      %p386 = scmp.eq.s32.totalorder %s29, 7
      %p387 = por %p385, %p386
      %p388 = scmp.ne.s32.totalorder %s377, %s378
      %p389 = scmp.eq.s32.totalorder %s29, 0
      %p390 = por %p388, %p389
      %p391 = scmp.ne.s32.totalorder %s377, %s378
      %p392 = scmp.eq.s32.totalorder %s30, 7
      %p393 = por %p391, %p392
      %p395 = scmp.ne.s32.totalorder %s378, %s394
      %p396 = scmp.eq.s32.totalorder %s30, 0
      %p397 = por %p395, %p396
      %s398 = ssub.s32 %s32, %s39
      %p399 = scmp.eq.s32.totalorder %s398, 0
      %s401 = sadd.s32 %s400, 1
      %s402 = scalar_select %p399, %s400, %s401
      %p405 = pneg %p399
      %p406 = scmp.eq.s32.totalorder %s24, 7
      %p407 = por %p405, %p406
      %p408 = scmp.ne.s32.totalorder %s400, %s403
      %p409 = scmp.eq.s32.totalorder %s24, 0
      %p410 = por %p408, %p409
      %p411 = scmp.ne.s32.totalorder %s400, %s403
      %p412 = scmp.eq.s32.totalorder %s29, 7
      %p413 = por %p411, %p412
      %p414 = scmp.ne.s32.totalorder %s403, %s404
      %p415 = scmp.eq.s32.totalorder %s29, 0
      %p416 = por %p414, %p415
      %p417 = scmp.ne.s32.totalorder %s403, %s404
      %p418 = scmp.eq.s32.totalorder %s30, 7
      %p419 = por %p417, %p418
      %p421 = scmp.ne.s32.totalorder %s404, %s420
      %p422 = scmp.eq.s32.totalorder %s30, 0
      %p423 = por %p421, %p422
      %s424 = ssub.s32 %s32, %s39
      %p425 = scmp.eq.s32.totalorder %s424, 0
      %s427 = sadd.s32 %s426, 1
      %s428 = scalar_select %p425, %s426, %s427
      %p431 = pneg %p425
      %p432 = scmp.eq.s32.totalorder %s24, 7
      %p433 = por %p431, %p432
      %p434 = scmp.ne.s32.totalorder %s426, %s429
      %p435 = scmp.eq.s32.totalorder %s24, 0
      %p436 = por %p434, %p435
      %p437 = scmp.ne.s32.totalorder %s426, %s429
      %p438 = scmp.eq.s32.totalorder %s29, 7
      %p439 = por %p437, %p438
      %p440 = scmp.ne.s32.totalorder %s429, %s430
      %p441 = scmp.eq.s32.totalorder %s29, 0
      %p442 = por %p440, %p441
      %p443 = scmp.ne.s32.totalorder %s429, %s430
      %p444 = scmp.eq.s32.totalorder %s30, 7
      %p445 = por %p443, %p444
      %p447 = scmp.ne.s32.totalorder %s430, %s446
      %p448 = scmp.eq.s32.totalorder %s30, 0
      %p449 = por %p447, %p448
      %s450 = ssub.s32 %s31, %s43
      %p451 = scmp.eq.s32.totalorder %s450, 0
      %s453 = sadd.s32 %s452, 1
      %s454 = scalar_select %p451, %s452, %s453
      %p457 = pneg %p451
      %p458 = scmp.eq.s32.totalorder %s24, 7
      %p459 = por %p457, %p458
      %p460 = scmp.ne.s32.totalorder %s452, %s455
      %p461 = scmp.eq.s32.totalorder %s24, 0
      %p462 = por %p460, %p461
      %p463 = scmp.ne.s32.totalorder %s452, %s455
      %p464 = scmp.eq.s32.totalorder %s29, 7
      %p465 = por %p463, %p464
      %p466 = scmp.ne.s32.totalorder %s455, %s456
      %p467 = scmp.eq.s32.totalorder %s29, 0
      %p468 = por %p466, %p467
      %p469 = scmp.ne.s32.totalorder %s455, %s456
      %p470 = scmp.eq.s32.totalorder %s30, 7
      %p471 = por %p469, %p470
      %p473 = scmp.ne.s32.totalorder %s456, %s472
      %p474 = scmp.eq.s32.totalorder %s30, 0
      %p475 = por %p473, %p474
      %p476 = scmp.le.s32.totalorder 1, %s24
      %p477 = scmp.lt.s32.totalorder %s24, 9
      %p478 = pnand %p476, %p477
      %p479 = pneg %p478
      // Predicated region
      $region9: #{bert_fine_tune_mini_forward.1} parent=5 // pred_check
        _
      $region10: #{bert_fine_tune_mini_forward.1} parent=5 // pred_check_branch
        %481 = sbr.rel (%p478) target = $region12
      $region11: #{bert_fine_tune_mini_forward.1} parent=5 // pred_region
        %s482 = ssub.s32 %s24, 1
        // Predicated region
        $region13: #{bert_fine_tune_mini_forward.1} parent=11 // pred_check
          %p483 = pneg %p109
        $region14: #{bert_fine_tune_mini_forward.1} parent=11 // pred_check_branch
          %485 = sbr.rel (%p483) target = $region16
        $region15: #{bert_fine_tune_mini_forward.1} parent=11 // pred_region
          %s487 = ssub.s32 32, 32
          %488 = vsyncadd [#allocation3], %s487
          %s490 = sshll.u32 [#allocation2], 4
          %s491 = int_to_ptr.vmem [resolvable:$true] %s490
          %493 = dma.hbm_to_vmem [thread:$0]  %s2, 32, %s491, [#allocation3]
        $region16: #{bert_fine_tune_mini_forward.1} parent=11 // pred_fallthru
          _
        // Predicated region
        $region17: #{bert_fine_tune_mini_forward.1} parent=11 // pred_check
          %p494 = pneg %p130
        $region18: #{bert_fine_tune_mini_forward.1} parent=11 // pred_check_branch
          %496 = sbr.rel (%p494) target = $region20
        $region19: #{bert_fine_tune_mini_forward.1} parent=11 // pred_region
          %s498 = ssub.s32 32, 32
          %499 = vsyncadd [#allocation5], %s498
          %s501 = sshll.u32 [#allocation4], 4
          %s502 = int_to_ptr.vmem [resolvable:$true] %s501
          %504 = dma.hbm_to_vmem [thread:$0]  %s3, 32, %s502, [#allocation5]
        $region20: #{bert_fine_tune_mini_forward.1} parent=11 // pred_fallthru
          _
      $region12: #{bert_fine_tune_mini_forward.1} parent=5 // pred_fallthru
        _
      %p505 = scmp.lt.s32.totalorder %s24, 8
      // Predicated region
      $region21: #{bert_fine_tune_mini_forward.1} parent=5 // pred_check
        %p506 = pneg %p505
      $region22: #{bert_fine_tune_mini_forward.1} parent=5 // pred_check_branch
        %508 = sbr.rel (%p506) target = $region24
      $region23: #{bert_fine_tune_mini_forward.1} parent=5 // pred_region
        // Predicated region
        $region25: #{bert_fine_tune_mini_forward.1} parent=23 // pred_check
          %p509 = pneg %p56
        $region26: #{bert_fine_tune_mini_forward.1} parent=23 // pred_check_branch
          %511 = sbr.rel (%p509) target = $region28
        $region27: #{bert_fine_tune_mini_forward.1} parent=23 // pred_region
          %p512 = scmp.lt.s32.totalorder %s31, 1
          %s513 = scalar_select %p512, %s31, 1
          %s514 = smul.addr %s513, 2
          %s515 = smul.addr %s514, 8
          %s516 = scalar_lea.vmem %s0, %s515
        $region28: #{bert_fine_tune_mini_forward.1} parent=23 // pred_fallthru
          _
        // Predicated region
        $region29: #{bert_fine_tune_mini_forward.1} parent=23 // pred_check
          %p517 = pneg %p82
        $region30: #{bert_fine_tune_mini_forward.1} parent=23 // pred_check_branch
          %519 = sbr.rel (%p517) target = $region32
        $region31: #{bert_fine_tune_mini_forward.1} parent=23 // pred_region
          %p520 = scmp.lt.s32.totalorder %s31, 1
          %s521 = scalar_select %p520, %s31, 1
          %s522 = scalar_lea.vmem %s1, %s521
        $region32: #{bert_fine_tune_mini_forward.1} parent=23 // pred_fallthru
          _
        // Predicated region
        $region33: #{bert_fine_tune_mini_forward.1} parent=23 // pred_check
          %p523 = pneg %p150
        $region34: #{bert_fine_tune_mini_forward.1} parent=23 // pred_check_branch
          %525 = sbr.rel (%p523) target = $region36
        $region35: #{bert_fine_tune_mini_forward.1} parent=23 // pred_region
          %s526 = sand.u32 %s24, 1
          %s527 = scalar_lea.sflag [#allocation3], %s526
          %s528 = sand.u32 %s140, 1
          %s529 = smul.addr %s528, 768
          %s530 = scalar_lea.vmem [#allocation6], %s529
          %s532 = ssub.s32 12288, 12288
          %533 = vsyncadd %s527, %s532
          %s534 = smul.addr %s32, 192
          %s535 = smul.addr %s534, 64
          %s536 = scalar_lea.hbm %s4, %s535
          %s537 = sshll.u32 %s530, 4
          %s538 = int_to_ptr.vmem [resolvable:$true] %s537
          %543 = dma.hbm_to_vmem [thread:$0]  %s536, 12288, %s538, %s527, 384, 384, 24
        $region36: #{bert_fine_tune_mini_forward.1} parent=23 // pred_fallthru
          _
        // Predicated region
        $region37: #{bert_fine_tune_mini_forward.1} parent=23 // pred_check
          %p544 = pneg %p176
        $region38: #{bert_fine_tune_mini_forward.1} parent=23 // pred_check_branch
          %546 = sbr.rel (%p544) target = $region40
        $region39: #{bert_fine_tune_mini_forward.1} parent=23 // pred_region
          %s547 = sand.u32 %s24, 1
          %s548 = scalar_lea.sflag [#allocation3], %s547
          %s549 = sand.u32 %s166, 1
          %s550 = smul.addr %s549, 6
          %s551 = scalar_lea.vmem [#allocation7], %s550
          %s553 = ssub.s32 96, 96
          %554 = vsyncadd %s548, %s553
          %s555 = smul.addr %s32, 6
          %s556 = smul.addr %s555, 16
          %s557 = scalar_lea.hbm %s5, %s556
          %s559 = sshll.u32 %s551, 4
          %s560 = int_to_ptr.vmem [resolvable:$true] %s559
          %562 = dma.hbm_to_vmem [thread:$0]  %s557, 96, %s560, %s548
        $region40: #{bert_fine_tune_mini_forward.1} parent=23 // pred_fallthru
          _
        // Predicated region
        $region41: #{bert_fine_tune_mini_forward.1} parent=23 // pred_check
          %p563 = pneg %p202
        $region42: #{bert_fine_tune_mini_forward.1} parent=23 // pred_check_branch
          %565 = sbr.rel (%p563) target = $region44
        $region43: #{bert_fine_tune_mini_forward.1} parent=23 // pred_region
          %s566 = sand.u32 %s24, 1
          %s567 = scalar_lea.sflag [#allocation3], %s566
          %s568 = sand.u32 %s192, 1
          %s569 = smul.addr %s568, 256
          %s570 = scalar_lea.vmem [#allocation8], %s569
          %s572 = ssub.s32 4096, 4096
          %573 = vsyncadd %s567, %s572
          %s574 = smul.addr %s32, 64
          %s575 = smul.addr %s574, 64
          %s576 = scalar_lea.hbm %s6, %s575
          %s577 = sshll.u32 %s570, 4
          %s578 = int_to_ptr.vmem [resolvable:$true] %s577
          %583 = dma.hbm_to_vmem [thread:$0]  %s576, 4096, %s578, %s567, 128, 128, 8
        $region44: #{bert_fine_tune_mini_forward.1} parent=23 // pred_fallthru
          _
        // Predicated region
        $region45: #{bert_fine_tune_mini_forward.1} parent=23 // pred_check
          %p584 = pneg %p228
        $region46: #{bert_fine_tune_mini_forward.1} parent=23 // pred_check_branch
          %586 = sbr.rel (%p584) target = $region48
        $region47: #{bert_fine_tune_mini_forward.1} parent=23 // pred_region
          %s587 = sand.u32 %s24, 1
          %s588 = scalar_lea.sflag [#allocation3], %s587
          %s589 = sand.u32 %s218, 1
          %s590 = smul.addr %s589, 2
          %s591 = scalar_lea.vmem [#allocation9], %s590
          %s593 = ssub.s32 32, 32
          %594 = vsyncadd %s588, %s593
          %s595 = smul.addr %s32, 2
          %s596 = smul.addr %s595, 16
          %s597 = scalar_lea.hbm %s7, %s596
          %s599 = sshll.u32 %s591, 4
          %s600 = int_to_ptr.vmem [resolvable:$true] %s599
          %602 = dma.hbm_to_vmem [thread:$0]  %s597, 32, %s600, %s588
        $region48: #{bert_fine_tune_mini_forward.1} parent=23 // pred_fallthru
          _
        // Predicated region
        $region49: #{bert_fine_tune_mini_forward.1} parent=23 // pred_check
          %p603 = pneg %p254
        $region50: #{bert_fine_tune_mini_forward.1} parent=23 // pred_check_branch
          %605 = sbr.rel (%p603) target = $region52
        $region51: #{bert_fine_tune_mini_forward.1} parent=23 // pred_region
          %s606 = sand.u32 %s24, 1
          %s607 = scalar_lea.sflag [#allocation3], %s606
          %s608 = sand.u32 %s244, 1
          %s609 = smul.addr %s608, 2
          %s610 = scalar_lea.vmem [#allocation10], %s609
          %s612 = ssub.s32 32, 32
          %613 = vsyncadd %s607, %s612
          %s614 = smul.addr %s32, 2
          %s615 = smul.addr %s614, 16
          %s616 = scalar_lea.hbm %s8, %s615
          %s618 = sshll.u32 %s610, 4
          %s619 = int_to_ptr.vmem [resolvable:$true] %s618
          %621 = dma.hbm_to_vmem [thread:$0]  %s616, 32, %s619, %s607
        $region52: #{bert_fine_tune_mini_forward.1} parent=23 // pred_fallthru
          _
        // Predicated region
        $region53: #{bert_fine_tune_mini_forward.1} parent=23 // pred_check
          %p622 = pneg %p280
        $region54: #{bert_fine_tune_mini_forward.1} parent=23 // pred_check_branch
          %624 = sbr.rel (%p622) target = $region56
        $region55: #{bert_fine_tune_mini_forward.1} parent=23 // pred_region
          %s625 = sand.u32 %s24, 1
          %s626 = scalar_lea.sflag [#allocation3], %s625
          %s627 = sand.u32 %s270, 1
          %s628 = smul.addr %s627, 2
          %s629 = scalar_lea.vmem [#allocation11], %s628
          %s631 = ssub.s32 32, 32
          %632 = vsyncadd %s626, %s631
          %s633 = smul.addr %s32, 2
          %s634 = smul.addr %s633, 16
          %s635 = scalar_lea.hbm %s9, %s634
          %s637 = sshll.u32 %s629, 4
          %s638 = int_to_ptr.vmem [resolvable:$true] %s637
          %640 = dma.hbm_to_vmem [thread:$0]  %s635, 32, %s638, %s626
        $region56: #{bert_fine_tune_mini_forward.1} parent=23 // pred_fallthru
          _
        // Predicated region
        $region57: #{bert_fine_tune_mini_forward.1} parent=23 // pred_check
          %p641 = pneg %p306
        $region58: #{bert_fine_tune_mini_forward.1} parent=23 // pred_check_branch
          %643 = sbr.rel (%p641) target = $region60
        $region59: #{bert_fine_tune_mini_forward.1} parent=23 // pred_region
          %s644 = sand.u32 %s24, 1
          %s645 = scalar_lea.sflag [#allocation3], %s644
          %s646 = sand.u32 %s296, 1
          %s647 = smul.addr %s646, 1024
          %s648 = scalar_lea.vmem [#allocation12], %s647
          %s650 = ssub.s32 16384, 16384
          %651 = vsyncadd %s645, %s650
          %s652 = smul.addr %s32, 256
          %s653 = smul.addr %s652, 64
          %s654 = scalar_lea.hbm %s10, %s653
          %s655 = sshll.u32 %s648, 4
          %s656 = int_to_ptr.vmem [resolvable:$true] %s655
          %661 = dma.hbm_to_vmem [thread:$0]  %s654, 16384, %s656, %s645, 512, 512, 32
        $region60: #{bert_fine_tune_mini_forward.1} parent=23 // pred_fallthru
          _
        // Predicated region
        $region61: #{bert_fine_tune_mini_forward.1} parent=23 // pred_check
          %p662 = pneg %p332
        $region62: #{bert_fine_tune_mini_forward.1} parent=23 // pred_check_branch
          %664 = sbr.rel (%p662) target = $region64
        $region63: #{bert_fine_tune_mini_forward.1} parent=23 // pred_region
          %s665 = sand.u32 %s24, 1
          %s666 = scalar_lea.sflag [#allocation3], %s665
          %s667 = sand.u32 %s322, 1
          %s668 = smul.addr %s667, 8
          %s669 = scalar_lea.vmem [#allocation13], %s668
          %s671 = ssub.s32 128, 128
          %672 = vsyncadd %s666, %s671
          %s673 = smul.addr %s32, 8
          %s674 = smul.addr %s673, 16
          %s675 = scalar_lea.hbm %s11, %s674
          %s677 = sshll.u32 %s669, 4
          %s678 = int_to_ptr.vmem [resolvable:$true] %s677
          %680 = dma.hbm_to_vmem [thread:$0]  %s675, 128, %s678, %s666
        $region64: #{bert_fine_tune_mini_forward.1} parent=23 // pred_fallthru
          _
        // Predicated region
        $region65: #{bert_fine_tune_mini_forward.1} parent=23 // pred_check
          %p681 = pneg %p358
        $region66: #{bert_fine_tune_mini_forward.1} parent=23 // pred_check_branch
          %683 = sbr.rel (%p681) target = $region68
        $region67: #{bert_fine_tune_mini_forward.1} parent=23 // pred_region
          %s684 = sand.u32 %s24, 1
          %s685 = scalar_lea.sflag [#allocation3], %s684
          %s686 = sand.u32 %s348, 1
          %s687 = smul.addr %s686, 1024
          %s688 = scalar_lea.vmem [#allocation14], %s687
          %s690 = ssub.s32 16384, 16384
          %691 = vsyncadd %s685, %s690
          %s692 = smul.addr %s32, 256
          %s693 = smul.addr %s692, 64
          %s694 = scalar_lea.hbm %s12, %s693
          %s695 = sshll.u32 %s688, 4
          %s696 = int_to_ptr.vmem [resolvable:$true] %s695
          %701 = dma.hbm_to_vmem [thread:$0]  %s694, 16384, %s696, %s685, 128, 128, 8
        $region68: #{bert_fine_tune_mini_forward.1} parent=23 // pred_fallthru
          _
        // Predicated region
        $region69: #{bert_fine_tune_mini_forward.1} parent=23 // pred_check
          %p702 = pneg %p384
        $region70: #{bert_fine_tune_mini_forward.1} parent=23 // pred_check_branch
          %704 = sbr.rel (%p702) target = $region72
        $region71: #{bert_fine_tune_mini_forward.1} parent=23 // pred_region
          %s705 = sand.u32 %s24, 1
          %s706 = scalar_lea.sflag [#allocation3], %s705
          %s707 = sand.u32 %s374, 1
          %s708 = smul.addr %s707, 2
          %s709 = scalar_lea.vmem [#allocation15], %s708
          %s711 = ssub.s32 32, 32
          %712 = vsyncadd %s706, %s711
          %s713 = smul.addr %s32, 2
          %s714 = smul.addr %s713, 16
          %s715 = scalar_lea.hbm %s13, %s714
          %s717 = sshll.u32 %s709, 4
          %s718 = int_to_ptr.vmem [resolvable:$true] %s717
          %720 = dma.hbm_to_vmem [thread:$0]  %s715, 32, %s718, %s706
        $region72: #{bert_fine_tune_mini_forward.1} parent=23 // pred_fallthru
          _
        // Predicated region
        $region73: #{bert_fine_tune_mini_forward.1} parent=23 // pred_check
          %p721 = pneg %p410
        $region74: #{bert_fine_tune_mini_forward.1} parent=23 // pred_check_branch
          %723 = sbr.rel (%p721) target = $region76
        $region75: #{bert_fine_tune_mini_forward.1} parent=23 // pred_region
          %s724 = sand.u32 %s24, 1
          %s725 = scalar_lea.sflag [#allocation3], %s724
          %s726 = sand.u32 %s400, 1
          %s727 = smul.addr %s726, 2
          %s728 = scalar_lea.vmem [#allocation16], %s727
          %s730 = ssub.s32 32, 32
          %731 = vsyncadd %s725, %s730
          %s732 = smul.addr %s32, 2
          %s733 = smul.addr %s732, 16
          %s734 = scalar_lea.hbm %s14, %s733
          %s736 = sshll.u32 %s728, 4
          %s737 = int_to_ptr.vmem [resolvable:$true] %s736
          %739 = dma.hbm_to_vmem [thread:$0]  %s734, 32, %s737, %s725
        $region76: #{bert_fine_tune_mini_forward.1} parent=23 // pred_fallthru
          _
        // Predicated region
        $region77: #{bert_fine_tune_mini_forward.1} parent=23 // pred_check
          %p740 = pneg %p436
        $region78: #{bert_fine_tune_mini_forward.1} parent=23 // pred_check_branch
          %742 = sbr.rel (%p740) target = $region80
        $region79: #{bert_fine_tune_mini_forward.1} parent=23 // pred_region
          %s743 = sand.u32 %s24, 1
          %s744 = scalar_lea.sflag [#allocation3], %s743
          %s745 = sand.u32 %s426, 1
          %s746 = smul.addr %s745, 2
          %s747 = scalar_lea.vmem [#allocation17], %s746
          %s749 = ssub.s32 32, 32
          %750 = vsyncadd %s744, %s749
          %s751 = smul.addr %s32, 2
          %s752 = smul.addr %s751, 16
          %s753 = scalar_lea.hbm %s15, %s752
          %s755 = sshll.u32 %s747, 4
          %s756 = int_to_ptr.vmem [resolvable:$true] %s755
          %758 = dma.hbm_to_vmem [thread:$0]  %s753, 32, %s756, %s744
        $region80: #{bert_fine_tune_mini_forward.1} parent=23 // pred_fallthru
          _
      $region24: #{bert_fine_tune_mini_forward.1} parent=5 // pred_fallthru
        _
      %p759 = scmp.le.s32.totalorder 1, %s24
      %p760 = scmp.lt.s32.totalorder %s24, 9
      %p761 = pnand %p759, %p760
      %p762 = pneg %p761
      // Predicated region
      $region81: #{bert_fine_tune_mini_forward.1} parent=5 // pred_check
        _
      $region82: #{bert_fine_tune_mini_forward.1} parent=5 // pred_check_branch
        %764 = sbr.rel (%p761) target = $region84
      $region83: #{bert_fine_tune_mini_forward.1} parent=5 // pred_region
        %s765 = ssub.s32 %s24, 1
        // Predicated region
        $region85: #{bert_fine_tune_mini_forward.1} parent=83 // pred_check
          %p766 = pneg %p109
        $region86: #{bert_fine_tune_mini_forward.1} parent=83 // pred_check_branch
          %768 = sbr.rel (%p766) target = $region88
        $region87: #{bert_fine_tune_mini_forward.1} parent=83 // pred_region
          %769 = dma.done [#allocation3], 32
        $region88: #{bert_fine_tune_mini_forward.1} parent=83 // pred_fallthru
          _
        // Predicated region
        $region89: #{bert_fine_tune_mini_forward.1} parent=83 // pred_check
          %p770 = pneg %p130
        $region90: #{bert_fine_tune_mini_forward.1} parent=83 // pred_check_branch
          %772 = sbr.rel (%p770) target = $region92
        $region91: #{bert_fine_tune_mini_forward.1} parent=83 // pred_region
          %773 = dma.done [#allocation5], 32
        $region92: #{bert_fine_tune_mini_forward.1} parent=83 // pred_fallthru
          _
        %s774 = sand.u32 %s29, 1
        %s775 = scalar_lea.sflag [#allocation3], %s774
        %s776 = sand.u32 %s143, 1
        %s777 = smul.addr %s776, 768
        %s778 = scalar_lea.vmem [#allocation6], %s777
        // Predicated region
        $region93: #{bert_fine_tune_mini_forward.1} parent=83 // pred_check
          %p779 = pneg %p156
        $region94: #{bert_fine_tune_mini_forward.1} parent=83 // pred_check_branch
          %781 = sbr.rel (%p779) target = $region96
        $region95: #{bert_fine_tune_mini_forward.1} parent=83 // pred_region
          %782 = dma.done %s775, 12288
        $region96: #{bert_fine_tune_mini_forward.1} parent=83 // pred_fallthru
          _
        %s783 = sand.u32 %s29, 1
        %s784 = scalar_lea.sflag [#allocation3], %s783
        %s785 = sand.u32 %s169, 1
        %s786 = smul.addr %s785, 6
        %s787 = scalar_lea.vmem [#allocation7], %s786
        // Predicated region
        $region97: #{bert_fine_tune_mini_forward.1} parent=83 // pred_check
          %p788 = pneg %p182
        $region98: #{bert_fine_tune_mini_forward.1} parent=83 // pred_check_branch
          %790 = sbr.rel (%p788) target = $region100
        $region99: #{bert_fine_tune_mini_forward.1} parent=83 // pred_region
          %791 = dma.done %s784, 96
        $region100: #{bert_fine_tune_mini_forward.1} parent=83 // pred_fallthru
          _
        %s792 = sand.u32 %s29, 1
        %s793 = scalar_lea.sflag [#allocation3], %s792
        %s794 = sand.u32 %s195, 1
        %s795 = smul.addr %s794, 256
        %s796 = scalar_lea.vmem [#allocation8], %s795
        // Predicated region
        $region101: #{bert_fine_tune_mini_forward.1} parent=83 // pred_check
          %p797 = pneg %p208
        $region102: #{bert_fine_tune_mini_forward.1} parent=83 // pred_check_branch
          %799 = sbr.rel (%p797) target = $region104
        $region103: #{bert_fine_tune_mini_forward.1} parent=83 // pred_region
          %800 = dma.done %s793, 4096
        $region104: #{bert_fine_tune_mini_forward.1} parent=83 // pred_fallthru
          _
        %s801 = sand.u32 %s29, 1
        %s802 = scalar_lea.sflag [#allocation3], %s801
        %s803 = sand.u32 %s221, 1
        %s804 = smul.addr %s803, 2
        %s805 = scalar_lea.vmem [#allocation9], %s804
        // Predicated region
        $region105: #{bert_fine_tune_mini_forward.1} parent=83 // pred_check
          %p806 = pneg %p234
        $region106: #{bert_fine_tune_mini_forward.1} parent=83 // pred_check_branch
          %808 = sbr.rel (%p806) target = $region108
        $region107: #{bert_fine_tune_mini_forward.1} parent=83 // pred_region
          %809 = dma.done %s802, 32
        $region108: #{bert_fine_tune_mini_forward.1} parent=83 // pred_fallthru
          _
        %s810 = sand.u32 %s29, 1
        %s811 = scalar_lea.sflag [#allocation3], %s810
        %s812 = sand.u32 %s247, 1
        %s813 = smul.addr %s812, 2
        %s814 = scalar_lea.vmem [#allocation10], %s813
        // Predicated region
        $region109: #{bert_fine_tune_mini_forward.1} parent=83 // pred_check
          %p815 = pneg %p260
        $region110: #{bert_fine_tune_mini_forward.1} parent=83 // pred_check_branch
          %817 = sbr.rel (%p815) target = $region112
        $region111: #{bert_fine_tune_mini_forward.1} parent=83 // pred_region
          %818 = dma.done %s811, 32
        $region112: #{bert_fine_tune_mini_forward.1} parent=83 // pred_fallthru
          _
        %s819 = sand.u32 %s29, 1
        %s820 = scalar_lea.sflag [#allocation3], %s819
        %s821 = sand.u32 %s273, 1
        %s822 = smul.addr %s821, 2
        %s823 = scalar_lea.vmem [#allocation11], %s822
        // Predicated region
        $region113: #{bert_fine_tune_mini_forward.1} parent=83 // pred_check
          %p824 = pneg %p286
        $region114: #{bert_fine_tune_mini_forward.1} parent=83 // pred_check_branch
          %826 = sbr.rel (%p824) target = $region116
        $region115: #{bert_fine_tune_mini_forward.1} parent=83 // pred_region
          %827 = dma.done %s820, 32
        $region116: #{bert_fine_tune_mini_forward.1} parent=83 // pred_fallthru
          _
        %s828 = sand.u32 %s29, 1
        %s829 = scalar_lea.sflag [#allocation3], %s828
        %s830 = sand.u32 %s299, 1
        %s831 = smul.addr %s830, 1024
        %s832 = scalar_lea.vmem [#allocation12], %s831
        // Predicated region
        $region117: #{bert_fine_tune_mini_forward.1} parent=83 // pred_check
          %p833 = pneg %p312
        $region118: #{bert_fine_tune_mini_forward.1} parent=83 // pred_check_branch
          %835 = sbr.rel (%p833) target = $region120
        $region119: #{bert_fine_tune_mini_forward.1} parent=83 // pred_region
          %836 = dma.done %s829, 16384
        $region120: #{bert_fine_tune_mini_forward.1} parent=83 // pred_fallthru
          _
        %s837 = sand.u32 %s29, 1
        %s838 = scalar_lea.sflag [#allocation3], %s837
        %s839 = sand.u32 %s325, 1
        %s840 = smul.addr %s839, 8
        %s841 = scalar_lea.vmem [#allocation13], %s840
        // Predicated region
        $region121: #{bert_fine_tune_mini_forward.1} parent=83 // pred_check
          %p842 = pneg %p338
        $region122: #{bert_fine_tune_mini_forward.1} parent=83 // pred_check_branch
          %844 = sbr.rel (%p842) target = $region124
        $region123: #{bert_fine_tune_mini_forward.1} parent=83 // pred_region
          %845 = dma.done %s838, 128
        $region124: #{bert_fine_tune_mini_forward.1} parent=83 // pred_fallthru
          _
        %s846 = sand.u32 %s29, 1
        %s847 = scalar_lea.sflag [#allocation3], %s846
        %s848 = sand.u32 %s351, 1
        %s849 = smul.addr %s848, 1024
        %s850 = scalar_lea.vmem [#allocation14], %s849
        // Predicated region
        $region125: #{bert_fine_tune_mini_forward.1} parent=83 // pred_check
          %p851 = pneg %p364
        $region126: #{bert_fine_tune_mini_forward.1} parent=83 // pred_check_branch
          %853 = sbr.rel (%p851) target = $region128
        $region127: #{bert_fine_tune_mini_forward.1} parent=83 // pred_region
          %854 = dma.done %s847, 16384
        $region128: #{bert_fine_tune_mini_forward.1} parent=83 // pred_fallthru
          _
        %s855 = sand.u32 %s29, 1
        %s856 = scalar_lea.sflag [#allocation3], %s855
        %s857 = sand.u32 %s377, 1
        %s858 = smul.addr %s857, 2
        %s859 = scalar_lea.vmem [#allocation15], %s858
        // Predicated region
        $region129: #{bert_fine_tune_mini_forward.1} parent=83 // pred_check
          %p860 = pneg %p390
        $region130: #{bert_fine_tune_mini_forward.1} parent=83 // pred_check_branch
          %862 = sbr.rel (%p860) target = $region132
        $region131: #{bert_fine_tune_mini_forward.1} parent=83 // pred_region
          %863 = dma.done %s856, 32
        $region132: #{bert_fine_tune_mini_forward.1} parent=83 // pred_fallthru
          _
        %s864 = sand.u32 %s29, 1
        %s865 = scalar_lea.sflag [#allocation3], %s864
        %s866 = sand.u32 %s403, 1
        %s867 = smul.addr %s866, 2
        %s868 = scalar_lea.vmem [#allocation16], %s867
        // Predicated region
        $region133: #{bert_fine_tune_mini_forward.1} parent=83 // pred_check
          %p869 = pneg %p416
        $region134: #{bert_fine_tune_mini_forward.1} parent=83 // pred_check_branch
          %871 = sbr.rel (%p869) target = $region136
        $region135: #{bert_fine_tune_mini_forward.1} parent=83 // pred_region
          %872 = dma.done %s865, 32
        $region136: #{bert_fine_tune_mini_forward.1} parent=83 // pred_fallthru
          _
        %s873 = sand.u32 %s29, 1
        %s874 = scalar_lea.sflag [#allocation3], %s873
        %s875 = sand.u32 %s429, 1
        %s876 = smul.addr %s875, 2
        %s877 = scalar_lea.vmem [#allocation17], %s876
        // Predicated region
        $region137: #{bert_fine_tune_mini_forward.1} parent=83 // pred_check
          %p878 = pneg %p442
        $region138: #{bert_fine_tune_mini_forward.1} parent=83 // pred_check_branch
          %880 = sbr.rel (%p878) target = $region140
        $region139: #{bert_fine_tune_mini_forward.1} parent=83 // pred_region
          %881 = dma.done %s874, 32
        $region140: #{bert_fine_tune_mini_forward.1} parent=83 // pred_fallthru
          _
        %p882 = scmp.lt.s32.totalorder %s33, 1
        %s883 = scalar_select %p882, %s33, 1
        %s884 = smul.addr %s883, 2
        %s885 = smul.addr %s884, 8
        %s886 = scalar_lea.vmem %s0, %s885
        %p887 = pneg %p62
        %p888 = pneg %p59
        %p889 = scmp.lt.s32.totalorder %s33, 1
        %s890 = scalar_select %p889, %s33, 1
        %s891 = scalar_lea.vmem %s1, %s890
        %p892 = pneg %p88
        %p893 = pneg %p85
        %p894 = pneg %p109
        %p895 = pneg %p106
        %p896 = pneg %p130
        %p897 = pneg %p127
        %s898 = sand.u32 %s29, 1
        %s899 = scalar_lea.sflag [#allocation3], %s898
        %s900 = sand.u32 %s143, 1
        %s901 = smul.addr %s900, 768
        %s902 = scalar_lea.vmem [#allocation6], %s901
        %p903 = pneg %p156
        %p904 = pneg %p153
        %s905 = sand.u32 %s29, 1
        %s906 = scalar_lea.sflag [#allocation3], %s905
        %s907 = sand.u32 %s169, 1
        %s908 = smul.addr %s907, 6
        %s909 = scalar_lea.vmem [#allocation7], %s908
        %p910 = pneg %p182
        %p911 = pneg %p179
        %s912 = sand.u32 %s29, 1
        %s913 = scalar_lea.sflag [#allocation3], %s912
        %s914 = sand.u32 %s195, 1
        %s915 = smul.addr %s914, 256
        %s916 = scalar_lea.vmem [#allocation8], %s915
        %p917 = pneg %p208
        %p918 = pneg %p205
        %s919 = sand.u32 %s29, 1
        %s920 = scalar_lea.sflag [#allocation3], %s919
        %s921 = sand.u32 %s221, 1
        %s922 = smul.addr %s921, 2
        %s923 = scalar_lea.vmem [#allocation9], %s922
        %p924 = pneg %p234
        %p925 = pneg %p231
        %s926 = sand.u32 %s29, 1
        %s927 = scalar_lea.sflag [#allocation3], %s926
        %s928 = sand.u32 %s247, 1
        %s929 = smul.addr %s928, 2
        %s930 = scalar_lea.vmem [#allocation10], %s929
        %p931 = pneg %p260
        %p932 = pneg %p257
        %s933 = sand.u32 %s29, 1
        %s934 = scalar_lea.sflag [#allocation3], %s933
        %s935 = sand.u32 %s273, 1
        %s936 = smul.addr %s935, 2
        %s937 = scalar_lea.vmem [#allocation11], %s936
        %p938 = pneg %p286
        %p939 = pneg %p283
        %s940 = sand.u32 %s29, 1
        %s941 = scalar_lea.sflag [#allocation3], %s940
        %s942 = sand.u32 %s299, 1
        %s943 = smul.addr %s942, 1024
        %s944 = scalar_lea.vmem [#allocation12], %s943
        %p945 = pneg %p312
        %p946 = pneg %p309
        %s947 = sand.u32 %s29, 1
        %s948 = scalar_lea.sflag [#allocation3], %s947
        %s949 = sand.u32 %s325, 1
        %s950 = smul.addr %s949, 8
        %s951 = scalar_lea.vmem [#allocation13], %s950
        %p952 = pneg %p338
        %p953 = pneg %p335
        %s954 = sand.u32 %s29, 1
        %s955 = scalar_lea.sflag [#allocation3], %s954
        %s956 = sand.u32 %s351, 1
        %s957 = smul.addr %s956, 1024
        %s958 = scalar_lea.vmem [#allocation14], %s957
        %p959 = pneg %p364
        %p960 = pneg %p361
        %s961 = sand.u32 %s29, 1
        %s962 = scalar_lea.sflag [#allocation3], %s961
        %s963 = sand.u32 %s377, 1
        %s964 = smul.addr %s963, 2
        %s965 = scalar_lea.vmem [#allocation15], %s964
        %p966 = pneg %p390
        %p967 = pneg %p387
        %s968 = sand.u32 %s29, 1
        %s969 = scalar_lea.sflag [#allocation3], %s968
        %s970 = sand.u32 %s403, 1
        %s971 = smul.addr %s970, 2
        %s972 = scalar_lea.vmem [#allocation16], %s971
        %p973 = pneg %p416
        %p974 = pneg %p413
        %s975 = sand.u32 %s29, 1
        %s976 = scalar_lea.sflag [#allocation3], %s975
        %s977 = sand.u32 %s429, 1
        %s978 = smul.addr %s977, 2
        %s979 = scalar_lea.vmem [#allocation17], %s978
        %p980 = pneg %p442
        %p981 = pneg %p439
        %p982 = pneg %p468
        %p983 = pneg %p465
        %p984 = scmp.lt.s32.totalorder %s33, 1
        %s985 = scalar_select %p984, %s33, 1
        %s986 = smul.addr %s985, 2
        %s987 = smul.addr %s986, 4
        %s988 = scalar_lea.vmem %s16, %s987
        %p989 = scmp.lt.s32.totalorder %s33, 1
        %s990 = scalar_select %p989, %s33, 1
        %s991 = smul.addr %s990, 2
        %s992 = smul.addr %s991, 8
        %s993 = scalar_lea.vmem %s0, %s992
        %p994 = scmp.lt.s32.totalorder %s33, 1
        %s995 = scalar_select %p994, %s33, 1
        %s996 = scalar_lea.vmem %s1, %s995
        %p997 = scmp.lt.s32.totalorder %s33, 1
        %s998 = scalar_select %p997, %s33, 1
        %s999 = smul.addr %s998, 2
        %s1000 = smul.addr %s999, 4
        %s1001 = scalar_lea.vmem %s16, %s1000
        %p1007 = scmp.eq.s32.totalorder %s34, 0
        // Predicated region
        $region141: #{bert_fine_tune_mini_forward.1} parent=83 // pred_check
          %p1008 = pneg %p1007
        $region142: #{bert_fine_tune_mini_forward.1} parent=83 // pred_check_branch
          %1010 = sbr.rel (%p1008) target = $region144
        $region143: #{bert_fine_tune_mini_forward.1} parent=83 // pred_region
          %v1011 = vld [vmem:[%s993] sm:$0xff]
          %v1012 = vld [vmem:[%s993 + $0x8] sm:$0xff]
          %v1013 = vld [vmem:[#allocation2] sm:$0x3]
          %v1014 = vld [vmem:[#allocation4] sm:$0x3]
          %v1015 = vadd.f32 %v1011, %v1012
          %1016 = vadd.xlane.f32.xlu0 %v1015
          %v1017 = vpop.xlane.xlu0 %1016
          %v1018 = vrcp.pop 256.0
          %v1019 = vmul.f32 %v1017, %v1018
          %v1020 = vsub.f32 %v1011, %v1019
          %v1021 = vsub.f32 %v1012, %v1019
          %v1022 = vmul.f32 %v1020, %v1020
          %v1023 = vmul.f32 %v1021, %v1021
          %v1024 = vadd.f32 %v1022, %v1023
          %1025 = vadd.xlane.f32.xlu0 %v1024
          %v1026 = vpop.xlane.xlu0 %1025
          %v1027 = vmul.f32 %v1026, %v1018
          %v1028 = vadd.f32 %v1027, 1e-12
          %v1029 = vrsqrt.pop %v1028
          %v1030 = vmul.f32 %v1020, %v1029
          %v1031 = vmul.f32 %v1021, %v1029
          %v1033 = vlaneseq
          %v1034 = vshrl.u32 %v1033, 7
          %v1035 = vsub.s32 0, %v1034
          %v1036 = vrot.slane %v1013, %v1035
          %v1037 = vlaneseq
          %v1038 = vshrl.u32 %v1037, 7
          %v1039 = vsub.s32 1, %v1038
          %v1040 = vrot.slane %v1013, %v1039
          %v1043 = vmul.f32 %v1030, %v1036
          %v1044 = vmul.f32 %v1031, %v1040
          %v1046 = vlaneseq
          %v1047 = vshrl.u32 %v1046, 7
          %v1048 = vsub.s32 0, %v1047
          %v1049 = vrot.slane %v1014, %v1048
          %v1050 = vlaneseq
          %v1051 = vshrl.u32 %v1050, 7
          %v1052 = vsub.s32 1, %v1051
          %v1053 = vrot.slane %v1014, %v1052
          %v1056 = vadd.f32 %v1043, %v1049
          %v1057 = vadd.f32 %v1044, %v1053
          %v1058 = vpack.c.bf16 %v1056, %v1056
          %v1059 = vpack.c.bf16 %v1057, %v1057
          %v1062 = vunpack.c.l.b16 %v1058
          %v1063 = vunpack.c.l.b16 %v1059
          %v1064 = vpack.c.b16 %v1063, %v1062
          %1066 = vst [vmem:[%s1001] sm:$0xff] %v1064
        $region144: #{bert_fine_tune_mini_forward.1} parent=83 // pred_fallthru
          _
        %v1067 = vld [vmem:[%s1001] sm:$0xff]
        %v1068 = vld [vmem:[%s996] sm:$0x1]
        %v1069 = vld [vmem:[%s778] sm:$0xff]
        %v1070 = vld [vmem:[%s778 + $0x8] sm:$0xff]
        %v1071 = vld [vmem:[%s778 + $0x10] sm:$0xff]
        %v1072 = vld [vmem:[%s778 + $0x18] sm:$0xff]
        %v1073 = vld [vmem:[%s778 + $0x20] sm:$0xff]
        %v1074 = vld [vmem:[%s778 + $0x28] sm:$0xff]
        %v1075 = vld [vmem:[%s778 + $0x30] sm:$0xff]
        %v1076 = vld [vmem:[%s778 + $0x38] sm:$0xff]
        %v1077 = vld [vmem:[%s778 + $0x40] sm:$0xff]
        %v1078 = vld [vmem:[%s778 + $0x48] sm:$0xff]
        %v1079 = vld [vmem:[%s778 + $0x50] sm:$0xff]
        %v1080 = vld [vmem:[%s778 + $0x58] sm:$0xff]
        %v1081 = vld [vmem:[%s778 + $0x60] sm:$0xff]
        %v1082 = vld [vmem:[%s778 + $0x68] sm:$0xff]
        %v1083 = vld [vmem:[%s778 + $0x70] sm:$0xff]
        %v1084 = vld [vmem:[%s778 + $0x78] sm:$0xff]
        %v1085 = vld [vmem:[%s778 + $0x80] sm:$0xff]
        %v1086 = vld [vmem:[%s778 + $0x88] sm:$0xff]
        %v1087 = vld [vmem:[%s778 + $0x90] sm:$0xff]
        %v1088 = vld [vmem:[%s778 + $0x98] sm:$0xff]
        %v1089 = vld [vmem:[%s778 + $0xa0] sm:$0xff]
        %v1090 = vld [vmem:[%s778 + $0xa8] sm:$0xff]
        %v1091 = vld [vmem:[%s778 + $0xb0] sm:$0xff]
        %v1092 = vld [vmem:[%s778 + $0xb8] sm:$0xff]
        %v1093 = vld [vmem:[%s778 + $0xc0] sm:$0xff]
        %v1094 = vld [vmem:[%s778 + $0xc8] sm:$0xff]
        %v1095 = vld [vmem:[%s778 + $0xd0] sm:$0xff]
        %v1096 = vld [vmem:[%s778 + $0xd8] sm:$0xff]
        %v1097 = vld [vmem:[%s778 + $0xe0] sm:$0xff]
        %v1098 = vld [vmem:[%s778 + $0xe8] sm:$0xff]
        %v1099 = vld [vmem:[%s778 + $0xf0] sm:$0xff]
        %v1100 = vld [vmem:[%s778 + $0xf8] sm:$0xff]
        %v1101 = vld [vmem:[%s778 + $0x100] sm:$0xff]
        %v1102 = vld [vmem:[%s778 + $0x108] sm:$0xff]
        %v1103 = vld [vmem:[%s778 + $0x110] sm:$0xff]
        %v1104 = vld [vmem:[%s778 + $0x118] sm:$0xff]
        %v1105 = vld [vmem:[%s778 + $0x120] sm:$0xff]
        %v1106 = vld [vmem:[%s778 + $0x128] sm:$0xff]
        %v1107 = vld [vmem:[%s778 + $0x130] sm:$0xff]
        %v1108 = vld [vmem:[%s778 + $0x138] sm:$0xff]
        %v1109 = vld [vmem:[%s778 + $0x140] sm:$0xff]
        %v1110 = vld [vmem:[%s778 + $0x148] sm:$0xff]
        %v1111 = vld [vmem:[%s778 + $0x150] sm:$0xff]
        %v1112 = vld [vmem:[%s778 + $0x158] sm:$0xff]
        %v1113 = vld [vmem:[%s778 + $0x160] sm:$0xff]
        %v1114 = vld [vmem:[%s778 + $0x168] sm:$0xff]
        %v1115 = vld [vmem:[%s778 + $0x170] sm:$0xff]
        %v1116 = vld [vmem:[%s778 + $0x178] sm:$0xff]
        %v1117 = vld [vmem:[%s778 + $0x180] sm:$0xff]
        %v1118 = vld [vmem:[%s778 + $0x188] sm:$0xff]
        %v1119 = vld [vmem:[%s778 + $0x190] sm:$0xff]
        %v1120 = vld [vmem:[%s778 + $0x198] sm:$0xff]
        %v1121 = vld [vmem:[%s778 + $0x1a0] sm:$0xff]
        %v1122 = vld [vmem:[%s778 + $0x1a8] sm:$0xff]
        %v1123 = vld [vmem:[%s778 + $0x1b0] sm:$0xff]
        %v1124 = vld [vmem:[%s778 + $0x1b8] sm:$0xff]
        %v1125 = vld [vmem:[%s778 + $0x1c0] sm:$0xff]
        %v1126 = vld [vmem:[%s778 + $0x1c8] sm:$0xff]
        %v1127 = vld [vmem:[%s778 + $0x1d0] sm:$0xff]
        %v1128 = vld [vmem:[%s778 + $0x1d8] sm:$0xff]
        %v1129 = vld [vmem:[%s778 + $0x1e0] sm:$0xff]
        %v1130 = vld [vmem:[%s778 + $0x1e8] sm:$0xff]
        %v1131 = vld [vmem:[%s778 + $0x1f0] sm:$0xff]
        %v1132 = vld [vmem:[%s778 + $0x1f8] sm:$0xff]
        %v1133 = vld [vmem:[%s778 + $0x200] sm:$0xff]
        %v1134 = vld [vmem:[%s778 + $0x208] sm:$0xff]
        %v1135 = vld [vmem:[%s778 + $0x210] sm:$0xff]
        %v1136 = vld [vmem:[%s778 + $0x218] sm:$0xff]
        %v1137 = vld [vmem:[%s778 + $0x220] sm:$0xff]
        %v1138 = vld [vmem:[%s778 + $0x228] sm:$0xff]
        %v1139 = vld [vmem:[%s778 + $0x230] sm:$0xff]
        %v1140 = vld [vmem:[%s778 + $0x238] sm:$0xff]
        %v1141 = vld [vmem:[%s778 + $0x240] sm:$0xff]
        %v1142 = vld [vmem:[%s778 + $0x248] sm:$0xff]
        %v1143 = vld [vmem:[%s778 + $0x250] sm:$0xff]
        %v1144 = vld [vmem:[%s778 + $0x258] sm:$0xff]
        %v1145 = vld [vmem:[%s778 + $0x260] sm:$0xff]
        %v1146 = vld [vmem:[%s778 + $0x268] sm:$0xff]
        %v1147 = vld [vmem:[%s778 + $0x270] sm:$0xff]
        %v1148 = vld [vmem:[%s778 + $0x278] sm:$0xff]
        %v1149 = vld [vmem:[%s778 + $0x280] sm:$0xff]
        %v1150 = vld [vmem:[%s778 + $0x288] sm:$0xff]
        %v1151 = vld [vmem:[%s778 + $0x290] sm:$0xff]
        %v1152 = vld [vmem:[%s778 + $0x298] sm:$0xff]
        %v1153 = vld [vmem:[%s778 + $0x2a0] sm:$0xff]
        %v1154 = vld [vmem:[%s778 + $0x2a8] sm:$0xff]
        %v1155 = vld [vmem:[%s778 + $0x2b0] sm:$0xff]
        %v1156 = vld [vmem:[%s778 + $0x2b8] sm:$0xff]
        %v1157 = vld [vmem:[%s778 + $0x2c0] sm:$0xff]
        %v1158 = vld [vmem:[%s778 + $0x2c8] sm:$0xff]
        %v1159 = vld [vmem:[%s778 + $0x2d0] sm:$0xff]
        %v1160 = vld [vmem:[%s778 + $0x2d8] sm:$0xff]
        %v1161 = vld [vmem:[%s778 + $0x2e0] sm:$0xff]
        %v1162 = vld [vmem:[%s778 + $0x2e8] sm:$0xff]
        %v1163 = vld [vmem:[%s778 + $0x2f0] sm:$0xff]
        %v1164 = vld [vmem:[%s778 + $0x2f8] sm:$0xff]
        %v1165 = vld [vmem:[%s787] sm:$0x3f]
        %v1167 = vlaneseq
        %v1168 = vshrl.u32 %v1167, 7
        %v1169 = vsub.s32 0, %v1168
        %v1170 = vrot.slane %v1165, %v1169
        %v1171 = vlaneseq
        %v1172 = vshrl.u32 %v1171, 7
        %v1173 = vsub.s32 1, %v1172
        %v1174 = vrot.slane %v1165, %v1173
        %v1175 = vlaneseq
        %v1176 = vshrl.u32 %v1175, 7
        %v1177 = vsub.s32 2, %v1176
        %v1178 = vrot.slane %v1165, %v1177
        %v1179 = vlaneseq
        %v1180 = vshrl.u32 %v1179, 7
        %v1181 = vsub.s32 3, %v1180
        %v1182 = vrot.slane %v1165, %v1181
        %v1183 = vlaneseq
        %v1184 = vshrl.u32 %v1183, 7
        %v1185 = vsub.s32 4, %v1184
        %v1186 = vrot.slane %v1165, %v1185
        %v1187 = vlaneseq
        %v1188 = vshrl.u32 %v1187, 7
        %v1189 = vsub.s32 5, %v1188
        %v1190 = vrot.slane %v1165, %v1189
        %v1198 = vunpack.c.l.b16 %v1067
        %v1199 = vunpack.c.h.b16 %v1067
        %v1200 = vpack.c.b16 %v1198, %v1198
        %v1201 = vpack.c.b16 %v1199, %v1199
        %v1300 = vunpack.c.l.b16 %v1069
        %v1301 = vunpack.c.h.b16 %v1069
        %v1302 = vunpack.c.l.b16 %v1070
        %v1303 = vunpack.c.h.b16 %v1070
        %v1304 = vunpack.c.l.b16 %v1071
        %v1305 = vunpack.c.h.b16 %v1071
        %v1306 = vunpack.c.l.b16 %v1072
        %v1307 = vunpack.c.h.b16 %v1072
        %v1308 = vunpack.c.l.b16 %v1073
        %v1309 = vunpack.c.h.b16 %v1073
        %v1310 = vunpack.c.l.b16 %v1074
        %v1311 = vunpack.c.h.b16 %v1074
        %v1312 = vunpack.c.l.b16 %v1075
        %v1313 = vunpack.c.h.b16 %v1075
        %v1314 = vunpack.c.l.b16 %v1076
        %v1315 = vunpack.c.h.b16 %v1076
        %v1316 = vunpack.c.l.b16 %v1077
        %v1317 = vunpack.c.h.b16 %v1077
        %v1318 = vunpack.c.l.b16 %v1078
        %v1319 = vunpack.c.h.b16 %v1078
        %v1320 = vunpack.c.l.b16 %v1079
        %v1321 = vunpack.c.h.b16 %v1079
        %v1322 = vunpack.c.l.b16 %v1080
        %v1323 = vunpack.c.h.b16 %v1080
        %v1324 = vunpack.c.l.b16 %v1081
        %v1325 = vunpack.c.h.b16 %v1081
        %v1326 = vunpack.c.l.b16 %v1082
        %v1327 = vunpack.c.h.b16 %v1082
        %v1328 = vunpack.c.l.b16 %v1083
        %v1329 = vunpack.c.h.b16 %v1083
        %v1330 = vunpack.c.l.b16 %v1084
        %v1331 = vunpack.c.h.b16 %v1084
        %v1332 = vunpack.c.l.b16 %v1085
        %v1333 = vunpack.c.h.b16 %v1085
        %v1334 = vunpack.c.l.b16 %v1086
        %v1335 = vunpack.c.h.b16 %v1086
        %v1336 = vunpack.c.l.b16 %v1087
        %v1337 = vunpack.c.h.b16 %v1087
        %v1338 = vunpack.c.l.b16 %v1088
        %v1339 = vunpack.c.h.b16 %v1088
        %v1340 = vunpack.c.l.b16 %v1089
        %v1341 = vunpack.c.h.b16 %v1089
        %v1342 = vunpack.c.l.b16 %v1090
        %v1343 = vunpack.c.h.b16 %v1090
        %v1344 = vunpack.c.l.b16 %v1091
        %v1345 = vunpack.c.h.b16 %v1091
        %v1346 = vunpack.c.l.b16 %v1092
        %v1347 = vunpack.c.h.b16 %v1092
        %v1348 = vunpack.c.l.b16 %v1093
        %v1349 = vunpack.c.h.b16 %v1093
        %v1350 = vunpack.c.l.b16 %v1094
        %v1351 = vunpack.c.h.b16 %v1094
        %v1352 = vunpack.c.l.b16 %v1095
        %v1353 = vunpack.c.h.b16 %v1095
        %v1354 = vunpack.c.l.b16 %v1096
        %v1355 = vunpack.c.h.b16 %v1096
        %v1356 = vunpack.c.l.b16 %v1097
        %v1357 = vunpack.c.h.b16 %v1097
        %v1358 = vunpack.c.l.b16 %v1098
        %v1359 = vunpack.c.h.b16 %v1098
        %v1360 = vunpack.c.l.b16 %v1099
        %v1361 = vunpack.c.h.b16 %v1099
        %v1362 = vunpack.c.l.b16 %v1100
        %v1363 = vunpack.c.h.b16 %v1100
        %v1364 = vunpack.c.l.b16 %v1101
        %v1365 = vunpack.c.h.b16 %v1101
        %v1366 = vunpack.c.l.b16 %v1102
        %v1367 = vunpack.c.h.b16 %v1102
        %v1368 = vunpack.c.l.b16 %v1103
        %v1369 = vunpack.c.h.b16 %v1103
        %v1370 = vunpack.c.l.b16 %v1104
        %v1371 = vunpack.c.h.b16 %v1104
        %v1372 = vunpack.c.l.b16 %v1105
        %v1373 = vunpack.c.h.b16 %v1105
        %v1374 = vunpack.c.l.b16 %v1106
        %v1375 = vunpack.c.h.b16 %v1106
        %v1376 = vunpack.c.l.b16 %v1107
        %v1377 = vunpack.c.h.b16 %v1107
        %v1378 = vunpack.c.l.b16 %v1108
        %v1379 = vunpack.c.h.b16 %v1108
        %v1380 = vunpack.c.l.b16 %v1109
        %v1381 = vunpack.c.h.b16 %v1109
        %v1382 = vunpack.c.l.b16 %v1110
        %v1383 = vunpack.c.h.b16 %v1110
        %v1384 = vunpack.c.l.b16 %v1111
        %v1385 = vunpack.c.h.b16 %v1111
        %v1386 = vunpack.c.l.b16 %v1112
        %v1387 = vunpack.c.h.b16 %v1112
        %v1388 = vunpack.c.l.b16 %v1113
        %v1389 = vunpack.c.h.b16 %v1113
        %v1390 = vunpack.c.l.b16 %v1114
        %v1391 = vunpack.c.h.b16 %v1114
        %v1392 = vunpack.c.l.b16 %v1115
        %v1393 = vunpack.c.h.b16 %v1115
        %v1394 = vunpack.c.l.b16 %v1116
        %v1395 = vunpack.c.h.b16 %v1116
        %v1396 = vunpack.c.l.b16 %v1117
        %v1397 = vunpack.c.h.b16 %v1117
        %v1398 = vunpack.c.l.b16 %v1118
        %v1399 = vunpack.c.h.b16 %v1118
        %v1400 = vunpack.c.l.b16 %v1119
        %v1401 = vunpack.c.h.b16 %v1119
        %v1402 = vunpack.c.l.b16 %v1120
        %v1403 = vunpack.c.h.b16 %v1120
        %v1404 = vunpack.c.l.b16 %v1121
        %v1405 = vunpack.c.h.b16 %v1121
        %v1406 = vunpack.c.l.b16 %v1122
        %v1407 = vunpack.c.h.b16 %v1122
        %v1408 = vunpack.c.l.b16 %v1123
        %v1409 = vunpack.c.h.b16 %v1123
        %v1410 = vunpack.c.l.b16 %v1124
        %v1411 = vunpack.c.h.b16 %v1124
        %v1412 = vunpack.c.l.b16 %v1125
        %v1413 = vunpack.c.h.b16 %v1125
        %v1414 = vunpack.c.l.b16 %v1126
        %v1415 = vunpack.c.h.b16 %v1126
        %v1416 = vunpack.c.l.b16 %v1127
        %v1417 = vunpack.c.h.b16 %v1127
        %v1418 = vunpack.c.l.b16 %v1128
        %v1419 = vunpack.c.h.b16 %v1128
        %v1420 = vunpack.c.l.b16 %v1129
        %v1421 = vunpack.c.h.b16 %v1129
        %v1422 = vunpack.c.l.b16 %v1130
        %v1423 = vunpack.c.h.b16 %v1130
        %v1424 = vunpack.c.l.b16 %v1131
        %v1425 = vunpack.c.h.b16 %v1131
        %v1426 = vunpack.c.l.b16 %v1132
        %v1427 = vunpack.c.h.b16 %v1132
        %v1428 = vunpack.c.l.b16 %v1133
        %v1429 = vunpack.c.h.b16 %v1133
        %v1430 = vunpack.c.l.b16 %v1134
        %v1431 = vunpack.c.h.b16 %v1134
        %v1432 = vunpack.c.l.b16 %v1135
        %v1433 = vunpack.c.h.b16 %v1135
        %v1434 = vunpack.c.l.b16 %v1136
        %v1435 = vunpack.c.h.b16 %v1136
        %v1436 = vunpack.c.l.b16 %v1137
        %v1437 = vunpack.c.h.b16 %v1137
        %v1438 = vunpack.c.l.b16 %v1138
        %v1439 = vunpack.c.h.b16 %v1138
        %v1440 = vunpack.c.l.b16 %v1139
        %v1441 = vunpack.c.h.b16 %v1139
        %v1442 = vunpack.c.l.b16 %v1140
        %v1443 = vunpack.c.h.b16 %v1140
        %v1444 = vunpack.c.l.b16 %v1141
        %v1445 = vunpack.c.h.b16 %v1141
        %v1446 = vunpack.c.l.b16 %v1142
        %v1447 = vunpack.c.h.b16 %v1142
        %v1448 = vunpack.c.l.b16 %v1143
        %v1449 = vunpack.c.h.b16 %v1143
        %v1450 = vunpack.c.l.b16 %v1144
        %v1451 = vunpack.c.h.b16 %v1144
        %v1452 = vunpack.c.l.b16 %v1145
        %v1453 = vunpack.c.h.b16 %v1145
        %v1454 = vunpack.c.l.b16 %v1146
        %v1455 = vunpack.c.h.b16 %v1146
        %v1456 = vunpack.c.l.b16 %v1147
        %v1457 = vunpack.c.h.b16 %v1147
        %v1458 = vunpack.c.l.b16 %v1148
        %v1459 = vunpack.c.h.b16 %v1148
        %v1460 = vunpack.c.l.b16 %v1149
        %v1461 = vunpack.c.h.b16 %v1149
        %v1462 = vunpack.c.l.b16 %v1150
        %v1463 = vunpack.c.h.b16 %v1150
        %v1464 = vunpack.c.l.b16 %v1151
        %v1465 = vunpack.c.h.b16 %v1151
        %v1466 = vunpack.c.l.b16 %v1152
        %v1467 = vunpack.c.h.b16 %v1152
        %v1468 = vunpack.c.l.b16 %v1153
        %v1469 = vunpack.c.h.b16 %v1153
        %v1470 = vunpack.c.l.b16 %v1154
        %v1471 = vunpack.c.h.b16 %v1154
        %v1472 = vunpack.c.l.b16 %v1155
        %v1473 = vunpack.c.h.b16 %v1155
        %v1474 = vunpack.c.l.b16 %v1156
        %v1475 = vunpack.c.h.b16 %v1156
        %v1476 = vunpack.c.l.b16 %v1157
        %v1477 = vunpack.c.h.b16 %v1157
        %v1478 = vunpack.c.l.b16 %v1158
        %v1479 = vunpack.c.h.b16 %v1158
        %v1480 = vunpack.c.l.b16 %v1159
        %v1481 = vunpack.c.h.b16 %v1159
        %v1482 = vunpack.c.l.b16 %v1160
        %v1483 = vunpack.c.h.b16 %v1160
        %v1484 = vunpack.c.l.b16 %v1161
        %v1485 = vunpack.c.h.b16 %v1161
        %v1486 = vunpack.c.l.b16 %v1162
        %v1487 = vunpack.c.h.b16 %v1162
        %v1488 = vunpack.c.l.b16 %v1163
        %v1489 = vunpack.c.h.b16 %v1163
        %v1490 = vunpack.c.l.b16 %v1164
        %v1491 = vunpack.c.h.b16 %v1164
        %v1492 = vpack.c.b16 %v1306, %v1300
        %v1493 = vpack.c.b16 %v1307, %v1301
        %v1494 = vpack.c.b16 %v1308, %v1302
        %v1495 = vpack.c.b16 %v1309, %v1303
        %v1496 = vpack.c.b16 %v1310, %v1304
        %v1497 = vpack.c.b16 %v1311, %v1305
        %v1498 = vpack.c.b16 %v1318, %v1312
        %v1499 = vpack.c.b16 %v1319, %v1313
        %v1500 = vpack.c.b16 %v1320, %v1314
        %v1501 = vpack.c.b16 %v1321, %v1315
        %v1502 = vpack.c.b16 %v1322, %v1316
        %v1503 = vpack.c.b16 %v1323, %v1317
        %v1504 = vpack.c.b16 %v1330, %v1324
        %v1505 = vpack.c.b16 %v1331, %v1325
        %v1506 = vpack.c.b16 %v1332, %v1326
        %v1507 = vpack.c.b16 %v1333, %v1327
        %v1508 = vpack.c.b16 %v1334, %v1328
        %v1509 = vpack.c.b16 %v1335, %v1329
        %v1510 = vpack.c.b16 %v1342, %v1336
        %v1511 = vpack.c.b16 %v1343, %v1337
        %v1512 = vpack.c.b16 %v1344, %v1338
        %v1513 = vpack.c.b16 %v1345, %v1339
        %v1514 = vpack.c.b16 %v1346, %v1340
        %v1515 = vpack.c.b16 %v1347, %v1341
        %v1516 = vpack.c.b16 %v1354, %v1348
        %v1517 = vpack.c.b16 %v1355, %v1349
        %v1518 = vpack.c.b16 %v1356, %v1350
        %v1519 = vpack.c.b16 %v1357, %v1351
        %v1520 = vpack.c.b16 %v1358, %v1352
        %v1521 = vpack.c.b16 %v1359, %v1353
        %v1522 = vpack.c.b16 %v1366, %v1360
        %v1523 = vpack.c.b16 %v1367, %v1361
        %v1524 = vpack.c.b16 %v1368, %v1362
        %v1525 = vpack.c.b16 %v1369, %v1363
        %v1526 = vpack.c.b16 %v1370, %v1364
        %v1527 = vpack.c.b16 %v1371, %v1365
        %v1528 = vpack.c.b16 %v1378, %v1372
        %v1529 = vpack.c.b16 %v1379, %v1373
        %v1530 = vpack.c.b16 %v1380, %v1374
        %v1531 = vpack.c.b16 %v1381, %v1375
        %v1532 = vpack.c.b16 %v1382, %v1376
        %v1533 = vpack.c.b16 %v1383, %v1377
        %v1534 = vpack.c.b16 %v1390, %v1384
        %v1535 = vpack.c.b16 %v1391, %v1385
        %v1536 = vpack.c.b16 %v1392, %v1386
        %v1537 = vpack.c.b16 %v1393, %v1387
        %v1538 = vpack.c.b16 %v1394, %v1388
        %v1539 = vpack.c.b16 %v1395, %v1389
        %v1540 = vpack.c.b16 %v1402, %v1396
        %v1541 = vpack.c.b16 %v1403, %v1397
        %v1542 = vpack.c.b16 %v1404, %v1398
        %v1543 = vpack.c.b16 %v1405, %v1399
        %v1544 = vpack.c.b16 %v1406, %v1400
        %v1545 = vpack.c.b16 %v1407, %v1401
        %v1546 = vpack.c.b16 %v1414, %v1408
        %v1547 = vpack.c.b16 %v1415, %v1409
        %v1548 = vpack.c.b16 %v1416, %v1410
        %v1549 = vpack.c.b16 %v1417, %v1411
        %v1550 = vpack.c.b16 %v1418, %v1412
        %v1551 = vpack.c.b16 %v1419, %v1413
        %v1552 = vpack.c.b16 %v1426, %v1420
        %v1553 = vpack.c.b16 %v1427, %v1421
        %v1554 = vpack.c.b16 %v1428, %v1422
        %v1555 = vpack.c.b16 %v1429, %v1423
        %v1556 = vpack.c.b16 %v1430, %v1424
        %v1557 = vpack.c.b16 %v1431, %v1425
        %v1558 = vpack.c.b16 %v1438, %v1432
        %v1559 = vpack.c.b16 %v1439, %v1433
        %v1560 = vpack.c.b16 %v1440, %v1434
        %v1561 = vpack.c.b16 %v1441, %v1435
        %v1562 = vpack.c.b16 %v1442, %v1436
        %v1563 = vpack.c.b16 %v1443, %v1437
        %v1564 = vpack.c.b16 %v1450, %v1444
        %v1565 = vpack.c.b16 %v1451, %v1445
        %v1566 = vpack.c.b16 %v1452, %v1446
        %v1567 = vpack.c.b16 %v1453, %v1447
        %v1568 = vpack.c.b16 %v1454, %v1448
        %v1569 = vpack.c.b16 %v1455, %v1449
        %v1570 = vpack.c.b16 %v1462, %v1456
        %v1571 = vpack.c.b16 %v1463, %v1457
        %v1572 = vpack.c.b16 %v1464, %v1458
        %v1573 = vpack.c.b16 %v1465, %v1459
        %v1574 = vpack.c.b16 %v1466, %v1460
        %v1575 = vpack.c.b16 %v1467, %v1461
        %v1576 = vpack.c.b16 %v1474, %v1468
        %v1577 = vpack.c.b16 %v1475, %v1469
        %v1578 = vpack.c.b16 %v1476, %v1470
        %v1579 = vpack.c.b16 %v1477, %v1471
        %v1580 = vpack.c.b16 %v1478, %v1472
        %v1581 = vpack.c.b16 %v1479, %v1473
        %v1582 = vpack.c.b16 %v1486, %v1480
        %v1583 = vpack.c.b16 %v1487, %v1481
        %v1584 = vpack.c.b16 %v1488, %v1482
        %v1585 = vpack.c.b16 %v1489, %v1483
        %v1586 = vpack.c.b16 %v1490, %v1484
        %v1587 = vpack.c.b16 %v1491, %v1485
        %1684 = vmatprep.subr.bf16.mxu0 %v1535
        %1685 = vmatpush1.bf16.msra.mxu0 %v1534
        %1686 = vmatprep.subr.bf16.mxu0 %v1529
        %1687 = vmatpush1.bf16.msra.mxu0 %v1528
        %1688 = vmatprep.subr.bf16.mxu0 %v1523
        %1689 = vmatpush1.bf16.msra.mxu0 %v1522
        %1690 = vmatprep.subr.bf16.mxu0 %v1517
        %1691 = vmatpush1.bf16.msra.mxu0 %v1516
        %1692 = vmatprep.subr.bf16.mxu0 %v1511
        %1693 = vmatpush1.bf16.msra.mxu0 %v1510
        %1694 = vmatprep.subr.bf16.mxu0 %v1505
        %1695 = vmatpush1.bf16.msra.mxu0 %v1504
        %1696 = vmatprep.subr.bf16.mxu0 %v1499
        %1697 = vmatpush1.bf16.msra.mxu0 %v1498
        %1698 = vmatprep.subr.bf16.mxu0 %v1493
        %1699 = vmatpush1.bf16.msra.mxu0 %v1492
        %1700 = vmatprep.subr.bf16.mxu0 %v1583
        %1701 = vmatpush2.bf16.msra.mxu0 %v1582
        %1702 = vmatprep.subr.bf16.mxu0 %v1577
        %1703 = vmatpush2.bf16.msra.mxu0 %v1576
        %1704 = vmatprep.subr.bf16.mxu0 %v1571
        %1705 = vmatpush2.bf16.msra.mxu0 %v1570
        %1706 = vmatprep.subr.bf16.mxu0 %v1565
        %1707 = vmatpush2.bf16.msra.mxu0 %v1564
        %1708 = vmatprep.subr.bf16.mxu0 %v1559
        %1709 = vmatpush2.bf16.msra.mxu0 %v1558
        %1710 = vmatprep.subr.bf16.mxu0 %v1553
        %1711 = vmatpush2.bf16.msra.mxu0 %v1552
        %1712 = vmatprep.subr.bf16.mxu0 %v1547
        %1713 = vmatpush2.bf16.msra.mxu0 %v1546
        %1714 = vmatprep.subr.bf16.mxu0 %v1541
        %1715 = vmatpush2.bf16.msra.mxu0 %v1540
        %1716 = vmatprep.mubr.bf16.mxu0 %v1201
        %1717 = vmatmul.mubr.bf16.gmra.mxu0 %v1200
        %v1718 = vpop.f32.mrf.mxu0
        %v1719 = vadd.f32 %v1170, %v1718
        %v1720 = vpop.f32.mrf.mxu0
        %v1721 = vadd.f32 %v1174, %v1720
        %v1722 = vpop.f32.mrf.mxu0
        %v1723 = vpop.f32.mrf.mxu0
        %1724 = vdwg.mxu0
        %1725 = vmatprep.subr.bf16.mxu0 %v1537
        %1726 = vmatpush1.bf16.msra.mxu0 %v1536
        %1727 = vmatprep.subr.bf16.mxu0 %v1531
        %1728 = vmatpush1.bf16.msra.mxu0 %v1530
        %1729 = vmatprep.subr.bf16.mxu0 %v1525
        %1730 = vmatpush1.bf16.msra.mxu0 %v1524
        %1731 = vmatprep.subr.bf16.mxu0 %v1519
        %1732 = vmatpush1.bf16.msra.mxu0 %v1518
        %1733 = vmatprep.subr.bf16.mxu0 %v1513
        %1734 = vmatpush1.bf16.msra.mxu0 %v1512
        %1735 = vmatprep.subr.bf16.mxu0 %v1507
        %1736 = vmatpush1.bf16.msra.mxu0 %v1506
        %1737 = vmatprep.subr.bf16.mxu0 %v1501
        %1738 = vmatpush1.bf16.msra.mxu0 %v1500
        %1739 = vmatprep.subr.bf16.mxu0 %v1495
        %1740 = vmatpush1.bf16.msra.mxu0 %v1494
        %1741 = vmatprep.subr.bf16.mxu0 %v1585
        %1742 = vmatpush2.bf16.msra.mxu0 %v1584
        %1743 = vmatprep.subr.bf16.mxu0 %v1579
        %1744 = vmatpush2.bf16.msra.mxu0 %v1578
        %1745 = vmatprep.subr.bf16.mxu0 %v1573
        %1746 = vmatpush2.bf16.msra.mxu0 %v1572
        %1747 = vmatprep.subr.bf16.mxu0 %v1567
        %1748 = vmatpush2.bf16.msra.mxu0 %v1566
        %1749 = vmatprep.subr.bf16.mxu0 %v1561
        %1750 = vmatpush2.bf16.msra.mxu0 %v1560
        %1751 = vmatprep.subr.bf16.mxu0 %v1555
        %1752 = vmatpush2.bf16.msra.mxu0 %v1554
        %1753 = vmatprep.subr.bf16.mxu0 %v1549
        %1754 = vmatpush2.bf16.msra.mxu0 %v1548
        %1755 = vmatprep.subr.bf16.mxu0 %v1543
        %1756 = vmatpush2.bf16.msra.mxu0 %v1542
        %1757 = vmatprep.mubr.bf16.mxu0 %v1201
        %1758 = vmatmul.mubr.bf16.gmra.mxu0 %v1200
        %v1759 = vpop.f32.mrf.mxu0
        %v1760 = vadd.f32 %v1178, %v1759
        %v1761 = vpop.f32.mrf.mxu0
        %v1762 = vadd.f32 %v1182, %v1761
        %v1763 = vpop.f32.mrf.mxu0
        %v1764 = vpop.f32.mrf.mxu0
        %1765 = vdwg.mxu0
        %1766 = vmatprep.subr.bf16.mxu0 %v1539
        %1767 = vmatpush1.bf16.msra.mxu0 %v1538
        %1768 = vmatprep.subr.bf16.mxu0 %v1533
        %1769 = vmatpush1.bf16.msra.mxu0 %v1532
        %1770 = vmatprep.subr.bf16.mxu0 %v1527
        %1771 = vmatpush1.bf16.msra.mxu0 %v1526
        %1772 = vmatprep.subr.bf16.mxu0 %v1521
        %1773 = vmatpush1.bf16.msra.mxu0 %v1520
        %1774 = vmatprep.subr.bf16.mxu0 %v1515
        %1775 = vmatpush1.bf16.msra.mxu0 %v1514
        %1776 = vmatprep.subr.bf16.mxu0 %v1509
        %1777 = vmatpush1.bf16.msra.mxu0 %v1508
        %1778 = vmatprep.subr.bf16.mxu0 %v1503
        %1779 = vmatpush1.bf16.msra.mxu0 %v1502
        %1780 = vmatprep.subr.bf16.mxu0 %v1497
        %1781 = vmatpush1.bf16.msra.mxu0 %v1496
        %1782 = vmatprep.subr.bf16.mxu0 %v1587
        %1783 = vmatpush2.bf16.msra.mxu0 %v1586
        %1784 = vmatprep.subr.bf16.mxu0 %v1581
        %1785 = vmatpush2.bf16.msra.mxu0 %v1580
        %1786 = vmatprep.subr.bf16.mxu0 %v1575
        %1787 = vmatpush2.bf16.msra.mxu0 %v1574
        %1788 = vmatprep.subr.bf16.mxu0 %v1569
        %1789 = vmatpush2.bf16.msra.mxu0 %v1568
        %1790 = vmatprep.subr.bf16.mxu0 %v1563
        %1791 = vmatpush2.bf16.msra.mxu0 %v1562
        %1792 = vmatprep.subr.bf16.mxu0 %v1557
        %1793 = vmatpush2.bf16.msra.mxu0 %v1556
        %1794 = vmatprep.subr.bf16.mxu0 %v1551
        %1795 = vmatpush2.bf16.msra.mxu0 %v1550
        %1796 = vmatprep.subr.bf16.mxu0 %v1545
        %1797 = vmatpush2.bf16.msra.mxu0 %v1544
        %1798 = vmatprep.mubr.bf16.mxu0 %v1201
        %1799 = vmatmul.mubr.bf16.gmra.mxu0 %v1200
        %v1800 = vpop.f32.mrf.mxu0
        %v1801 = vadd.f32 %v1186, %v1800
        %v1802 = vpop.f32.mrf.mxu0
        %v1803 = vadd.f32 %v1190, %v1802
        %v1804 = vpop.f32.mrf.mxu0
        %v1805 = vpop.f32.mrf.mxu0
        %1806 = vdwg.mxu0
        %v1807 = vpack.c.bf16 %v1719, %v1719
        %v1808 = vpack.c.bf16 %v1721, %v1721
        %v1809 = vpack.c.bf16 %v1760, %v1760
        %v1810 = vpack.c.bf16 %v1762, %v1762
        %v1811 = vpack.c.bf16 %v1801, %v1801
        %v1812 = vpack.c.bf16 %v1803, %v1803
        %v1814 = vlaneseq
        %v1815 = vshrl.u32 %v1814, 7
        %v1816 = vsub.s32 0, %v1815
        %v1817 = vrot.slane %v1068, %v1816
        %vm1819 = vcmask 523264
        %v1821 = vsel %vm1819, %v1807, 0
        %v1824 = vsel %vm1819, %v1809, 0
        %1826 = vmatprep.subr.bf16.mxu0 0
        %1827 = vmatpush1.bf16.xpose.msra.mxu0 0
        %1828 = vmatprep.subr.bf16.mxu0 0
        %1829 = vmatpush1.bf16.xpose.msra.mxu0 0
        %1830 = vmatprep.subr.bf16.mxu0 0
        %1831 = vmatpush1.bf16.xpose.msra.mxu0 0
        %1832 = vmatprep.subr.bf16.mxu0 0
        %1833 = vmatpush1.bf16.xpose.msra.mxu0 0
        %1834 = vmatprep.subr.bf16.mxu0 0
        %1835 = vmatpush1.bf16.xpose.msra.mxu0 0
        %1836 = vmatprep.subr.bf16.mxu0 0
        %1837 = vmatpush1.bf16.xpose.msra.mxu0 0
        %1838 = vmatprep.subr.bf16.mxu0 0
        %1839 = vmatpush1.bf16.xpose.msra.mxu0 0
        %1840 = vmatprep.subr.bf16.mxu0 0
        %1841 = vmatpush1.bf16.xpose.msra.mxu0 %v1824
        %1842 = vmatprep.subr.bf16.mxu0 0
        %1843 = vmatpush2.bf16.xpose.msra.mxu0 0
        %1844 = vmatprep.subr.bf16.mxu0 0
        %1845 = vmatpush2.bf16.xpose.msra.mxu0 0
        %1846 = vmatprep.subr.bf16.mxu0 0
        %1847 = vmatpush2.bf16.xpose.msra.mxu0 0
        %1848 = vmatprep.subr.bf16.mxu0 0
        %1849 = vmatpush2.bf16.xpose.msra.mxu0 0
        %1850 = vmatprep.subr.bf16.mxu0 0
        %1851 = vmatpush2.bf16.xpose.msra.mxu0 0
        %1852 = vmatprep.subr.bf16.mxu0 0
        %1853 = vmatpush2.bf16.xpose.msra.mxu0 0
        %1854 = vmatprep.subr.bf16.mxu0 0
        %1855 = vmatpush2.bf16.xpose.msra.mxu0 0
        %1856 = vmatprep.subr.bf16.mxu0 0
        %1857 = vmatpush2.bf16.xpose.msra.mxu0 0
        %1858 = vmatprep.mubr.bf16.mxu0 0
        %1859 = vmatmul.mubr.bf16.gmra.mxu0 %v1821
        %v1860 = vpop.f32.mrf.mxu0
        %v1861 = vadd.f32 %v1817, %v1860
        %v1862 = vpop.f32.mrf.mxu0
        %v1863 = vpop.f32.mrf.mxu0
        %v1864 = vpop.f32.mrf.mxu0
        %1865 = vdwg.mxu0
        %vm1866 = vcmask 64512
        %v1867 = vsel %vm1866, %v1861, -inf
        %1868 = vmax.xlane.f32.xlu0 %v1867
        %v1869 = vpop.xlane.xlu0 %1868
        %v1870 = vsub.f32 %v1861, %v1869
        %v1871 = vmul.f32 %v1870, 1.442695
        %v1872 = vpow.pop %v1871
        %v1873 = vsel %vm1866, %v1872, 0.0
        %1874 = vadd.xlane.f32.xlu0 %v1873
        %v1875 = vpop.xlane.xlu0 %1874
        %v1876 = vrcp.pop %v1875
        %v1877 = vmul.f32 %v1872, %v1876
        %v1878 = vpack.c.bf16 %v1877, %v1877
        %v1880 = vsel %vm1866, %v1878, 0
        %vm1882 = vcmask 1043456
        %v1884 = vsel %vm1882, %v1811, 0
        %1886 = vmatprep.subr.bf16.mxu0 0
        %1887 = vmatpush1.bf16.msra.mxu0 0
        %1888 = vmatprep.subr.bf16.mxu0 0
        %1889 = vmatpush1.bf16.msra.mxu0 0
        %1890 = vmatprep.subr.bf16.mxu0 0
        %1891 = vmatpush1.bf16.msra.mxu0 0
        %1892 = vmatprep.subr.bf16.mxu0 0
        %1893 = vmatpush1.bf16.msra.mxu0 0
        %1894 = vmatprep.subr.bf16.mxu0 0
        %1895 = vmatpush1.bf16.msra.mxu0 0
        %1896 = vmatprep.subr.bf16.mxu0 0
        %1897 = vmatpush1.bf16.msra.mxu0 0
        %1898 = vmatprep.subr.bf16.mxu0 0
        %1899 = vmatpush1.bf16.msra.mxu0 0
        %1900 = vmatprep.subr.bf16.mxu0 0
        %1901 = vmatpush1.bf16.msra.mxu0 %v1884
        %1902 = vmatprep.subr.bf16.mxu0 0
        %1903 = vmatpush2.bf16.msra.mxu0 0
        %1904 = vmatprep.subr.bf16.mxu0 0
        %1905 = vmatpush2.bf16.msra.mxu0 0
        %1906 = vmatprep.subr.bf16.mxu0 0
        %1907 = vmatpush2.bf16.msra.mxu0 0
        %1908 = vmatprep.subr.bf16.mxu0 0
        %1909 = vmatpush2.bf16.msra.mxu0 0
        %1910 = vmatprep.subr.bf16.mxu0 0
        %1911 = vmatpush2.bf16.msra.mxu0 0
        %1912 = vmatprep.subr.bf16.mxu0 0
        %1913 = vmatpush2.bf16.msra.mxu0 0
        %1914 = vmatprep.subr.bf16.mxu0 0
        %1915 = vmatpush2.bf16.msra.mxu0 0
        %1916 = vmatprep.subr.bf16.mxu0 0
        %1917 = vmatpush2.bf16.msra.mxu0 0
        %1918 = vmatprep.mubr.bf16.mxu0 0
        %1919 = vmatmul.mubr.bf16.gmra.mxu0 %v1880
        %v1920 = vpop.f32.mrf.mxu0
        %v1921 = vadd.f32 0.0, %v1920
        %v1922 = vpop.f32.mrf.mxu0
        %v1923 = vpop.f32.mrf.mxu0
        %v1924 = vpop.f32.mrf.mxu0
        %1925 = vdwg.mxu0
        %v1926 = vpack.c.bf16 %v1921, %v1921
        %1928 = vrot.lane.b32.xlu0 %v1807, 64
        %v1929 = vpop.permute.xlu0 %1928
        %1931 = vrot.lane.b32.xlu0 %v1809, 64
        %v1932 = vpop.permute.xlu0 %1931
        %v1934 = vsel %vm1819, %v1929, 0
        %v1937 = vsel %vm1819, %v1932, 0
        %1939 = vmatprep.subr.bf16.mxu0 0
        %1940 = vmatpush1.bf16.xpose.msra.mxu0 0
        %1941 = vmatprep.subr.bf16.mxu0 0
        %1942 = vmatpush1.bf16.xpose.msra.mxu0 0
        %1943 = vmatprep.subr.bf16.mxu0 0
        %1944 = vmatpush1.bf16.xpose.msra.mxu0 0
        %1945 = vmatprep.subr.bf16.mxu0 0
        %1946 = vmatpush1.bf16.xpose.msra.mxu0 0
        %1947 = vmatprep.subr.bf16.mxu0 0
        %1948 = vmatpush1.bf16.xpose.msra.mxu0 0
        %1949 = vmatprep.subr.bf16.mxu0 0
        %1950 = vmatpush1.bf16.xpose.msra.mxu0 0
        %1951 = vmatprep.subr.bf16.mxu0 0
        %1952 = vmatpush1.bf16.xpose.msra.mxu0 0
        %1953 = vmatprep.subr.bf16.mxu0 0
        %1954 = vmatpush1.bf16.xpose.msra.mxu0 %v1937
        %1955 = vmatprep.subr.bf16.mxu0 0
        %1956 = vmatpush2.bf16.xpose.msra.mxu0 0
        %1957 = vmatprep.subr.bf16.mxu0 0
        %1958 = vmatpush2.bf16.xpose.msra.mxu0 0
        %1959 = vmatprep.subr.bf16.mxu0 0
        %1960 = vmatpush2.bf16.xpose.msra.mxu0 0
        %1961 = vmatprep.subr.bf16.mxu0 0
        %1962 = vmatpush2.bf16.xpose.msra.mxu0 0
        %1963 = vmatprep.subr.bf16.mxu0 0
        %1964 = vmatpush2.bf16.xpose.msra.mxu0 0
        %1965 = vmatprep.subr.bf16.mxu0 0
        %1966 = vmatpush2.bf16.xpose.msra.mxu0 0
        %1967 = vmatprep.subr.bf16.mxu0 0
        %1968 = vmatpush2.bf16.xpose.msra.mxu0 0
        %1969 = vmatprep.subr.bf16.mxu0 0
        %1970 = vmatpush2.bf16.xpose.msra.mxu0 0
        %1971 = vmatprep.mubr.bf16.mxu0 0
        %1972 = vmatmul.mubr.bf16.gmra.mxu0 %v1934
        %v1973 = vpop.f32.mrf.mxu0
        %v1974 = vadd.f32 %v1817, %v1973
        %v1975 = vpop.f32.mrf.mxu0
        %v1976 = vpop.f32.mrf.mxu0
        %v1977 = vpop.f32.mrf.mxu0
        %1978 = vdwg.mxu0
        %v1979 = vsel %vm1866, %v1974, -inf
        %1980 = vmax.xlane.f32.xlu0 %v1979
        %v1981 = vpop.xlane.xlu0 %1980
        %v1982 = vsub.f32 %v1974, %v1981
        %v1983 = vmul.f32 %v1982, 1.442695
        %v1984 = vpow.pop %v1983
        %v1985 = vsel %vm1866, %v1984, 0.0
        %1986 = vadd.xlane.f32.xlu0 %v1985
        %v1987 = vpop.xlane.xlu0 %1986
        %v1988 = vrcp.pop %v1987
        %v1989 = vmul.f32 %v1984, %v1988
        %v1990 = vpack.c.bf16 %v1989, %v1989
        %1992 = vrot.lane.b32.xlu0 %v1811, 64
        %v1993 = vpop.permute.xlu0 %1992
        %v1995 = vsel %vm1866, %v1990, 0
        %v1998 = vsel %vm1882, %v1993, 0
        %2000 = vmatprep.subr.bf16.mxu0 0
        %2001 = vmatpush1.bf16.msra.mxu0 0
        %2002 = vmatprep.subr.bf16.mxu0 0
        %2003 = vmatpush1.bf16.msra.mxu0 0
        %2004 = vmatprep.subr.bf16.mxu0 0
        %2005 = vmatpush1.bf16.msra.mxu0 0
        %2006 = vmatprep.subr.bf16.mxu0 0
        %2007 = vmatpush1.bf16.msra.mxu0 0
        %2008 = vmatprep.subr.bf16.mxu0 0
        %2009 = vmatpush1.bf16.msra.mxu0 0
        %2010 = vmatprep.subr.bf16.mxu0 0
        %2011 = vmatpush1.bf16.msra.mxu0 0
        %2012 = vmatprep.subr.bf16.mxu0 0
        %2013 = vmatpush1.bf16.msra.mxu0 0
        %2014 = vmatprep.subr.bf16.mxu0 0
        %2015 = vmatpush1.bf16.msra.mxu0 %v1998
        %2016 = vmatprep.subr.bf16.mxu0 0
        %2017 = vmatpush2.bf16.msra.mxu0 0
        %2018 = vmatprep.subr.bf16.mxu0 0
        %2019 = vmatpush2.bf16.msra.mxu0 0
        %2020 = vmatprep.subr.bf16.mxu0 0
        %2021 = vmatpush2.bf16.msra.mxu0 0
        %2022 = vmatprep.subr.bf16.mxu0 0
        %2023 = vmatpush2.bf16.msra.mxu0 0
        %2024 = vmatprep.subr.bf16.mxu0 0
        %2025 = vmatpush2.bf16.msra.mxu0 0
        %2026 = vmatprep.subr.bf16.mxu0 0
        %2027 = vmatpush2.bf16.msra.mxu0 0
        %2028 = vmatprep.subr.bf16.mxu0 0
        %2029 = vmatpush2.bf16.msra.mxu0 0
        %2030 = vmatprep.subr.bf16.mxu0 0
        %2031 = vmatpush2.bf16.msra.mxu0 0
        %2032 = vmatprep.mubr.bf16.mxu0 0
        %2033 = vmatmul.mubr.bf16.gmra.mxu0 %v1995
        %v2034 = vpop.f32.mrf.mxu0
        %v2035 = vadd.f32 0.0, %v2034
        %v2036 = vpop.f32.mrf.mxu0
        %v2037 = vpop.f32.mrf.mxu0
        %v2038 = vpop.f32.mrf.mxu0
        %2039 = vdwg.mxu0
        %v2040 = vpack.c.bf16 %v2035, %v2035
        %v2042 = vsel %vm1819, %v1808, 0
        %v2045 = vsel %vm1819, %v1810, 0
        %2047 = vmatprep.subr.bf16.mxu0 0
        %2048 = vmatpush1.bf16.xpose.msra.mxu0 0
        %2049 = vmatprep.subr.bf16.mxu0 0
        %2050 = vmatpush1.bf16.xpose.msra.mxu0 0
        %2051 = vmatprep.subr.bf16.mxu0 0
        %2052 = vmatpush1.bf16.xpose.msra.mxu0 0
        %2053 = vmatprep.subr.bf16.mxu0 0
        %2054 = vmatpush1.bf16.xpose.msra.mxu0 0
        %2055 = vmatprep.subr.bf16.mxu0 0
        %2056 = vmatpush1.bf16.xpose.msra.mxu0 0
        %2057 = vmatprep.subr.bf16.mxu0 0
        %2058 = vmatpush1.bf16.xpose.msra.mxu0 0
        %2059 = vmatprep.subr.bf16.mxu0 0
        %2060 = vmatpush1.bf16.xpose.msra.mxu0 0
        %2061 = vmatprep.subr.bf16.mxu0 0
        %2062 = vmatpush1.bf16.xpose.msra.mxu0 %v2045
        %2063 = vmatprep.subr.bf16.mxu0 0
        %2064 = vmatpush2.bf16.xpose.msra.mxu0 0
        %2065 = vmatprep.subr.bf16.mxu0 0
        %2066 = vmatpush2.bf16.xpose.msra.mxu0 0
        %2067 = vmatprep.subr.bf16.mxu0 0
        %2068 = vmatpush2.bf16.xpose.msra.mxu0 0
        %2069 = vmatprep.subr.bf16.mxu0 0
        %2070 = vmatpush2.bf16.xpose.msra.mxu0 0
        %2071 = vmatprep.subr.bf16.mxu0 0
        %2072 = vmatpush2.bf16.xpose.msra.mxu0 0
        %2073 = vmatprep.subr.bf16.mxu0 0
        %2074 = vmatpush2.bf16.xpose.msra.mxu0 0
        %2075 = vmatprep.subr.bf16.mxu0 0
        %2076 = vmatpush2.bf16.xpose.msra.mxu0 0
        %2077 = vmatprep.subr.bf16.mxu0 0
        %2078 = vmatpush2.bf16.xpose.msra.mxu0 0
        %2079 = vmatprep.mubr.bf16.mxu0 0
        %2080 = vmatmul.mubr.bf16.gmra.mxu0 %v2042
        %v2081 = vpop.f32.mrf.mxu0
        %v2082 = vadd.f32 %v1817, %v2081
        %v2083 = vpop.f32.mrf.mxu0
        %v2084 = vpop.f32.mrf.mxu0
        %v2085 = vpop.f32.mrf.mxu0
        %2086 = vdwg.mxu0
        %v2087 = vsel %vm1866, %v2082, -inf
        %2088 = vmax.xlane.f32.xlu0 %v2087
        %v2089 = vpop.xlane.xlu0 %2088
        %v2090 = vsub.f32 %v2082, %v2089
        %v2091 = vmul.f32 %v2090, 1.442695
        %v2092 = vpow.pop %v2091
        %v2093 = vsel %vm1866, %v2092, 0.0
        %2094 = vadd.xlane.f32.xlu0 %v2093
        %v2095 = vpop.xlane.xlu0 %2094
        %v2096 = vrcp.pop %v2095
        %v2097 = vmul.f32 %v2092, %v2096
        %v2098 = vpack.c.bf16 %v2097, %v2097
        %v2100 = vsel %vm1866, %v2098, 0
        %v2103 = vsel %vm1882, %v1812, 0
        %2105 = vmatprep.subr.bf16.mxu0 0
        %2106 = vmatpush1.bf16.msra.mxu0 0
        %2107 = vmatprep.subr.bf16.mxu0 0
        %2108 = vmatpush1.bf16.msra.mxu0 0
        %2109 = vmatprep.subr.bf16.mxu0 0
        %2110 = vmatpush1.bf16.msra.mxu0 0
        %2111 = vmatprep.subr.bf16.mxu0 0
        %2112 = vmatpush1.bf16.msra.mxu0 0
        %2113 = vmatprep.subr.bf16.mxu0 0
        %2114 = vmatpush1.bf16.msra.mxu0 0
        %2115 = vmatprep.subr.bf16.mxu0 0
        %2116 = vmatpush1.bf16.msra.mxu0 0
        %2117 = vmatprep.subr.bf16.mxu0 0
        %2118 = vmatpush1.bf16.msra.mxu0 0
        %2119 = vmatprep.subr.bf16.mxu0 0
        %2120 = vmatpush1.bf16.msra.mxu0 %v2103
        %2121 = vmatprep.subr.bf16.mxu0 0
        %2122 = vmatpush2.bf16.msra.mxu0 0
        %2123 = vmatprep.subr.bf16.mxu0 0
        %2124 = vmatpush2.bf16.msra.mxu0 0
        %2125 = vmatprep.subr.bf16.mxu0 0
        %2126 = vmatpush2.bf16.msra.mxu0 0
        %2127 = vmatprep.subr.bf16.mxu0 0
        %2128 = vmatpush2.bf16.msra.mxu0 0
        %2129 = vmatprep.subr.bf16.mxu0 0
        %2130 = vmatpush2.bf16.msra.mxu0 0
        %2131 = vmatprep.subr.bf16.mxu0 0
        %2132 = vmatpush2.bf16.msra.mxu0 0
        %2133 = vmatprep.subr.bf16.mxu0 0
        %2134 = vmatpush2.bf16.msra.mxu0 0
        %2135 = vmatprep.subr.bf16.mxu0 0
        %2136 = vmatpush2.bf16.msra.mxu0 0
        %2137 = vmatprep.mubr.bf16.mxu0 0
        %2138 = vmatmul.mubr.bf16.gmra.mxu0 %v2100
        %v2139 = vpop.f32.mrf.mxu0
        %v2140 = vadd.f32 0.0, %v2139
        %v2141 = vpop.f32.mrf.mxu0
        %v2142 = vpop.f32.mrf.mxu0
        %v2143 = vpop.f32.mrf.mxu0
        %2144 = vdwg.mxu0
        %v2145 = vpack.c.bf16 %v2140, %v2140
        %2147 = vrot.lane.b32.xlu0 %v1808, 64
        %v2148 = vpop.permute.xlu0 %2147
        %2150 = vrot.lane.b32.xlu0 %v1810, 64
        %v2151 = vpop.permute.xlu0 %2150
        %v2153 = vsel %vm1819, %v2148, 0
        %v2156 = vsel %vm1819, %v2151, 0
        %2158 = vmatprep.subr.bf16.mxu0 0
        %2159 = vmatpush1.bf16.xpose.msra.mxu0 0
        %2160 = vmatprep.subr.bf16.mxu0 0
        %2161 = vmatpush1.bf16.xpose.msra.mxu0 0
        %2162 = vmatprep.subr.bf16.mxu0 0
        %2163 = vmatpush1.bf16.xpose.msra.mxu0 0
        %2164 = vmatprep.subr.bf16.mxu0 0
        %2165 = vmatpush1.bf16.xpose.msra.mxu0 0
        %2166 = vmatprep.subr.bf16.mxu0 0
        %2167 = vmatpush1.bf16.xpose.msra.mxu0 0
        %2168 = vmatprep.subr.bf16.mxu0 0
        %2169 = vmatpush1.bf16.xpose.msra.mxu0 0
        %2170 = vmatprep.subr.bf16.mxu0 0
        %2171 = vmatpush1.bf16.xpose.msra.mxu0 0
        %2172 = vmatprep.subr.bf16.mxu0 0
        %2173 = vmatpush1.bf16.xpose.msra.mxu0 %v2156
        %2174 = vmatprep.subr.bf16.mxu0 0
        %2175 = vmatpush2.bf16.xpose.msra.mxu0 0
        %2176 = vmatprep.subr.bf16.mxu0 0
        %2177 = vmatpush2.bf16.xpose.msra.mxu0 0
        %2178 = vmatprep.subr.bf16.mxu0 0
        %2179 = vmatpush2.bf16.xpose.msra.mxu0 0
        %2180 = vmatprep.subr.bf16.mxu0 0
        %2181 = vmatpush2.bf16.xpose.msra.mxu0 0
        %2182 = vmatprep.subr.bf16.mxu0 0
        %2183 = vmatpush2.bf16.xpose.msra.mxu0 0
        %2184 = vmatprep.subr.bf16.mxu0 0
        %2185 = vmatpush2.bf16.xpose.msra.mxu0 0
        %2186 = vmatprep.subr.bf16.mxu0 0
        %2187 = vmatpush2.bf16.xpose.msra.mxu0 0
        %2188 = vmatprep.subr.bf16.mxu0 0
        %2189 = vmatpush2.bf16.xpose.msra.mxu0 0
        %2190 = vmatprep.mubr.bf16.mxu0 0
        %2191 = vmatmul.mubr.bf16.gmra.mxu0 %v2153
        %v2192 = vpop.f32.mrf.mxu0
        %v2193 = vadd.f32 %v1817, %v2192
        %v2194 = vpop.f32.mrf.mxu0
        %v2195 = vpop.f32.mrf.mxu0
        %v2196 = vpop.f32.mrf.mxu0
        %2197 = vdwg.mxu0
        %v2198 = vsel %vm1866, %v2193, -inf
        %2199 = vmax.xlane.f32.xlu0 %v2198
        %v2200 = vpop.xlane.xlu0 %2199
        %v2201 = vsub.f32 %v2193, %v2200
        %v2202 = vmul.f32 %v2201, 1.442695
        %v2203 = vpow.pop %v2202
        %v2204 = vsel %vm1866, %v2203, 0.0
        %2205 = vadd.xlane.f32.xlu0 %v2204
        %v2206 = vpop.xlane.xlu0 %2205
        %v2207 = vrcp.pop %v2206
        %v2208 = vmul.f32 %v2203, %v2207
        %v2209 = vpack.c.bf16 %v2208, %v2208
        %2211 = vrot.lane.b32.xlu0 %v1812, 64
        %v2212 = vpop.permute.xlu0 %2211
        %v2214 = vsel %vm1866, %v2209, 0
        %v2217 = vsel %vm1882, %v2212, 0
        %2219 = vmatprep.subr.bf16.mxu0 0
        %2220 = vmatpush1.bf16.msra.mxu0 0
        %2221 = vmatprep.subr.bf16.mxu0 0
        %2222 = vmatpush1.bf16.msra.mxu0 0
        %2223 = vmatprep.subr.bf16.mxu0 0
        %2224 = vmatpush1.bf16.msra.mxu0 0
        %2225 = vmatprep.subr.bf16.mxu0 0
        %2226 = vmatpush1.bf16.msra.mxu0 0
        %2227 = vmatprep.subr.bf16.mxu0 0
        %2228 = vmatpush1.bf16.msra.mxu0 0
        %2229 = vmatprep.subr.bf16.mxu0 0
        %2230 = vmatpush1.bf16.msra.mxu0 0
        %2231 = vmatprep.subr.bf16.mxu0 0
        %2232 = vmatpush1.bf16.msra.mxu0 0
        %2233 = vmatprep.subr.bf16.mxu0 0
        %2234 = vmatpush1.bf16.msra.mxu0 %v2217
        %2235 = vmatprep.subr.bf16.mxu0 0
        %2236 = vmatpush2.bf16.msra.mxu0 0
        %2237 = vmatprep.subr.bf16.mxu0 0
        %2238 = vmatpush2.bf16.msra.mxu0 0
        %2239 = vmatprep.subr.bf16.mxu0 0
        %2240 = vmatpush2.bf16.msra.mxu0 0
        %2241 = vmatprep.subr.bf16.mxu0 0
        %2242 = vmatpush2.bf16.msra.mxu0 0
        %2243 = vmatprep.subr.bf16.mxu0 0
        %2244 = vmatpush2.bf16.msra.mxu0 0
        %2245 = vmatprep.subr.bf16.mxu0 0
        %2246 = vmatpush2.bf16.msra.mxu0 0
        %2247 = vmatprep.subr.bf16.mxu0 0
        %2248 = vmatpush2.bf16.msra.mxu0 0
        %2249 = vmatprep.subr.bf16.mxu0 0
        %2250 = vmatpush2.bf16.msra.mxu0 0
        %2251 = vmatprep.mubr.bf16.mxu0 0
        %2252 = vmatmul.mubr.bf16.gmra.mxu0 %v2214
        %v2253 = vpop.f32.mrf.mxu0
        %v2254 = vadd.f32 0.0, %v2253
        %v2255 = vpop.f32.mrf.mxu0
        %v2256 = vpop.f32.mrf.mxu0
        %v2257 = vpop.f32.mrf.mxu0
        %2258 = vdwg.mxu0
        %v2259 = vpack.c.bf16 %v2254, %v2254
        %2261 = vrot.lane.b32.xlu0 %v2040, 64
        %v2262 = vpop.permute.xlu0 %2261
        %2264 = vrot.lane.b32.xlu0 %v2259, 64
        %v2265 = vpop.permute.xlu0 %2264
        %v2268 = vsel %vm1819, %v1926, %v2262
        %v2272 = vsel %vm1819, %v2145, %v2265
        %v2274 = vld [vmem:[%s796] sm:$0xff]
        %v2275 = vld [vmem:[%s796 + $0x8] sm:$0xff]
        %v2276 = vld [vmem:[%s796 + $0x10] sm:$0xff]
        %v2277 = vld [vmem:[%s796 + $0x18] sm:$0xff]
        %v2278 = vld [vmem:[%s796 + $0x20] sm:$0xff]
        %v2279 = vld [vmem:[%s796 + $0x28] sm:$0xff]
        %v2280 = vld [vmem:[%s796 + $0x30] sm:$0xff]
        %v2281 = vld [vmem:[%s796 + $0x38] sm:$0xff]
        %v2282 = vld [vmem:[%s796 + $0x40] sm:$0xff]
        %v2283 = vld [vmem:[%s796 + $0x48] sm:$0xff]
        %v2284 = vld [vmem:[%s796 + $0x50] sm:$0xff]
        %v2285 = vld [vmem:[%s796 + $0x58] sm:$0xff]
        %v2286 = vld [vmem:[%s796 + $0x60] sm:$0xff]
        %v2287 = vld [vmem:[%s796 + $0x68] sm:$0xff]
        %v2288 = vld [vmem:[%s796 + $0x70] sm:$0xff]
        %v2289 = vld [vmem:[%s796 + $0x78] sm:$0xff]
        %v2290 = vld [vmem:[%s796 + $0x80] sm:$0xff]
        %v2291 = vld [vmem:[%s796 + $0x88] sm:$0xff]
        %v2292 = vld [vmem:[%s796 + $0x90] sm:$0xff]
        %v2293 = vld [vmem:[%s796 + $0x98] sm:$0xff]
        %v2294 = vld [vmem:[%s796 + $0xa0] sm:$0xff]
        %v2295 = vld [vmem:[%s796 + $0xa8] sm:$0xff]
        %v2296 = vld [vmem:[%s796 + $0xb0] sm:$0xff]
        %v2297 = vld [vmem:[%s796 + $0xb8] sm:$0xff]
        %v2298 = vld [vmem:[%s796 + $0xc0] sm:$0xff]
        %v2299 = vld [vmem:[%s796 + $0xc8] sm:$0xff]
        %v2300 = vld [vmem:[%s796 + $0xd0] sm:$0xff]
        %v2301 = vld [vmem:[%s796 + $0xd8] sm:$0xff]
        %v2302 = vld [vmem:[%s796 + $0xe0] sm:$0xff]
        %v2303 = vld [vmem:[%s796 + $0xe8] sm:$0xff]
        %v2304 = vld [vmem:[%s796 + $0xf0] sm:$0xff]
        %v2305 = vld [vmem:[%s796 + $0xf8] sm:$0xff]
        %v2306 = vld [vmem:[%s805] sm:$0x3]
        %v2308 = vlaneseq
        %v2309 = vshrl.u32 %v2308, 7
        %v2310 = vsub.s32 0, %v2309
        %v2311 = vrot.slane %v2306, %v2310
        %v2312 = vlaneseq
        %v2313 = vshrl.u32 %v2312, 7
        %v2314 = vsub.s32 1, %v2313
        %v2315 = vrot.slane %v2306, %v2314
        %v2350 = vunpack.c.l.b16 %v2274
        %v2351 = vunpack.c.h.b16 %v2274
        %v2352 = vunpack.c.l.b16 %v2275
        %v2353 = vunpack.c.h.b16 %v2275
        %v2354 = vunpack.c.l.b16 %v2276
        %v2355 = vunpack.c.h.b16 %v2276
        %v2356 = vunpack.c.l.b16 %v2277
        %v2357 = vunpack.c.h.b16 %v2277
        %v2358 = vunpack.c.l.b16 %v2278
        %v2359 = vunpack.c.h.b16 %v2278
        %v2360 = vunpack.c.l.b16 %v2279
        %v2361 = vunpack.c.h.b16 %v2279
        %v2362 = vunpack.c.l.b16 %v2280
        %v2363 = vunpack.c.h.b16 %v2280
        %v2364 = vunpack.c.l.b16 %v2281
        %v2365 = vunpack.c.h.b16 %v2281
        %v2366 = vunpack.c.l.b16 %v2282
        %v2367 = vunpack.c.h.b16 %v2282
        %v2368 = vunpack.c.l.b16 %v2283
        %v2369 = vunpack.c.h.b16 %v2283
        %v2370 = vunpack.c.l.b16 %v2284
        %v2371 = vunpack.c.h.b16 %v2284
        %v2372 = vunpack.c.l.b16 %v2285
        %v2373 = vunpack.c.h.b16 %v2285
        %v2374 = vunpack.c.l.b16 %v2286
        %v2375 = vunpack.c.h.b16 %v2286
        %v2376 = vunpack.c.l.b16 %v2287
        %v2377 = vunpack.c.h.b16 %v2287
        %v2378 = vunpack.c.l.b16 %v2288
        %v2379 = vunpack.c.h.b16 %v2288
        %v2380 = vunpack.c.l.b16 %v2289
        %v2381 = vunpack.c.h.b16 %v2289
        %v2382 = vunpack.c.l.b16 %v2290
        %v2383 = vunpack.c.h.b16 %v2290
        %v2384 = vunpack.c.l.b16 %v2291
        %v2385 = vunpack.c.h.b16 %v2291
        %v2386 = vunpack.c.l.b16 %v2292
        %v2387 = vunpack.c.h.b16 %v2292
        %v2388 = vunpack.c.l.b16 %v2293
        %v2389 = vunpack.c.h.b16 %v2293
        %v2390 = vunpack.c.l.b16 %v2294
        %v2391 = vunpack.c.h.b16 %v2294
        %v2392 = vunpack.c.l.b16 %v2295
        %v2393 = vunpack.c.h.b16 %v2295
        %v2394 = vunpack.c.l.b16 %v2296
        %v2395 = vunpack.c.h.b16 %v2296
        %v2396 = vunpack.c.l.b16 %v2297
        %v2397 = vunpack.c.h.b16 %v2297
        %v2398 = vunpack.c.l.b16 %v2298
        %v2399 = vunpack.c.h.b16 %v2298
        %v2400 = vunpack.c.l.b16 %v2299
        %v2401 = vunpack.c.h.b16 %v2299
        %v2402 = vunpack.c.l.b16 %v2300
        %v2403 = vunpack.c.h.b16 %v2300
        %v2404 = vunpack.c.l.b16 %v2301
        %v2405 = vunpack.c.h.b16 %v2301
        %v2406 = vunpack.c.l.b16 %v2302
        %v2407 = vunpack.c.h.b16 %v2302
        %v2408 = vunpack.c.l.b16 %v2303
        %v2409 = vunpack.c.h.b16 %v2303
        %v2410 = vunpack.c.l.b16 %v2304
        %v2411 = vunpack.c.h.b16 %v2304
        %v2412 = vunpack.c.l.b16 %v2305
        %v2413 = vunpack.c.h.b16 %v2305
        %v2414 = vpack.c.b16 %v2352, %v2350
        %v2415 = vpack.c.b16 %v2353, %v2351
        %v2416 = vpack.c.b16 %v2356, %v2354
        %v2417 = vpack.c.b16 %v2357, %v2355
        %v2418 = vpack.c.b16 %v2360, %v2358
        %v2419 = vpack.c.b16 %v2361, %v2359
        %v2420 = vpack.c.b16 %v2364, %v2362
        %v2421 = vpack.c.b16 %v2365, %v2363
        %v2422 = vpack.c.b16 %v2368, %v2366
        %v2423 = vpack.c.b16 %v2369, %v2367
        %v2424 = vpack.c.b16 %v2372, %v2370
        %v2425 = vpack.c.b16 %v2373, %v2371
        %v2426 = vpack.c.b16 %v2376, %v2374
        %v2427 = vpack.c.b16 %v2377, %v2375
        %v2428 = vpack.c.b16 %v2380, %v2378
        %v2429 = vpack.c.b16 %v2381, %v2379
        %v2430 = vpack.c.b16 %v2384, %v2382
        %v2431 = vpack.c.b16 %v2385, %v2383
        %v2432 = vpack.c.b16 %v2388, %v2386
        %v2433 = vpack.c.b16 %v2389, %v2387
        %v2434 = vpack.c.b16 %v2392, %v2390
        %v2435 = vpack.c.b16 %v2393, %v2391
        %v2436 = vpack.c.b16 %v2396, %v2394
        %v2437 = vpack.c.b16 %v2397, %v2395
        %v2438 = vpack.c.b16 %v2400, %v2398
        %v2439 = vpack.c.b16 %v2401, %v2399
        %v2440 = vpack.c.b16 %v2404, %v2402
        %v2441 = vpack.c.b16 %v2405, %v2403
        %v2442 = vpack.c.b16 %v2408, %v2406
        %v2443 = vpack.c.b16 %v2409, %v2407
        %v2444 = vpack.c.b16 %v2412, %v2410
        %v2445 = vpack.c.b16 %v2413, %v2411
        %2478 = vmatprep.subr.bf16.mxu0 %v2429
        %2479 = vmatpush1.bf16.msra.mxu0 %v2428
        %2480 = vmatprep.subr.bf16.mxu0 %v2427
        %2481 = vmatpush1.bf16.msra.mxu0 %v2426
        %2482 = vmatprep.subr.bf16.mxu0 %v2425
        %2483 = vmatpush1.bf16.msra.mxu0 %v2424
        %2484 = vmatprep.subr.bf16.mxu0 %v2423
        %2485 = vmatpush1.bf16.msra.mxu0 %v2422
        %2486 = vmatprep.subr.bf16.mxu0 %v2421
        %2487 = vmatpush1.bf16.msra.mxu0 %v2420
        %2488 = vmatprep.subr.bf16.mxu0 %v2419
        %2489 = vmatpush1.bf16.msra.mxu0 %v2418
        %2490 = vmatprep.subr.bf16.mxu0 %v2417
        %2491 = vmatpush1.bf16.msra.mxu0 %v2416
        %2492 = vmatprep.subr.bf16.mxu0 %v2415
        %2493 = vmatpush1.bf16.msra.mxu0 %v2414
        %2494 = vmatprep.subr.bf16.mxu0 %v2445
        %2495 = vmatpush2.bf16.msra.mxu0 %v2444
        %2496 = vmatprep.subr.bf16.mxu0 %v2443
        %2497 = vmatpush2.bf16.msra.mxu0 %v2442
        %2498 = vmatprep.subr.bf16.mxu0 %v2441
        %2499 = vmatpush2.bf16.msra.mxu0 %v2440
        %2500 = vmatprep.subr.bf16.mxu0 %v2439
        %2501 = vmatpush2.bf16.msra.mxu0 %v2438
        %2502 = vmatprep.subr.bf16.mxu0 %v2437
        %2503 = vmatpush2.bf16.msra.mxu0 %v2436
        %2504 = vmatprep.subr.bf16.mxu0 %v2435
        %2505 = vmatpush2.bf16.msra.mxu0 %v2434
        %2506 = vmatprep.subr.bf16.mxu0 %v2433
        %2507 = vmatpush2.bf16.msra.mxu0 %v2432
        %2508 = vmatprep.subr.bf16.mxu0 %v2431
        %2509 = vmatpush2.bf16.msra.mxu0 %v2430
        %2510 = vmatprep.mubr.bf16.mxu0 %v2272
        %2511 = vmatmul.mubr.bf16.gmra.mxu0 %v2268
        %v2512 = vpop.f32.mrf.mxu0
        %v2513 = vadd.f32 %v2311, %v2512
        %v2514 = vpop.f32.mrf.mxu0
        %v2515 = vadd.f32 %v2315, %v2514
        %v2516 = vpop.f32.mrf.mxu0
        %v2517 = vpop.f32.mrf.mxu0
        %2518 = vdwg.mxu0
        %v2519 = vunpack.c.l.bf16 %v1067
        %v2520 = vunpack.c.h.bf16 %v1067
        %v2521 = vadd.f32 %v2513, %v2519
        %v2522 = vadd.f32 %v2515, %v2520
        %v2523 = vld [vmem:[%s814] sm:$0x3]
        %v2524 = vld [vmem:[%s823] sm:$0x3]
        %v2525 = vadd.f32 %v2521, %v2522
        %2526 = vadd.xlane.f32.xlu0 %v2525
        %v2527 = vpop.xlane.xlu0 %2526
        %v2528 = vrcp.pop 256.0
        %v2529 = vmul.f32 %v2527, %v2528
        %v2530 = vsub.f32 %v2521, %v2529
        %v2531 = vsub.f32 %v2522, %v2529
        %v2532 = vmul.f32 %v2530, %v2530
        %v2533 = vmul.f32 %v2531, %v2531
        %v2534 = vadd.f32 %v2532, %v2533
        %2535 = vadd.xlane.f32.xlu0 %v2534
        %v2536 = vpop.xlane.xlu0 %2535
        %v2537 = vmul.f32 %v2536, %v2528
        %v2538 = vadd.f32 %v2537, 1e-12
        %v2539 = vrsqrt.pop %v2538
        %v2540 = vmul.f32 %v2530, %v2539
        %v2541 = vmul.f32 %v2531, %v2539
        %v2543 = vlaneseq
        %v2544 = vshrl.u32 %v2543, 7
        %v2545 = vsub.s32 0, %v2544
        %v2546 = vrot.slane %v2523, %v2545
        %v2547 = vlaneseq
        %v2548 = vshrl.u32 %v2547, 7
        %v2549 = vsub.s32 1, %v2548
        %v2550 = vrot.slane %v2523, %v2549
        %v2553 = vmul.f32 %v2540, %v2546
        %v2554 = vmul.f32 %v2541, %v2550
        %v2556 = vlaneseq
        %v2557 = vshrl.u32 %v2556, 7
        %v2558 = vsub.s32 0, %v2557
        %v2559 = vrot.slane %v2524, %v2558
        %v2560 = vlaneseq
        %v2561 = vshrl.u32 %v2560, 7
        %v2562 = vsub.s32 1, %v2561
        %v2563 = vrot.slane %v2524, %v2562
        %v2566 = vadd.f32 %v2553, %v2559
        %v2567 = vadd.f32 %v2554, %v2563
        %v2568 = vpack.c.bf16 %v2566, %v2566
        %v2569 = vpack.c.bf16 %v2567, %v2567
        %v2570 = vld [vmem:[%s832] sm:$0xff]
        %v2571 = vld [vmem:[%s832 + $0x20] sm:$0xff]
        %v2572 = vld [vmem:[%s832 + $0x40] sm:$0xff]
        %v2573 = vld [vmem:[%s832 + $0x60] sm:$0xff]
        %v2574 = vld [vmem:[%s832 + $0x80] sm:$0xff]
        %v2575 = vld [vmem:[%s832 + $0xa0] sm:$0xff]
        %v2576 = vld [vmem:[%s832 + $0xc0] sm:$0xff]
        %v2577 = vld [vmem:[%s832 + $0xe0] sm:$0xff]
        %v2578 = vld [vmem:[%s832 + $0x100] sm:$0xff]
        %v2579 = vld [vmem:[%s832 + $0x120] sm:$0xff]
        %v2580 = vld [vmem:[%s832 + $0x140] sm:$0xff]
        %v2581 = vld [vmem:[%s832 + $0x160] sm:$0xff]
        %v2582 = vld [vmem:[%s832 + $0x180] sm:$0xff]
        %v2583 = vld [vmem:[%s832 + $0x1a0] sm:$0xff]
        %v2584 = vld [vmem:[%s832 + $0x1c0] sm:$0xff]
        %v2585 = vld [vmem:[%s832 + $0x1e0] sm:$0xff]
        %v2586 = vld [vmem:[%s832 + $0x200] sm:$0xff]
        %v2587 = vld [vmem:[%s832 + $0x220] sm:$0xff]
        %v2588 = vld [vmem:[%s832 + $0x240] sm:$0xff]
        %v2589 = vld [vmem:[%s832 + $0x260] sm:$0xff]
        %v2590 = vld [vmem:[%s832 + $0x280] sm:$0xff]
        %v2591 = vld [vmem:[%s832 + $0x2a0] sm:$0xff]
        %v2592 = vld [vmem:[%s832 + $0x2c0] sm:$0xff]
        %v2593 = vld [vmem:[%s832 + $0x2e0] sm:$0xff]
        %v2594 = vld [vmem:[%s832 + $0x300] sm:$0xff]
        %v2595 = vld [vmem:[%s832 + $0x320] sm:$0xff]
        %v2596 = vld [vmem:[%s832 + $0x340] sm:$0xff]
        %v2597 = vld [vmem:[%s832 + $0x360] sm:$0xff]
        %v2598 = vld [vmem:[%s832 + $0x380] sm:$0xff]
        %v2599 = vld [vmem:[%s832 + $0x3a0] sm:$0xff]
        %v2600 = vld [vmem:[%s832 + $0x3c0] sm:$0xff]
        %v2601 = vld [vmem:[%s832 + $0x3e0] sm:$0xff]
        %v2602 = vld [vmem:[%s841] sm:$0x3]
        %v2604 = vlaneseq
        %v2605 = vshrl.u32 %v2604, 7
        %v2606 = vsub.s32 0, %v2605
        %v2607 = vrot.slane %v2602, %v2606
        %v2608 = vlaneseq
        %v2609 = vshrl.u32 %v2608, 7
        %v2610 = vsub.s32 1, %v2609
        %v2611 = vrot.slane %v2602, %v2610
        %v2646 = vunpack.c.l.b16 %v2570
        %v2647 = vunpack.c.h.b16 %v2570
        %v2648 = vunpack.c.l.b16 %v2571
        %v2649 = vunpack.c.h.b16 %v2571
        %v2650 = vunpack.c.l.b16 %v2572
        %v2651 = vunpack.c.h.b16 %v2572
        %v2652 = vunpack.c.l.b16 %v2573
        %v2653 = vunpack.c.h.b16 %v2573
        %v2654 = vunpack.c.l.b16 %v2574
        %v2655 = vunpack.c.h.b16 %v2574
        %v2656 = vunpack.c.l.b16 %v2575
        %v2657 = vunpack.c.h.b16 %v2575
        %v2658 = vunpack.c.l.b16 %v2576
        %v2659 = vunpack.c.h.b16 %v2576
        %v2660 = vunpack.c.l.b16 %v2577
        %v2661 = vunpack.c.h.b16 %v2577
        %v2662 = vunpack.c.l.b16 %v2578
        %v2663 = vunpack.c.h.b16 %v2578
        %v2664 = vunpack.c.l.b16 %v2579
        %v2665 = vunpack.c.h.b16 %v2579
        %v2666 = vunpack.c.l.b16 %v2580
        %v2667 = vunpack.c.h.b16 %v2580
        %v2668 = vunpack.c.l.b16 %v2581
        %v2669 = vunpack.c.h.b16 %v2581
        %v2670 = vunpack.c.l.b16 %v2582
        %v2671 = vunpack.c.h.b16 %v2582
        %v2672 = vunpack.c.l.b16 %v2583
        %v2673 = vunpack.c.h.b16 %v2583
        %v2674 = vunpack.c.l.b16 %v2584
        %v2675 = vunpack.c.h.b16 %v2584
        %v2676 = vunpack.c.l.b16 %v2585
        %v2677 = vunpack.c.h.b16 %v2585
        %v2678 = vunpack.c.l.b16 %v2586
        %v2679 = vunpack.c.h.b16 %v2586
        %v2680 = vunpack.c.l.b16 %v2587
        %v2681 = vunpack.c.h.b16 %v2587
        %v2682 = vunpack.c.l.b16 %v2588
        %v2683 = vunpack.c.h.b16 %v2588
        %v2684 = vunpack.c.l.b16 %v2589
        %v2685 = vunpack.c.h.b16 %v2589
        %v2686 = vunpack.c.l.b16 %v2590
        %v2687 = vunpack.c.h.b16 %v2590
        %v2688 = vunpack.c.l.b16 %v2591
        %v2689 = vunpack.c.h.b16 %v2591
        %v2690 = vunpack.c.l.b16 %v2592
        %v2691 = vunpack.c.h.b16 %v2592
        %v2692 = vunpack.c.l.b16 %v2593
        %v2693 = vunpack.c.h.b16 %v2593
        %v2694 = vunpack.c.l.b16 %v2594
        %v2695 = vunpack.c.h.b16 %v2594
        %v2696 = vunpack.c.l.b16 %v2595
        %v2697 = vunpack.c.h.b16 %v2595
        %v2698 = vunpack.c.l.b16 %v2596
        %v2699 = vunpack.c.h.b16 %v2596
        %v2700 = vunpack.c.l.b16 %v2597
        %v2701 = vunpack.c.h.b16 %v2597
        %v2702 = vunpack.c.l.b16 %v2598
        %v2703 = vunpack.c.h.b16 %v2598
        %v2704 = vunpack.c.l.b16 %v2599
        %v2705 = vunpack.c.h.b16 %v2599
        %v2706 = vunpack.c.l.b16 %v2600
        %v2707 = vunpack.c.h.b16 %v2600
        %v2708 = vunpack.c.l.b16 %v2601
        %v2709 = vunpack.c.h.b16 %v2601
        %v2710 = vpack.c.b16 %v2648, %v2646
        %v2711 = vpack.c.b16 %v2649, %v2647
        %v2712 = vpack.c.b16 %v2652, %v2650
        %v2713 = vpack.c.b16 %v2653, %v2651
        %v2714 = vpack.c.b16 %v2656, %v2654
        %v2715 = vpack.c.b16 %v2657, %v2655
        %v2716 = vpack.c.b16 %v2660, %v2658
        %v2717 = vpack.c.b16 %v2661, %v2659
        %v2718 = vpack.c.b16 %v2664, %v2662
        %v2719 = vpack.c.b16 %v2665, %v2663
        %v2720 = vpack.c.b16 %v2668, %v2666
        %v2721 = vpack.c.b16 %v2669, %v2667
        %v2722 = vpack.c.b16 %v2672, %v2670
        %v2723 = vpack.c.b16 %v2673, %v2671
        %v2724 = vpack.c.b16 %v2676, %v2674
        %v2725 = vpack.c.b16 %v2677, %v2675
        %v2726 = vpack.c.b16 %v2680, %v2678
        %v2727 = vpack.c.b16 %v2681, %v2679
        %v2728 = vpack.c.b16 %v2684, %v2682
        %v2729 = vpack.c.b16 %v2685, %v2683
        %v2730 = vpack.c.b16 %v2688, %v2686
        %v2731 = vpack.c.b16 %v2689, %v2687
        %v2732 = vpack.c.b16 %v2692, %v2690
        %v2733 = vpack.c.b16 %v2693, %v2691
        %v2734 = vpack.c.b16 %v2696, %v2694
        %v2735 = vpack.c.b16 %v2697, %v2695
        %v2736 = vpack.c.b16 %v2700, %v2698
        %v2737 = vpack.c.b16 %v2701, %v2699
        %v2738 = vpack.c.b16 %v2704, %v2702
        %v2739 = vpack.c.b16 %v2705, %v2703
        %v2740 = vpack.c.b16 %v2708, %v2706
        %v2741 = vpack.c.b16 %v2709, %v2707
        %2774 = vmatprep.subr.bf16.mxu0 %v2725
        %2775 = vmatpush1.bf16.msra.mxu0 %v2724
        %2776 = vmatprep.subr.bf16.mxu0 %v2723
        %2777 = vmatpush1.bf16.msra.mxu0 %v2722
        %2778 = vmatprep.subr.bf16.mxu0 %v2721
        %2779 = vmatpush1.bf16.msra.mxu0 %v2720
        %2780 = vmatprep.subr.bf16.mxu0 %v2719
        %2781 = vmatpush1.bf16.msra.mxu0 %v2718
        %2782 = vmatprep.subr.bf16.mxu0 %v2717
        %2783 = vmatpush1.bf16.msra.mxu0 %v2716
        %2784 = vmatprep.subr.bf16.mxu0 %v2715
        %2785 = vmatpush1.bf16.msra.mxu0 %v2714
        %2786 = vmatprep.subr.bf16.mxu0 %v2713
        %2787 = vmatpush1.bf16.msra.mxu0 %v2712
        %2788 = vmatprep.subr.bf16.mxu0 %v2711
        %2789 = vmatpush1.bf16.msra.mxu0 %v2710
        %2790 = vmatprep.subr.bf16.mxu0 %v2741
        %2791 = vmatpush2.bf16.msra.mxu0 %v2740
        %2792 = vmatprep.subr.bf16.mxu0 %v2739
        %2793 = vmatpush2.bf16.msra.mxu0 %v2738
        %2794 = vmatprep.subr.bf16.mxu0 %v2737
        %2795 = vmatpush2.bf16.msra.mxu0 %v2736
        %2796 = vmatprep.subr.bf16.mxu0 %v2735
        %2797 = vmatpush2.bf16.msra.mxu0 %v2734
        %2798 = vmatprep.subr.bf16.mxu0 %v2733
        %2799 = vmatpush2.bf16.msra.mxu0 %v2732
        %2800 = vmatprep.subr.bf16.mxu0 %v2731
        %2801 = vmatpush2.bf16.msra.mxu0 %v2730
        %2802 = vmatprep.subr.bf16.mxu0 %v2729
        %2803 = vmatpush2.bf16.msra.mxu0 %v2728
        %2804 = vmatprep.subr.bf16.mxu0 %v2727
        %2805 = vmatpush2.bf16.msra.mxu0 %v2726
        %2806 = vmatprep.mubr.bf16.mxu0 %v2569
        %2807 = vmatmul.mubr.bf16.gmra.mxu0 %v2568
        %v2808 = vpop.f32.mrf.mxu0
        %v2809 = vadd.f32 %v2607, %v2808
        %v2810 = vpop.f32.mrf.mxu0
        %v2811 = vadd.f32 %v2611, %v2810
        %v2812 = vpop.f32.mrf.mxu0
        %v2813 = vpop.f32.mrf.mxu0
        %2814 = vdwg.mxu0
        %v2815 = vpack.c.bf16 %v2809, %v2809
        %v2816 = vpack.c.bf16 %v2811, %v2811
        %v2817 = vmul.bf16 %v2815, 1056980736
        %v2818 = vmul.bf16 %v2816, 1056980736
        %v2819 = vmul.bf16 %v2815, 1027030327
        %v2820 = vmul.bf16 %v2816, 1027030327
        %v2821 = vmul.bf16 %v2819, %v2815
        %v2822 = vmul.bf16 %v2820, %v2816
        %v2823 = vmul.bf16 %v2821, %v2815
        %v2824 = vmul.bf16 %v2822, %v2816
        %v2825 = vadd.bf16 %v2815, %v2823
        %v2826 = vadd.bf16 %v2816, %v2824
        %v2827 = vmul.bf16 %v2825, 1061961548
        %v2828 = vmul.bf16 %v2826, 1061961548
        %v2829 = vtanh.bf16.pop %v2827
        %v2830 = vtanh.bf16.pop %v2828
        %v2831 = vadd.bf16 %v2829, 1065369472
        %v2832 = vadd.bf16 %v2830, 1065369472
        %v2833 = vmul.bf16 %v2817, %v2831
        %v2834 = vmul.bf16 %v2818, %v2832
        %v2835 = vld [vmem:[%s850] sm:$0xff]
        %v2836 = vld [vmem:[%s850 + $0x8] sm:$0xff]
        %v2837 = vld [vmem:[%s850 + $0x10] sm:$0xff]
        %v2838 = vld [vmem:[%s850 + $0x18] sm:$0xff]
        %v2839 = vld [vmem:[%s850 + $0x20] sm:$0xff]
        %v2840 = vld [vmem:[%s850 + $0x28] sm:$0xff]
        %v2841 = vld [vmem:[%s850 + $0x30] sm:$0xff]
        %v2842 = vld [vmem:[%s850 + $0x38] sm:$0xff]
        %v2843 = vld [vmem:[%s850 + $0x40] sm:$0xff]
        %v2844 = vld [vmem:[%s850 + $0x48] sm:$0xff]
        %v2845 = vld [vmem:[%s850 + $0x50] sm:$0xff]
        %v2846 = vld [vmem:[%s850 + $0x58] sm:$0xff]
        %v2847 = vld [vmem:[%s850 + $0x60] sm:$0xff]
        %v2848 = vld [vmem:[%s850 + $0x68] sm:$0xff]
        %v2849 = vld [vmem:[%s850 + $0x70] sm:$0xff]
        %v2850 = vld [vmem:[%s850 + $0x78] sm:$0xff]
        %v2851 = vld [vmem:[%s850 + $0x80] sm:$0xff]
        %v2852 = vld [vmem:[%s850 + $0x88] sm:$0xff]
        %v2853 = vld [vmem:[%s850 + $0x90] sm:$0xff]
        %v2854 = vld [vmem:[%s850 + $0x98] sm:$0xff]
        %v2855 = vld [vmem:[%s850 + $0xa0] sm:$0xff]
        %v2856 = vld [vmem:[%s850 + $0xa8] sm:$0xff]
        %v2857 = vld [vmem:[%s850 + $0xb0] sm:$0xff]
        %v2858 = vld [vmem:[%s850 + $0xb8] sm:$0xff]
        %v2859 = vld [vmem:[%s850 + $0xc0] sm:$0xff]
        %v2860 = vld [vmem:[%s850 + $0xc8] sm:$0xff]
        %v2861 = vld [vmem:[%s850 + $0xd0] sm:$0xff]
        %v2862 = vld [vmem:[%s850 + $0xd8] sm:$0xff]
        %v2863 = vld [vmem:[%s850 + $0xe0] sm:$0xff]
        %v2864 = vld [vmem:[%s850 + $0xe8] sm:$0xff]
        %v2865 = vld [vmem:[%s850 + $0xf0] sm:$0xff]
        %v2866 = vld [vmem:[%s850 + $0xf8] sm:$0xff]
        %v2867 = vld [vmem:[%s832 + $0x8] sm:$0xff]
        %v2868 = vld [vmem:[%s832 + $0x28] sm:$0xff]
        %v2869 = vld [vmem:[%s832 + $0x48] sm:$0xff]
        %v2870 = vld [vmem:[%s832 + $0x68] sm:$0xff]
        %v2871 = vld [vmem:[%s832 + $0x88] sm:$0xff]
        %v2872 = vld [vmem:[%s832 + $0xa8] sm:$0xff]
        %v2873 = vld [vmem:[%s832 + $0xc8] sm:$0xff]
        %v2874 = vld [vmem:[%s832 + $0xe8] sm:$0xff]
        %v2875 = vld [vmem:[%s832 + $0x108] sm:$0xff]
        %v2876 = vld [vmem:[%s832 + $0x128] sm:$0xff]
        %v2877 = vld [vmem:[%s832 + $0x148] sm:$0xff]
        %v2878 = vld [vmem:[%s832 + $0x168] sm:$0xff]
        %v2879 = vld [vmem:[%s832 + $0x188] sm:$0xff]
        %v2880 = vld [vmem:[%s832 + $0x1a8] sm:$0xff]
        %v2881 = vld [vmem:[%s832 + $0x1c8] sm:$0xff]
        %v2882 = vld [vmem:[%s832 + $0x1e8] sm:$0xff]
        %v2883 = vld [vmem:[%s832 + $0x208] sm:$0xff]
        %v2884 = vld [vmem:[%s832 + $0x228] sm:$0xff]
        %v2885 = vld [vmem:[%s832 + $0x248] sm:$0xff]
        %v2886 = vld [vmem:[%s832 + $0x268] sm:$0xff]
        %v2887 = vld [vmem:[%s832 + $0x288] sm:$0xff]
        %v2888 = vld [vmem:[%s832 + $0x2a8] sm:$0xff]
        %v2889 = vld [vmem:[%s832 + $0x2c8] sm:$0xff]
        %v2890 = vld [vmem:[%s832 + $0x2e8] sm:$0xff]
        %v2891 = vld [vmem:[%s832 + $0x308] sm:$0xff]
        %v2892 = vld [vmem:[%s832 + $0x328] sm:$0xff]
        %v2893 = vld [vmem:[%s832 + $0x348] sm:$0xff]
        %v2894 = vld [vmem:[%s832 + $0x368] sm:$0xff]
        %v2895 = vld [vmem:[%s832 + $0x388] sm:$0xff]
        %v2896 = vld [vmem:[%s832 + $0x3a8] sm:$0xff]
        %v2897 = vld [vmem:[%s832 + $0x3c8] sm:$0xff]
        %v2898 = vld [vmem:[%s832 + $0x3e8] sm:$0xff]
        %v2899 = vld [vmem:[%s841 + $0x2] sm:$0x3]
        %v2901 = vlaneseq
        %v2902 = vshrl.u32 %v2901, 7
        %v2903 = vsub.s32 0, %v2902
        %v2904 = vrot.slane %v2899, %v2903
        %v2905 = vlaneseq
        %v2906 = vshrl.u32 %v2905, 7
        %v2907 = vsub.s32 1, %v2906
        %v2908 = vrot.slane %v2899, %v2907
        %v2943 = vunpack.c.l.b16 %v2867
        %v2944 = vunpack.c.h.b16 %v2867
        %v2945 = vunpack.c.l.b16 %v2868
        %v2946 = vunpack.c.h.b16 %v2868
        %v2947 = vunpack.c.l.b16 %v2869
        %v2948 = vunpack.c.h.b16 %v2869
        %v2949 = vunpack.c.l.b16 %v2870
        %v2950 = vunpack.c.h.b16 %v2870
        %v2951 = vunpack.c.l.b16 %v2871
        %v2952 = vunpack.c.h.b16 %v2871
        %v2953 = vunpack.c.l.b16 %v2872
        %v2954 = vunpack.c.h.b16 %v2872
        %v2955 = vunpack.c.l.b16 %v2873
        %v2956 = vunpack.c.h.b16 %v2873
        %v2957 = vunpack.c.l.b16 %v2874
        %v2958 = vunpack.c.h.b16 %v2874
        %v2959 = vunpack.c.l.b16 %v2875
        %v2960 = vunpack.c.h.b16 %v2875
        %v2961 = vunpack.c.l.b16 %v2876
        %v2962 = vunpack.c.h.b16 %v2876
        %v2963 = vunpack.c.l.b16 %v2877
        %v2964 = vunpack.c.h.b16 %v2877
        %v2965 = vunpack.c.l.b16 %v2878
        %v2966 = vunpack.c.h.b16 %v2878
        %v2967 = vunpack.c.l.b16 %v2879
        %v2968 = vunpack.c.h.b16 %v2879
        %v2969 = vunpack.c.l.b16 %v2880
        %v2970 = vunpack.c.h.b16 %v2880
        %v2971 = vunpack.c.l.b16 %v2881
        %v2972 = vunpack.c.h.b16 %v2881
        %v2973 = vunpack.c.l.b16 %v2882
        %v2974 = vunpack.c.h.b16 %v2882
        %v2975 = vunpack.c.l.b16 %v2883
        %v2976 = vunpack.c.h.b16 %v2883
        %v2977 = vunpack.c.l.b16 %v2884
        %v2978 = vunpack.c.h.b16 %v2884
        %v2979 = vunpack.c.l.b16 %v2885
        %v2980 = vunpack.c.h.b16 %v2885
        %v2981 = vunpack.c.l.b16 %v2886
        %v2982 = vunpack.c.h.b16 %v2886
        %v2983 = vunpack.c.l.b16 %v2887
        %v2984 = vunpack.c.h.b16 %v2887
        %v2985 = vunpack.c.l.b16 %v2888
        %v2986 = vunpack.c.h.b16 %v2888
        %v2987 = vunpack.c.l.b16 %v2889
        %v2988 = vunpack.c.h.b16 %v2889
        %v2989 = vunpack.c.l.b16 %v2890
        %v2990 = vunpack.c.h.b16 %v2890
        %v2991 = vunpack.c.l.b16 %v2891
        %v2992 = vunpack.c.h.b16 %v2891
        %v2993 = vunpack.c.l.b16 %v2892
        %v2994 = vunpack.c.h.b16 %v2892
        %v2995 = vunpack.c.l.b16 %v2893
        %v2996 = vunpack.c.h.b16 %v2893
        %v2997 = vunpack.c.l.b16 %v2894
        %v2998 = vunpack.c.h.b16 %v2894
        %v2999 = vunpack.c.l.b16 %v2895
        %v3000 = vunpack.c.h.b16 %v2895
        %v3001 = vunpack.c.l.b16 %v2896
        %v3002 = vunpack.c.h.b16 %v2896
        %v3003 = vunpack.c.l.b16 %v2897
        %v3004 = vunpack.c.h.b16 %v2897
        %v3005 = vunpack.c.l.b16 %v2898
        %v3006 = vunpack.c.h.b16 %v2898
        %v3007 = vpack.c.b16 %v2945, %v2943
        %v3008 = vpack.c.b16 %v2946, %v2944
        %v3009 = vpack.c.b16 %v2949, %v2947
        %v3010 = vpack.c.b16 %v2950, %v2948
        %v3011 = vpack.c.b16 %v2953, %v2951
        %v3012 = vpack.c.b16 %v2954, %v2952
        %v3013 = vpack.c.b16 %v2957, %v2955
        %v3014 = vpack.c.b16 %v2958, %v2956
        %v3015 = vpack.c.b16 %v2961, %v2959
        %v3016 = vpack.c.b16 %v2962, %v2960
        %v3017 = vpack.c.b16 %v2965, %v2963
        %v3018 = vpack.c.b16 %v2966, %v2964
        %v3019 = vpack.c.b16 %v2969, %v2967
        %v3020 = vpack.c.b16 %v2970, %v2968
        %v3021 = vpack.c.b16 %v2973, %v2971
        %v3022 = vpack.c.b16 %v2974, %v2972
        %v3023 = vpack.c.b16 %v2977, %v2975
        %v3024 = vpack.c.b16 %v2978, %v2976
        %v3025 = vpack.c.b16 %v2981, %v2979
        %v3026 = vpack.c.b16 %v2982, %v2980
        %v3027 = vpack.c.b16 %v2985, %v2983
        %v3028 = vpack.c.b16 %v2986, %v2984
        %v3029 = vpack.c.b16 %v2989, %v2987
        %v3030 = vpack.c.b16 %v2990, %v2988
        %v3031 = vpack.c.b16 %v2993, %v2991
        %v3032 = vpack.c.b16 %v2994, %v2992
        %v3033 = vpack.c.b16 %v2997, %v2995
        %v3034 = vpack.c.b16 %v2998, %v2996
        %v3035 = vpack.c.b16 %v3001, %v2999
        %v3036 = vpack.c.b16 %v3002, %v3000
        %v3037 = vpack.c.b16 %v3005, %v3003
        %v3038 = vpack.c.b16 %v3006, %v3004
        %3071 = vmatprep.subr.bf16.mxu0 %v3022
        %3072 = vmatpush1.bf16.msra.mxu0 %v3021
        %3073 = vmatprep.subr.bf16.mxu0 %v3020
        %3074 = vmatpush1.bf16.msra.mxu0 %v3019
        %3075 = vmatprep.subr.bf16.mxu0 %v3018
        %3076 = vmatpush1.bf16.msra.mxu0 %v3017
        %3077 = vmatprep.subr.bf16.mxu0 %v3016
        %3078 = vmatpush1.bf16.msra.mxu0 %v3015
        %3079 = vmatprep.subr.bf16.mxu0 %v3014
        %3080 = vmatpush1.bf16.msra.mxu0 %v3013
        %3081 = vmatprep.subr.bf16.mxu0 %v3012
        %3082 = vmatpush1.bf16.msra.mxu0 %v3011
        %3083 = vmatprep.subr.bf16.mxu0 %v3010
        %3084 = vmatpush1.bf16.msra.mxu0 %v3009
        %3085 = vmatprep.subr.bf16.mxu0 %v3008
        %3086 = vmatpush1.bf16.msra.mxu0 %v3007
        %3087 = vmatprep.subr.bf16.mxu0 %v3038
        %3088 = vmatpush2.bf16.msra.mxu0 %v3037
        %3089 = vmatprep.subr.bf16.mxu0 %v3036
        %3090 = vmatpush2.bf16.msra.mxu0 %v3035
        %3091 = vmatprep.subr.bf16.mxu0 %v3034
        %3092 = vmatpush2.bf16.msra.mxu0 %v3033
        %3093 = vmatprep.subr.bf16.mxu0 %v3032
        %3094 = vmatpush2.bf16.msra.mxu0 %v3031
        %3095 = vmatprep.subr.bf16.mxu0 %v3030
        %3096 = vmatpush2.bf16.msra.mxu0 %v3029
        %3097 = vmatprep.subr.bf16.mxu0 %v3028
        %3098 = vmatpush2.bf16.msra.mxu0 %v3027
        %3099 = vmatprep.subr.bf16.mxu0 %v3026
        %3100 = vmatpush2.bf16.msra.mxu0 %v3025
        %3101 = vmatprep.subr.bf16.mxu0 %v3024
        %3102 = vmatpush2.bf16.msra.mxu0 %v3023
        %3103 = vmatprep.mubr.bf16.mxu0 %v2569
        %3104 = vmatmul.mubr.bf16.gmra.mxu0 %v2568
        %v3105 = vpop.f32.mrf.mxu0
        %v3106 = vadd.f32 %v2904, %v3105
        %v3107 = vpop.f32.mrf.mxu0
        %v3108 = vadd.f32 %v2908, %v3107
        %v3109 = vpop.f32.mrf.mxu0
        %v3110 = vpop.f32.mrf.mxu0
        %3111 = vdwg.mxu0
        %v3112 = vpack.c.bf16 %v3106, %v3106
        %v3113 = vpack.c.bf16 %v3108, %v3108
        %v3114 = vmul.bf16 %v3112, 1056980736
        %v3115 = vmul.bf16 %v3113, 1056980736
        %v3116 = vmul.bf16 %v3112, 1027030327
        %v3117 = vmul.bf16 %v3113, 1027030327
        %v3118 = vmul.bf16 %v3116, %v3112
        %v3119 = vmul.bf16 %v3117, %v3113
        %v3120 = vmul.bf16 %v3118, %v3112
        %v3121 = vmul.bf16 %v3119, %v3113
        %v3122 = vadd.bf16 %v3112, %v3120
        %v3123 = vadd.bf16 %v3113, %v3121
        %v3124 = vmul.bf16 %v3122, 1061961548
        %v3125 = vmul.bf16 %v3123, 1061961548
        %v3126 = vtanh.bf16.pop %v3124
        %v3127 = vtanh.bf16.pop %v3125
        %v3128 = vadd.bf16 %v3126, 1065369472
        %v3129 = vadd.bf16 %v3127, 1065369472
        %v3130 = vmul.bf16 %v3114, %v3128
        %v3131 = vmul.bf16 %v3115, %v3129
        %v3132 = vld [vmem:[%s850 + $0x100] sm:$0xff]
        %v3133 = vld [vmem:[%s850 + $0x108] sm:$0xff]
        %v3134 = vld [vmem:[%s850 + $0x110] sm:$0xff]
        %v3135 = vld [vmem:[%s850 + $0x118] sm:$0xff]
        %v3136 = vld [vmem:[%s850 + $0x120] sm:$0xff]
        %v3137 = vld [vmem:[%s850 + $0x128] sm:$0xff]
        %v3138 = vld [vmem:[%s850 + $0x130] sm:$0xff]
        %v3139 = vld [vmem:[%s850 + $0x138] sm:$0xff]
        %v3140 = vld [vmem:[%s850 + $0x140] sm:$0xff]
        %v3141 = vld [vmem:[%s850 + $0x148] sm:$0xff]
        %v3142 = vld [vmem:[%s850 + $0x150] sm:$0xff]
        %v3143 = vld [vmem:[%s850 + $0x158] sm:$0xff]
        %v3144 = vld [vmem:[%s850 + $0x160] sm:$0xff]
        %v3145 = vld [vmem:[%s850 + $0x168] sm:$0xff]
        %v3146 = vld [vmem:[%s850 + $0x170] sm:$0xff]
        %v3147 = vld [vmem:[%s850 + $0x178] sm:$0xff]
        %v3148 = vld [vmem:[%s850 + $0x180] sm:$0xff]
        %v3149 = vld [vmem:[%s850 + $0x188] sm:$0xff]
        %v3150 = vld [vmem:[%s850 + $0x190] sm:$0xff]
        %v3151 = vld [vmem:[%s850 + $0x198] sm:$0xff]
        %v3152 = vld [vmem:[%s850 + $0x1a0] sm:$0xff]
        %v3153 = vld [vmem:[%s850 + $0x1a8] sm:$0xff]
        %v3154 = vld [vmem:[%s850 + $0x1b0] sm:$0xff]
        %v3155 = vld [vmem:[%s850 + $0x1b8] sm:$0xff]
        %v3156 = vld [vmem:[%s850 + $0x1c0] sm:$0xff]
        %v3157 = vld [vmem:[%s850 + $0x1c8] sm:$0xff]
        %v3158 = vld [vmem:[%s850 + $0x1d0] sm:$0xff]
        %v3159 = vld [vmem:[%s850 + $0x1d8] sm:$0xff]
        %v3160 = vld [vmem:[%s850 + $0x1e0] sm:$0xff]
        %v3161 = vld [vmem:[%s850 + $0x1e8] sm:$0xff]
        %v3162 = vld [vmem:[%s850 + $0x1f0] sm:$0xff]
        %v3163 = vld [vmem:[%s850 + $0x1f8] sm:$0xff]
        %v3196 = vunpack.c.l.b16 %v3132
        %v3197 = vunpack.c.h.b16 %v3132
        %v3198 = vunpack.c.l.b16 %v3133
        %v3199 = vunpack.c.h.b16 %v3133
        %v3200 = vunpack.c.l.b16 %v3134
        %v3201 = vunpack.c.h.b16 %v3134
        %v3202 = vunpack.c.l.b16 %v3135
        %v3203 = vunpack.c.h.b16 %v3135
        %v3204 = vunpack.c.l.b16 %v3136
        %v3205 = vunpack.c.h.b16 %v3136
        %v3206 = vunpack.c.l.b16 %v3137
        %v3207 = vunpack.c.h.b16 %v3137
        %v3208 = vunpack.c.l.b16 %v3138
        %v3209 = vunpack.c.h.b16 %v3138
        %v3210 = vunpack.c.l.b16 %v3139
        %v3211 = vunpack.c.h.b16 %v3139
        %v3212 = vunpack.c.l.b16 %v3140
        %v3213 = vunpack.c.h.b16 %v3140
        %v3214 = vunpack.c.l.b16 %v3141
        %v3215 = vunpack.c.h.b16 %v3141
        %v3216 = vunpack.c.l.b16 %v3142
        %v3217 = vunpack.c.h.b16 %v3142
        %v3218 = vunpack.c.l.b16 %v3143
        %v3219 = vunpack.c.h.b16 %v3143
        %v3220 = vunpack.c.l.b16 %v3144
        %v3221 = vunpack.c.h.b16 %v3144
        %v3222 = vunpack.c.l.b16 %v3145
        %v3223 = vunpack.c.h.b16 %v3145
        %v3224 = vunpack.c.l.b16 %v3146
        %v3225 = vunpack.c.h.b16 %v3146
        %v3226 = vunpack.c.l.b16 %v3147
        %v3227 = vunpack.c.h.b16 %v3147
        %v3228 = vunpack.c.l.b16 %v3148
        %v3229 = vunpack.c.h.b16 %v3148
        %v3230 = vunpack.c.l.b16 %v3149
        %v3231 = vunpack.c.h.b16 %v3149
        %v3232 = vunpack.c.l.b16 %v3150
        %v3233 = vunpack.c.h.b16 %v3150
        %v3234 = vunpack.c.l.b16 %v3151
        %v3235 = vunpack.c.h.b16 %v3151
        %v3236 = vunpack.c.l.b16 %v3152
        %v3237 = vunpack.c.h.b16 %v3152
        %v3238 = vunpack.c.l.b16 %v3153
        %v3239 = vunpack.c.h.b16 %v3153
        %v3240 = vunpack.c.l.b16 %v3154
        %v3241 = vunpack.c.h.b16 %v3154
        %v3242 = vunpack.c.l.b16 %v3155
        %v3243 = vunpack.c.h.b16 %v3155
        %v3244 = vunpack.c.l.b16 %v3156
        %v3245 = vunpack.c.h.b16 %v3156
        %v3246 = vunpack.c.l.b16 %v3157
        %v3247 = vunpack.c.h.b16 %v3157
        %v3248 = vunpack.c.l.b16 %v3158
        %v3249 = vunpack.c.h.b16 %v3158
        %v3250 = vunpack.c.l.b16 %v3159
        %v3251 = vunpack.c.h.b16 %v3159
        %v3252 = vunpack.c.l.b16 %v3160
        %v3253 = vunpack.c.h.b16 %v3160
        %v3254 = vunpack.c.l.b16 %v3161
        %v3255 = vunpack.c.h.b16 %v3161
        %v3256 = vunpack.c.l.b16 %v3162
        %v3257 = vunpack.c.h.b16 %v3162
        %v3258 = vunpack.c.l.b16 %v3163
        %v3259 = vunpack.c.h.b16 %v3163
        %v3260 = vpack.c.b16 %v3198, %v3196
        %v3261 = vpack.c.b16 %v3199, %v3197
        %v3262 = vpack.c.b16 %v3202, %v3200
        %v3263 = vpack.c.b16 %v3203, %v3201
        %v3264 = vpack.c.b16 %v3206, %v3204
        %v3265 = vpack.c.b16 %v3207, %v3205
        %v3266 = vpack.c.b16 %v3210, %v3208
        %v3267 = vpack.c.b16 %v3211, %v3209
        %v3268 = vpack.c.b16 %v3214, %v3212
        %v3269 = vpack.c.b16 %v3215, %v3213
        %v3270 = vpack.c.b16 %v3218, %v3216
        %v3271 = vpack.c.b16 %v3219, %v3217
        %v3272 = vpack.c.b16 %v3222, %v3220
        %v3273 = vpack.c.b16 %v3223, %v3221
        %v3274 = vpack.c.b16 %v3226, %v3224
        %v3275 = vpack.c.b16 %v3227, %v3225
        %v3276 = vpack.c.b16 %v3230, %v3228
        %v3277 = vpack.c.b16 %v3231, %v3229
        %v3278 = vpack.c.b16 %v3234, %v3232
        %v3279 = vpack.c.b16 %v3235, %v3233
        %v3280 = vpack.c.b16 %v3238, %v3236
        %v3281 = vpack.c.b16 %v3239, %v3237
        %v3282 = vpack.c.b16 %v3242, %v3240
        %v3283 = vpack.c.b16 %v3243, %v3241
        %v3284 = vpack.c.b16 %v3246, %v3244
        %v3285 = vpack.c.b16 %v3247, %v3245
        %v3286 = vpack.c.b16 %v3250, %v3248
        %v3287 = vpack.c.b16 %v3251, %v3249
        %v3288 = vpack.c.b16 %v3254, %v3252
        %v3289 = vpack.c.b16 %v3255, %v3253
        %v3290 = vpack.c.b16 %v3258, %v3256
        %v3291 = vpack.c.b16 %v3259, %v3257
        %3324 = vmatprep.subr.bf16.mxu0 %v3275
        %3325 = vmatpush1.bf16.msra.mxu0 %v3274
        %3326 = vmatprep.subr.bf16.mxu0 %v3273
        %3327 = vmatpush1.bf16.msra.mxu0 %v3272
        %3328 = vmatprep.subr.bf16.mxu0 %v3271
        %3329 = vmatpush1.bf16.msra.mxu0 %v3270
        %3330 = vmatprep.subr.bf16.mxu0 %v3269
        %3331 = vmatpush1.bf16.msra.mxu0 %v3268
        %3332 = vmatprep.subr.bf16.mxu0 %v3267
        %3333 = vmatpush1.bf16.msra.mxu0 %v3266
        %3334 = vmatprep.subr.bf16.mxu0 %v3265
        %3335 = vmatpush1.bf16.msra.mxu0 %v3264
        %3336 = vmatprep.subr.bf16.mxu0 %v3263
        %3337 = vmatpush1.bf16.msra.mxu0 %v3262
        %3338 = vmatprep.subr.bf16.mxu0 %v3261
        %3339 = vmatpush1.bf16.msra.mxu0 %v3260
        %3340 = vmatprep.subr.bf16.mxu0 %v3291
        %3341 = vmatpush2.bf16.msra.mxu0 %v3290
        %3342 = vmatprep.subr.bf16.mxu0 %v3289
        %3343 = vmatpush2.bf16.msra.mxu0 %v3288
        %3344 = vmatprep.subr.bf16.mxu0 %v3287
        %3345 = vmatpush2.bf16.msra.mxu0 %v3286
        %3346 = vmatprep.subr.bf16.mxu0 %v3285
        %3347 = vmatpush2.bf16.msra.mxu0 %v3284
        %3348 = vmatprep.subr.bf16.mxu0 %v3283
        %3349 = vmatpush2.bf16.msra.mxu0 %v3282
        %3350 = vmatprep.subr.bf16.mxu0 %v3281
        %3351 = vmatpush2.bf16.msra.mxu0 %v3280
        %3352 = vmatprep.subr.bf16.mxu0 %v3279
        %3353 = vmatpush2.bf16.msra.mxu0 %v3278
        %3354 = vmatprep.subr.bf16.mxu0 %v3277
        %3355 = vmatpush2.bf16.msra.mxu0 %v3276
        %3356 = vmatprep.mubr.bf16.mxu0 %v3131
        %3357 = vmatmul.mubr.bf16.gmra.mxu0 %v3130
        %v3358 = vpop.f32.mrf.mxu0
        %v3359 = vadd.f32 0.0, %v3358
        %v3360 = vpop.f32.mrf.mxu0
        %v3361 = vadd.f32 0.0, %v3360
        %v3362 = vpop.f32.mrf.mxu0
        %v3363 = vpop.f32.mrf.mxu0
        %3364 = vdwg.mxu0
        %v3397 = vunpack.c.l.b16 %v2835
        %v3398 = vunpack.c.h.b16 %v2835
        %v3399 = vunpack.c.l.b16 %v2836
        %v3400 = vunpack.c.h.b16 %v2836
        %v3401 = vunpack.c.l.b16 %v2837
        %v3402 = vunpack.c.h.b16 %v2837
        %v3403 = vunpack.c.l.b16 %v2838
        %v3404 = vunpack.c.h.b16 %v2838
        %v3405 = vunpack.c.l.b16 %v2839
        %v3406 = vunpack.c.h.b16 %v2839
        %v3407 = vunpack.c.l.b16 %v2840
        %v3408 = vunpack.c.h.b16 %v2840
        %v3409 = vunpack.c.l.b16 %v2841
        %v3410 = vunpack.c.h.b16 %v2841
        %v3411 = vunpack.c.l.b16 %v2842
        %v3412 = vunpack.c.h.b16 %v2842
        %v3413 = vunpack.c.l.b16 %v2843
        %v3414 = vunpack.c.h.b16 %v2843
        %v3415 = vunpack.c.l.b16 %v2844
        %v3416 = vunpack.c.h.b16 %v2844
        %v3417 = vunpack.c.l.b16 %v2845
        %v3418 = vunpack.c.h.b16 %v2845
        %v3419 = vunpack.c.l.b16 %v2846
        %v3420 = vunpack.c.h.b16 %v2846
        %v3421 = vunpack.c.l.b16 %v2847
        %v3422 = vunpack.c.h.b16 %v2847
        %v3423 = vunpack.c.l.b16 %v2848
        %v3424 = vunpack.c.h.b16 %v2848
        %v3425 = vunpack.c.l.b16 %v2849
        %v3426 = vunpack.c.h.b16 %v2849
        %v3427 = vunpack.c.l.b16 %v2850
        %v3428 = vunpack.c.h.b16 %v2850
        %v3429 = vunpack.c.l.b16 %v2851
        %v3430 = vunpack.c.h.b16 %v2851
        %v3431 = vunpack.c.l.b16 %v2852
        %v3432 = vunpack.c.h.b16 %v2852
        %v3433 = vunpack.c.l.b16 %v2853
        %v3434 = vunpack.c.h.b16 %v2853
        %v3435 = vunpack.c.l.b16 %v2854
        %v3436 = vunpack.c.h.b16 %v2854
        %v3437 = vunpack.c.l.b16 %v2855
        %v3438 = vunpack.c.h.b16 %v2855
        %v3439 = vunpack.c.l.b16 %v2856
        %v3440 = vunpack.c.h.b16 %v2856
        %v3441 = vunpack.c.l.b16 %v2857
        %v3442 = vunpack.c.h.b16 %v2857
        %v3443 = vunpack.c.l.b16 %v2858
        %v3444 = vunpack.c.h.b16 %v2858
        %v3445 = vunpack.c.l.b16 %v2859
        %v3446 = vunpack.c.h.b16 %v2859
        %v3447 = vunpack.c.l.b16 %v2860
        %v3448 = vunpack.c.h.b16 %v2860
        %v3449 = vunpack.c.l.b16 %v2861
        %v3450 = vunpack.c.h.b16 %v2861
        %v3451 = vunpack.c.l.b16 %v2862
        %v3452 = vunpack.c.h.b16 %v2862
        %v3453 = vunpack.c.l.b16 %v2863
        %v3454 = vunpack.c.h.b16 %v2863
        %v3455 = vunpack.c.l.b16 %v2864
        %v3456 = vunpack.c.h.b16 %v2864
        %v3457 = vunpack.c.l.b16 %v2865
        %v3458 = vunpack.c.h.b16 %v2865
        %v3459 = vunpack.c.l.b16 %v2866
        %v3460 = vunpack.c.h.b16 %v2866
        %v3461 = vpack.c.b16 %v3399, %v3397
        %v3462 = vpack.c.b16 %v3400, %v3398
        %v3463 = vpack.c.b16 %v3403, %v3401
        %v3464 = vpack.c.b16 %v3404, %v3402
        %v3465 = vpack.c.b16 %v3407, %v3405
        %v3466 = vpack.c.b16 %v3408, %v3406
        %v3467 = vpack.c.b16 %v3411, %v3409
        %v3468 = vpack.c.b16 %v3412, %v3410
        %v3469 = vpack.c.b16 %v3415, %v3413
        %v3470 = vpack.c.b16 %v3416, %v3414
        %v3471 = vpack.c.b16 %v3419, %v3417
        %v3472 = vpack.c.b16 %v3420, %v3418
        %v3473 = vpack.c.b16 %v3423, %v3421
        %v3474 = vpack.c.b16 %v3424, %v3422
        %v3475 = vpack.c.b16 %v3427, %v3425
        %v3476 = vpack.c.b16 %v3428, %v3426
        %v3477 = vpack.c.b16 %v3431, %v3429
        %v3478 = vpack.c.b16 %v3432, %v3430
        %v3479 = vpack.c.b16 %v3435, %v3433
        %v3480 = vpack.c.b16 %v3436, %v3434
        %v3481 = vpack.c.b16 %v3439, %v3437
        %v3482 = vpack.c.b16 %v3440, %v3438
        %v3483 = vpack.c.b16 %v3443, %v3441
        %v3484 = vpack.c.b16 %v3444, %v3442
        %v3485 = vpack.c.b16 %v3447, %v3445
        %v3486 = vpack.c.b16 %v3448, %v3446
        %v3487 = vpack.c.b16 %v3451, %v3449
        %v3488 = vpack.c.b16 %v3452, %v3450
        %v3489 = vpack.c.b16 %v3455, %v3453
        %v3490 = vpack.c.b16 %v3456, %v3454
        %v3491 = vpack.c.b16 %v3459, %v3457
        %v3492 = vpack.c.b16 %v3460, %v3458
        %3525 = vmatprep.subr.bf16.mxu0 %v3476
        %3526 = vmatpush1.bf16.msra.mxu0 %v3475
        %3527 = vmatprep.subr.bf16.mxu0 %v3474
        %3528 = vmatpush1.bf16.msra.mxu0 %v3473
        %3529 = vmatprep.subr.bf16.mxu0 %v3472
        %3530 = vmatpush1.bf16.msra.mxu0 %v3471
        %3531 = vmatprep.subr.bf16.mxu0 %v3470
        %3532 = vmatpush1.bf16.msra.mxu0 %v3469
        %3533 = vmatprep.subr.bf16.mxu0 %v3468
        %3534 = vmatpush1.bf16.msra.mxu0 %v3467
        %3535 = vmatprep.subr.bf16.mxu0 %v3466
        %3536 = vmatpush1.bf16.msra.mxu0 %v3465
        %3537 = vmatprep.subr.bf16.mxu0 %v3464
        %3538 = vmatpush1.bf16.msra.mxu0 %v3463
        %3539 = vmatprep.subr.bf16.mxu0 %v3462
        %3540 = vmatpush1.bf16.msra.mxu0 %v3461
        %3541 = vmatprep.subr.bf16.mxu0 %v3492
        %3542 = vmatpush2.bf16.msra.mxu0 %v3491
        %3543 = vmatprep.subr.bf16.mxu0 %v3490
        %3544 = vmatpush2.bf16.msra.mxu0 %v3489
        %3545 = vmatprep.subr.bf16.mxu0 %v3488
        %3546 = vmatpush2.bf16.msra.mxu0 %v3487
        %3547 = vmatprep.subr.bf16.mxu0 %v3486
        %3548 = vmatpush2.bf16.msra.mxu0 %v3485
        %3549 = vmatprep.subr.bf16.mxu0 %v3484
        %3550 = vmatpush2.bf16.msra.mxu0 %v3483
        %3551 = vmatprep.subr.bf16.mxu0 %v3482
        %3552 = vmatpush2.bf16.msra.mxu0 %v3481
        %3553 = vmatprep.subr.bf16.mxu0 %v3480
        %3554 = vmatpush2.bf16.msra.mxu0 %v3479
        %3555 = vmatprep.subr.bf16.mxu0 %v3478
        %3556 = vmatpush2.bf16.msra.mxu0 %v3477
        %3557 = vmatprep.mubr.bf16.mxu0 %v2834
        %3558 = vmatmul.mubr.bf16.gmra.mxu0 %v2833
        %v3559 = vpop.f32.mrf.mxu0
        %v3560 = vadd.f32 %v3359, %v3559
        %v3561 = vpop.f32.mrf.mxu0
        %v3562 = vadd.f32 %v3361, %v3561
        %v3563 = vpop.f32.mrf.mxu0
        %v3564 = vpop.f32.mrf.mxu0
        %3565 = vdwg.mxu0
        %v3566 = vld [vmem:[%s832 + $0x10] sm:$0xff]
        %v3567 = vld [vmem:[%s832 + $0x30] sm:$0xff]
        %v3568 = vld [vmem:[%s832 + $0x50] sm:$0xff]
        %v3569 = vld [vmem:[%s832 + $0x70] sm:$0xff]
        %v3570 = vld [vmem:[%s832 + $0x90] sm:$0xff]
        %v3571 = vld [vmem:[%s832 + $0xb0] sm:$0xff]
        %v3572 = vld [vmem:[%s832 + $0xd0] sm:$0xff]
        %v3573 = vld [vmem:[%s832 + $0xf0] sm:$0xff]
        %v3574 = vld [vmem:[%s832 + $0x110] sm:$0xff]
        %v3575 = vld [vmem:[%s832 + $0x130] sm:$0xff]
        %v3576 = vld [vmem:[%s832 + $0x150] sm:$0xff]
        %v3577 = vld [vmem:[%s832 + $0x170] sm:$0xff]
        %v3578 = vld [vmem:[%s832 + $0x190] sm:$0xff]
        %v3579 = vld [vmem:[%s832 + $0x1b0] sm:$0xff]
        %v3580 = vld [vmem:[%s832 + $0x1d0] sm:$0xff]
        %v3581 = vld [vmem:[%s832 + $0x1f0] sm:$0xff]
        %v3582 = vld [vmem:[%s832 + $0x210] sm:$0xff]
        %v3583 = vld [vmem:[%s832 + $0x230] sm:$0xff]
        %v3584 = vld [vmem:[%s832 + $0x250] sm:$0xff]
        %v3585 = vld [vmem:[%s832 + $0x270] sm:$0xff]
        %v3586 = vld [vmem:[%s832 + $0x290] sm:$0xff]
        %v3587 = vld [vmem:[%s832 + $0x2b0] sm:$0xff]
        %v3588 = vld [vmem:[%s832 + $0x2d0] sm:$0xff]
        %v3589 = vld [vmem:[%s832 + $0x2f0] sm:$0xff]
        %v3590 = vld [vmem:[%s832 + $0x310] sm:$0xff]
        %v3591 = vld [vmem:[%s832 + $0x330] sm:$0xff]
        %v3592 = vld [vmem:[%s832 + $0x350] sm:$0xff]
        %v3593 = vld [vmem:[%s832 + $0x370] sm:$0xff]
        %v3594 = vld [vmem:[%s832 + $0x390] sm:$0xff]
        %v3595 = vld [vmem:[%s832 + $0x3b0] sm:$0xff]
        %v3596 = vld [vmem:[%s832 + $0x3d0] sm:$0xff]
        %v3597 = vld [vmem:[%s832 + $0x3f0] sm:$0xff]
        %v3598 = vld [vmem:[%s841 + $0x4] sm:$0x3]
        %v3600 = vlaneseq
        %v3601 = vshrl.u32 %v3600, 7
        %v3602 = vsub.s32 0, %v3601
        %v3603 = vrot.slane %v3598, %v3602
        %v3604 = vlaneseq
        %v3605 = vshrl.u32 %v3604, 7
        %v3606 = vsub.s32 1, %v3605
        %v3607 = vrot.slane %v3598, %v3606
        %v3642 = vunpack.c.l.b16 %v3566
        %v3643 = vunpack.c.h.b16 %v3566
        %v3644 = vunpack.c.l.b16 %v3567
        %v3645 = vunpack.c.h.b16 %v3567
        %v3646 = vunpack.c.l.b16 %v3568
        %v3647 = vunpack.c.h.b16 %v3568
        %v3648 = vunpack.c.l.b16 %v3569
        %v3649 = vunpack.c.h.b16 %v3569
        %v3650 = vunpack.c.l.b16 %v3570
        %v3651 = vunpack.c.h.b16 %v3570
        %v3652 = vunpack.c.l.b16 %v3571
        %v3653 = vunpack.c.h.b16 %v3571
        %v3654 = vunpack.c.l.b16 %v3572
        %v3655 = vunpack.c.h.b16 %v3572
        %v3656 = vunpack.c.l.b16 %v3573
        %v3657 = vunpack.c.h.b16 %v3573
        %v3658 = vunpack.c.l.b16 %v3574
        %v3659 = vunpack.c.h.b16 %v3574
        %v3660 = vunpack.c.l.b16 %v3575
        %v3661 = vunpack.c.h.b16 %v3575
        %v3662 = vunpack.c.l.b16 %v3576
        %v3663 = vunpack.c.h.b16 %v3576
        %v3664 = vunpack.c.l.b16 %v3577
        %v3665 = vunpack.c.h.b16 %v3577
        %v3666 = vunpack.c.l.b16 %v3578
        %v3667 = vunpack.c.h.b16 %v3578
        %v3668 = vunpack.c.l.b16 %v3579
        %v3669 = vunpack.c.h.b16 %v3579
        %v3670 = vunpack.c.l.b16 %v3580
        %v3671 = vunpack.c.h.b16 %v3580
        %v3672 = vunpack.c.l.b16 %v3581
        %v3673 = vunpack.c.h.b16 %v3581
        %v3674 = vunpack.c.l.b16 %v3582
        %v3675 = vunpack.c.h.b16 %v3582
        %v3676 = vunpack.c.l.b16 %v3583
        %v3677 = vunpack.c.h.b16 %v3583
        %v3678 = vunpack.c.l.b16 %v3584
        %v3679 = vunpack.c.h.b16 %v3584
        %v3680 = vunpack.c.l.b16 %v3585
        %v3681 = vunpack.c.h.b16 %v3585
        %v3682 = vunpack.c.l.b16 %v3586
        %v3683 = vunpack.c.h.b16 %v3586
        %v3684 = vunpack.c.l.b16 %v3587
        %v3685 = vunpack.c.h.b16 %v3587
        %v3686 = vunpack.c.l.b16 %v3588
        %v3687 = vunpack.c.h.b16 %v3588
        %v3688 = vunpack.c.l.b16 %v3589
        %v3689 = vunpack.c.h.b16 %v3589
        %v3690 = vunpack.c.l.b16 %v3590
        %v3691 = vunpack.c.h.b16 %v3590
        %v3692 = vunpack.c.l.b16 %v3591
        %v3693 = vunpack.c.h.b16 %v3591
        %v3694 = vunpack.c.l.b16 %v3592
        %v3695 = vunpack.c.h.b16 %v3592
        %v3696 = vunpack.c.l.b16 %v3593
        %v3697 = vunpack.c.h.b16 %v3593
        %v3698 = vunpack.c.l.b16 %v3594
        %v3699 = vunpack.c.h.b16 %v3594
        %v3700 = vunpack.c.l.b16 %v3595
        %v3701 = vunpack.c.h.b16 %v3595
        %v3702 = vunpack.c.l.b16 %v3596
        %v3703 = vunpack.c.h.b16 %v3596
        %v3704 = vunpack.c.l.b16 %v3597
        %v3705 = vunpack.c.h.b16 %v3597
        %v3706 = vpack.c.b16 %v3644, %v3642
        %v3707 = vpack.c.b16 %v3645, %v3643
        %v3708 = vpack.c.b16 %v3648, %v3646
        %v3709 = vpack.c.b16 %v3649, %v3647
        %v3710 = vpack.c.b16 %v3652, %v3650
        %v3711 = vpack.c.b16 %v3653, %v3651
        %v3712 = vpack.c.b16 %v3656, %v3654
        %v3713 = vpack.c.b16 %v3657, %v3655
        %v3714 = vpack.c.b16 %v3660, %v3658
        %v3715 = vpack.c.b16 %v3661, %v3659
        %v3716 = vpack.c.b16 %v3664, %v3662
        %v3717 = vpack.c.b16 %v3665, %v3663
        %v3718 = vpack.c.b16 %v3668, %v3666
        %v3719 = vpack.c.b16 %v3669, %v3667
        %v3720 = vpack.c.b16 %v3672, %v3670
        %v3721 = vpack.c.b16 %v3673, %v3671
        %v3722 = vpack.c.b16 %v3676, %v3674
        %v3723 = vpack.c.b16 %v3677, %v3675
        %v3724 = vpack.c.b16 %v3680, %v3678
        %v3725 = vpack.c.b16 %v3681, %v3679
        %v3726 = vpack.c.b16 %v3684, %v3682
        %v3727 = vpack.c.b16 %v3685, %v3683
        %v3728 = vpack.c.b16 %v3688, %v3686
        %v3729 = vpack.c.b16 %v3689, %v3687
        %v3730 = vpack.c.b16 %v3692, %v3690
        %v3731 = vpack.c.b16 %v3693, %v3691
        %v3732 = vpack.c.b16 %v3696, %v3694
        %v3733 = vpack.c.b16 %v3697, %v3695
        %v3734 = vpack.c.b16 %v3700, %v3698
        %v3735 = vpack.c.b16 %v3701, %v3699
        %v3736 = vpack.c.b16 %v3704, %v3702
        %v3737 = vpack.c.b16 %v3705, %v3703
        %3770 = vmatprep.subr.bf16.mxu0 %v3721
        %3771 = vmatpush1.bf16.msra.mxu0 %v3720
        %3772 = vmatprep.subr.bf16.mxu0 %v3719
        %3773 = vmatpush1.bf16.msra.mxu0 %v3718
        %3774 = vmatprep.subr.bf16.mxu0 %v3717
        %3775 = vmatpush1.bf16.msra.mxu0 %v3716
        %3776 = vmatprep.subr.bf16.mxu0 %v3715
        %3777 = vmatpush1.bf16.msra.mxu0 %v3714
        %3778 = vmatprep.subr.bf16.mxu0 %v3713
        %3779 = vmatpush1.bf16.msra.mxu0 %v3712
        %3780 = vmatprep.subr.bf16.mxu0 %v3711
        %3781 = vmatpush1.bf16.msra.mxu0 %v3710
        %3782 = vmatprep.subr.bf16.mxu0 %v3709
        %3783 = vmatpush1.bf16.msra.mxu0 %v3708
        %3784 = vmatprep.subr.bf16.mxu0 %v3707
        %3785 = vmatpush1.bf16.msra.mxu0 %v3706
        %3786 = vmatprep.subr.bf16.mxu0 %v3737
        %3787 = vmatpush2.bf16.msra.mxu0 %v3736
        %3788 = vmatprep.subr.bf16.mxu0 %v3735
        %3789 = vmatpush2.bf16.msra.mxu0 %v3734
        %3790 = vmatprep.subr.bf16.mxu0 %v3733
        %3791 = vmatpush2.bf16.msra.mxu0 %v3732
        %3792 = vmatprep.subr.bf16.mxu0 %v3731
        %3793 = vmatpush2.bf16.msra.mxu0 %v3730
        %3794 = vmatprep.subr.bf16.mxu0 %v3729
        %3795 = vmatpush2.bf16.msra.mxu0 %v3728
        %3796 = vmatprep.subr.bf16.mxu0 %v3727
        %3797 = vmatpush2.bf16.msra.mxu0 %v3726
        %3798 = vmatprep.subr.bf16.mxu0 %v3725
        %3799 = vmatpush2.bf16.msra.mxu0 %v3724
        %3800 = vmatprep.subr.bf16.mxu0 %v3723
        %3801 = vmatpush2.bf16.msra.mxu0 %v3722
        %3802 = vmatprep.mubr.bf16.mxu0 %v2569
        %3803 = vmatmul.mubr.bf16.gmra.mxu0 %v2568
        %v3804 = vpop.f32.mrf.mxu0
        %v3805 = vadd.f32 %v3603, %v3804
        %v3806 = vpop.f32.mrf.mxu0
        %v3807 = vadd.f32 %v3607, %v3806
        %v3808 = vpop.f32.mrf.mxu0
        %v3809 = vpop.f32.mrf.mxu0
        %3810 = vdwg.mxu0
        %v3811 = vpack.c.bf16 %v3805, %v3805
        %v3812 = vpack.c.bf16 %v3807, %v3807
        %v3813 = vmul.bf16 %v3811, 1056980736
        %v3814 = vmul.bf16 %v3812, 1056980736
        %v3815 = vmul.bf16 %v3811, 1027030327
        %v3816 = vmul.bf16 %v3812, 1027030327
        %v3817 = vmul.bf16 %v3815, %v3811
        %v3818 = vmul.bf16 %v3816, %v3812
        %v3819 = vmul.bf16 %v3817, %v3811
        %v3820 = vmul.bf16 %v3818, %v3812
        %v3821 = vadd.bf16 %v3811, %v3819
        %v3822 = vadd.bf16 %v3812, %v3820
        %v3823 = vmul.bf16 %v3821, 1061961548
        %v3824 = vmul.bf16 %v3822, 1061961548
        %v3825 = vtanh.bf16.pop %v3823
        %v3826 = vtanh.bf16.pop %v3824
        %v3827 = vadd.bf16 %v3825, 1065369472
        %v3828 = vadd.bf16 %v3826, 1065369472
        %v3829 = vmul.bf16 %v3813, %v3827
        %v3830 = vmul.bf16 %v3814, %v3828
        %v3831 = vld [vmem:[%s850 + $0x200] sm:$0xff]
        %v3832 = vld [vmem:[%s850 + $0x208] sm:$0xff]
        %v3833 = vld [vmem:[%s850 + $0x210] sm:$0xff]
        %v3834 = vld [vmem:[%s850 + $0x218] sm:$0xff]
        %v3835 = vld [vmem:[%s850 + $0x220] sm:$0xff]
        %v3836 = vld [vmem:[%s850 + $0x228] sm:$0xff]
        %v3837 = vld [vmem:[%s850 + $0x230] sm:$0xff]
        %v3838 = vld [vmem:[%s850 + $0x238] sm:$0xff]
        %v3839 = vld [vmem:[%s850 + $0x240] sm:$0xff]
        %v3840 = vld [vmem:[%s850 + $0x248] sm:$0xff]
        %v3841 = vld [vmem:[%s850 + $0x250] sm:$0xff]
        %v3842 = vld [vmem:[%s850 + $0x258] sm:$0xff]
        %v3843 = vld [vmem:[%s850 + $0x260] sm:$0xff]
        %v3844 = vld [vmem:[%s850 + $0x268] sm:$0xff]
        %v3845 = vld [vmem:[%s850 + $0x270] sm:$0xff]
        %v3846 = vld [vmem:[%s850 + $0x278] sm:$0xff]
        %v3847 = vld [vmem:[%s850 + $0x280] sm:$0xff]
        %v3848 = vld [vmem:[%s850 + $0x288] sm:$0xff]
        %v3849 = vld [vmem:[%s850 + $0x290] sm:$0xff]
        %v3850 = vld [vmem:[%s850 + $0x298] sm:$0xff]
        %v3851 = vld [vmem:[%s850 + $0x2a0] sm:$0xff]
        %v3852 = vld [vmem:[%s850 + $0x2a8] sm:$0xff]
        %v3853 = vld [vmem:[%s850 + $0x2b0] sm:$0xff]
        %v3854 = vld [vmem:[%s850 + $0x2b8] sm:$0xff]
        %v3855 = vld [vmem:[%s850 + $0x2c0] sm:$0xff]
        %v3856 = vld [vmem:[%s850 + $0x2c8] sm:$0xff]
        %v3857 = vld [vmem:[%s850 + $0x2d0] sm:$0xff]
        %v3858 = vld [vmem:[%s850 + $0x2d8] sm:$0xff]
        %v3859 = vld [vmem:[%s850 + $0x2e0] sm:$0xff]
        %v3860 = vld [vmem:[%s850 + $0x2e8] sm:$0xff]
        %v3861 = vld [vmem:[%s850 + $0x2f0] sm:$0xff]
        %v3862 = vld [vmem:[%s850 + $0x2f8] sm:$0xff]
        %v3895 = vunpack.c.l.b16 %v3831
        %v3896 = vunpack.c.h.b16 %v3831
        %v3897 = vunpack.c.l.b16 %v3832
        %v3898 = vunpack.c.h.b16 %v3832
        %v3899 = vunpack.c.l.b16 %v3833
        %v3900 = vunpack.c.h.b16 %v3833
        %v3901 = vunpack.c.l.b16 %v3834
        %v3902 = vunpack.c.h.b16 %v3834
        %v3903 = vunpack.c.l.b16 %v3835
        %v3904 = vunpack.c.h.b16 %v3835
        %v3905 = vunpack.c.l.b16 %v3836
        %v3906 = vunpack.c.h.b16 %v3836
        %v3907 = vunpack.c.l.b16 %v3837
        %v3908 = vunpack.c.h.b16 %v3837
        %v3909 = vunpack.c.l.b16 %v3838
        %v3910 = vunpack.c.h.b16 %v3838
        %v3911 = vunpack.c.l.b16 %v3839
        %v3912 = vunpack.c.h.b16 %v3839
        %v3913 = vunpack.c.l.b16 %v3840
        %v3914 = vunpack.c.h.b16 %v3840
        %v3915 = vunpack.c.l.b16 %v3841
        %v3916 = vunpack.c.h.b16 %v3841
        %v3917 = vunpack.c.l.b16 %v3842
        %v3918 = vunpack.c.h.b16 %v3842
        %v3919 = vunpack.c.l.b16 %v3843
        %v3920 = vunpack.c.h.b16 %v3843
        %v3921 = vunpack.c.l.b16 %v3844
        %v3922 = vunpack.c.h.b16 %v3844
        %v3923 = vunpack.c.l.b16 %v3845
        %v3924 = vunpack.c.h.b16 %v3845
        %v3925 = vunpack.c.l.b16 %v3846
        %v3926 = vunpack.c.h.b16 %v3846
        %v3927 = vunpack.c.l.b16 %v3847
        %v3928 = vunpack.c.h.b16 %v3847
        %v3929 = vunpack.c.l.b16 %v3848
        %v3930 = vunpack.c.h.b16 %v3848
        %v3931 = vunpack.c.l.b16 %v3849
        %v3932 = vunpack.c.h.b16 %v3849
        %v3933 = vunpack.c.l.b16 %v3850
        %v3934 = vunpack.c.h.b16 %v3850
        %v3935 = vunpack.c.l.b16 %v3851
        %v3936 = vunpack.c.h.b16 %v3851
        %v3937 = vunpack.c.l.b16 %v3852
        %v3938 = vunpack.c.h.b16 %v3852
        %v3939 = vunpack.c.l.b16 %v3853
        %v3940 = vunpack.c.h.b16 %v3853
        %v3941 = vunpack.c.l.b16 %v3854
        %v3942 = vunpack.c.h.b16 %v3854
        %v3943 = vunpack.c.l.b16 %v3855
        %v3944 = vunpack.c.h.b16 %v3855
        %v3945 = vunpack.c.l.b16 %v3856
        %v3946 = vunpack.c.h.b16 %v3856
        %v3947 = vunpack.c.l.b16 %v3857
        %v3948 = vunpack.c.h.b16 %v3857
        %v3949 = vunpack.c.l.b16 %v3858
        %v3950 = vunpack.c.h.b16 %v3858
        %v3951 = vunpack.c.l.b16 %v3859
        %v3952 = vunpack.c.h.b16 %v3859
        %v3953 = vunpack.c.l.b16 %v3860
        %v3954 = vunpack.c.h.b16 %v3860
        %v3955 = vunpack.c.l.b16 %v3861
        %v3956 = vunpack.c.h.b16 %v3861
        %v3957 = vunpack.c.l.b16 %v3862
        %v3958 = vunpack.c.h.b16 %v3862
        %v3959 = vpack.c.b16 %v3897, %v3895
        %v3960 = vpack.c.b16 %v3898, %v3896
        %v3961 = vpack.c.b16 %v3901, %v3899
        %v3962 = vpack.c.b16 %v3902, %v3900
        %v3963 = vpack.c.b16 %v3905, %v3903
        %v3964 = vpack.c.b16 %v3906, %v3904
        %v3965 = vpack.c.b16 %v3909, %v3907
        %v3966 = vpack.c.b16 %v3910, %v3908
        %v3967 = vpack.c.b16 %v3913, %v3911
        %v3968 = vpack.c.b16 %v3914, %v3912
        %v3969 = vpack.c.b16 %v3917, %v3915
        %v3970 = vpack.c.b16 %v3918, %v3916
        %v3971 = vpack.c.b16 %v3921, %v3919
        %v3972 = vpack.c.b16 %v3922, %v3920
        %v3973 = vpack.c.b16 %v3925, %v3923
        %v3974 = vpack.c.b16 %v3926, %v3924
        %v3975 = vpack.c.b16 %v3929, %v3927
        %v3976 = vpack.c.b16 %v3930, %v3928
        %v3977 = vpack.c.b16 %v3933, %v3931
        %v3978 = vpack.c.b16 %v3934, %v3932
        %v3979 = vpack.c.b16 %v3937, %v3935
        %v3980 = vpack.c.b16 %v3938, %v3936
        %v3981 = vpack.c.b16 %v3941, %v3939
        %v3982 = vpack.c.b16 %v3942, %v3940
        %v3983 = vpack.c.b16 %v3945, %v3943
        %v3984 = vpack.c.b16 %v3946, %v3944
        %v3985 = vpack.c.b16 %v3949, %v3947
        %v3986 = vpack.c.b16 %v3950, %v3948
        %v3987 = vpack.c.b16 %v3953, %v3951
        %v3988 = vpack.c.b16 %v3954, %v3952
        %v3989 = vpack.c.b16 %v3957, %v3955
        %v3990 = vpack.c.b16 %v3958, %v3956
        %4023 = vmatprep.subr.bf16.mxu0 %v3974
        %4024 = vmatpush1.bf16.msra.mxu0 %v3973
        %4025 = vmatprep.subr.bf16.mxu0 %v3972
        %4026 = vmatpush1.bf16.msra.mxu0 %v3971
        %4027 = vmatprep.subr.bf16.mxu0 %v3970
        %4028 = vmatpush1.bf16.msra.mxu0 %v3969
        %4029 = vmatprep.subr.bf16.mxu0 %v3968
        %4030 = vmatpush1.bf16.msra.mxu0 %v3967
        %4031 = vmatprep.subr.bf16.mxu0 %v3966
        %4032 = vmatpush1.bf16.msra.mxu0 %v3965
        %4033 = vmatprep.subr.bf16.mxu0 %v3964
        %4034 = vmatpush1.bf16.msra.mxu0 %v3963
        %4035 = vmatprep.subr.bf16.mxu0 %v3962
        %4036 = vmatpush1.bf16.msra.mxu0 %v3961
        %4037 = vmatprep.subr.bf16.mxu0 %v3960
        %4038 = vmatpush1.bf16.msra.mxu0 %v3959
        %4039 = vmatprep.subr.bf16.mxu0 %v3990
        %4040 = vmatpush2.bf16.msra.mxu0 %v3989
        %4041 = vmatprep.subr.bf16.mxu0 %v3988
        %4042 = vmatpush2.bf16.msra.mxu0 %v3987
        %4043 = vmatprep.subr.bf16.mxu0 %v3986
        %4044 = vmatpush2.bf16.msra.mxu0 %v3985
        %4045 = vmatprep.subr.bf16.mxu0 %v3984
        %4046 = vmatpush2.bf16.msra.mxu0 %v3983
        %4047 = vmatprep.subr.bf16.mxu0 %v3982
        %4048 = vmatpush2.bf16.msra.mxu0 %v3981
        %4049 = vmatprep.subr.bf16.mxu0 %v3980
        %4050 = vmatpush2.bf16.msra.mxu0 %v3979
        %4051 = vmatprep.subr.bf16.mxu0 %v3978
        %4052 = vmatpush2.bf16.msra.mxu0 %v3977
        %4053 = vmatprep.subr.bf16.mxu0 %v3976
        %4054 = vmatpush2.bf16.msra.mxu0 %v3975
        %4055 = vmatprep.mubr.bf16.mxu0 %v3830
        %4056 = vmatmul.mubr.bf16.gmra.mxu0 %v3829
        %v4057 = vpop.f32.mrf.mxu0
        %v4058 = vadd.f32 0.0, %v4057
        %v4059 = vpop.f32.mrf.mxu0
        %v4060 = vadd.f32 0.0, %v4059
        %v4061 = vpop.f32.mrf.mxu0
        %v4062 = vpop.f32.mrf.mxu0
        %4063 = vdwg.mxu0
        %v4064 = vadd.f32 %v3560, %v4058
        %v4065 = vadd.f32 %v3562, %v4060
        %v4066 = vld [vmem:[%s832 + $0x18] sm:$0xff]
        %v4067 = vld [vmem:[%s832 + $0x38] sm:$0xff]
        %v4068 = vld [vmem:[%s832 + $0x58] sm:$0xff]
        %v4069 = vld [vmem:[%s832 + $0x78] sm:$0xff]
        %v4070 = vld [vmem:[%s832 + $0x98] sm:$0xff]
        %v4071 = vld [vmem:[%s832 + $0xb8] sm:$0xff]
        %v4072 = vld [vmem:[%s832 + $0xd8] sm:$0xff]
        %v4073 = vld [vmem:[%s832 + $0xf8] sm:$0xff]
        %v4074 = vld [vmem:[%s832 + $0x118] sm:$0xff]
        %v4075 = vld [vmem:[%s832 + $0x138] sm:$0xff]
        %v4076 = vld [vmem:[%s832 + $0x158] sm:$0xff]
        %v4077 = vld [vmem:[%s832 + $0x178] sm:$0xff]
        %v4078 = vld [vmem:[%s832 + $0x198] sm:$0xff]
        %v4079 = vld [vmem:[%s832 + $0x1b8] sm:$0xff]
        %v4080 = vld [vmem:[%s832 + $0x1d8] sm:$0xff]
        %v4081 = vld [vmem:[%s832 + $0x1f8] sm:$0xff]
        %v4082 = vld [vmem:[%s832 + $0x218] sm:$0xff]
        %v4083 = vld [vmem:[%s832 + $0x238] sm:$0xff]
        %v4084 = vld [vmem:[%s832 + $0x258] sm:$0xff]
        %v4085 = vld [vmem:[%s832 + $0x278] sm:$0xff]
        %v4086 = vld [vmem:[%s832 + $0x298] sm:$0xff]
        %v4087 = vld [vmem:[%s832 + $0x2b8] sm:$0xff]
        %v4088 = vld [vmem:[%s832 + $0x2d8] sm:$0xff]
        %v4089 = vld [vmem:[%s832 + $0x2f8] sm:$0xff]
        %v4090 = vld [vmem:[%s832 + $0x318] sm:$0xff]
        %v4091 = vld [vmem:[%s832 + $0x338] sm:$0xff]
        %v4092 = vld [vmem:[%s832 + $0x358] sm:$0xff]
        %v4093 = vld [vmem:[%s832 + $0x378] sm:$0xff]
        %v4094 = vld [vmem:[%s832 + $0x398] sm:$0xff]
        %v4095 = vld [vmem:[%s832 + $0x3b8] sm:$0xff]
        %v4096 = vld [vmem:[%s832 + $0x3d8] sm:$0xff]
        %v4097 = vld [vmem:[%s832 + $0x3f8] sm:$0xff]
        %v4098 = vld [vmem:[%s841 + $0x6] sm:$0x3]
        %v4100 = vlaneseq
        %v4101 = vshrl.u32 %v4100, 7
        %v4102 = vsub.s32 0, %v4101
        %v4103 = vrot.slane %v4098, %v4102
        %v4104 = vlaneseq
        %v4105 = vshrl.u32 %v4104, 7
        %v4106 = vsub.s32 1, %v4105
        %v4107 = vrot.slane %v4098, %v4106
        %v4142 = vunpack.c.l.b16 %v4066
        %v4143 = vunpack.c.h.b16 %v4066
        %v4144 = vunpack.c.l.b16 %v4067
        %v4145 = vunpack.c.h.b16 %v4067
        %v4146 = vunpack.c.l.b16 %v4068
        %v4147 = vunpack.c.h.b16 %v4068
        %v4148 = vunpack.c.l.b16 %v4069
        %v4149 = vunpack.c.h.b16 %v4069
        %v4150 = vunpack.c.l.b16 %v4070
        %v4151 = vunpack.c.h.b16 %v4070
        %v4152 = vunpack.c.l.b16 %v4071
        %v4153 = vunpack.c.h.b16 %v4071
        %v4154 = vunpack.c.l.b16 %v4072
        %v4155 = vunpack.c.h.b16 %v4072
        %v4156 = vunpack.c.l.b16 %v4073
        %v4157 = vunpack.c.h.b16 %v4073
        %v4158 = vunpack.c.l.b16 %v4074
        %v4159 = vunpack.c.h.b16 %v4074
        %v4160 = vunpack.c.l.b16 %v4075
        %v4161 = vunpack.c.h.b16 %v4075
        %v4162 = vunpack.c.l.b16 %v4076
        %v4163 = vunpack.c.h.b16 %v4076
        %v4164 = vunpack.c.l.b16 %v4077
        %v4165 = vunpack.c.h.b16 %v4077
        %v4166 = vunpack.c.l.b16 %v4078
        %v4167 = vunpack.c.h.b16 %v4078
        %v4168 = vunpack.c.l.b16 %v4079
        %v4169 = vunpack.c.h.b16 %v4079
        %v4170 = vunpack.c.l.b16 %v4080
        %v4171 = vunpack.c.h.b16 %v4080
        %v4172 = vunpack.c.l.b16 %v4081
        %v4173 = vunpack.c.h.b16 %v4081
        %v4174 = vunpack.c.l.b16 %v4082
        %v4175 = vunpack.c.h.b16 %v4082
        %v4176 = vunpack.c.l.b16 %v4083
        %v4177 = vunpack.c.h.b16 %v4083
        %v4178 = vunpack.c.l.b16 %v4084
        %v4179 = vunpack.c.h.b16 %v4084
        %v4180 = vunpack.c.l.b16 %v4085
        %v4181 = vunpack.c.h.b16 %v4085
        %v4182 = vunpack.c.l.b16 %v4086
        %v4183 = vunpack.c.h.b16 %v4086
        %v4184 = vunpack.c.l.b16 %v4087
        %v4185 = vunpack.c.h.b16 %v4087
        %v4186 = vunpack.c.l.b16 %v4088
        %v4187 = vunpack.c.h.b16 %v4088
        %v4188 = vunpack.c.l.b16 %v4089
        %v4189 = vunpack.c.h.b16 %v4089
        %v4190 = vunpack.c.l.b16 %v4090
        %v4191 = vunpack.c.h.b16 %v4090
        %v4192 = vunpack.c.l.b16 %v4091
        %v4193 = vunpack.c.h.b16 %v4091
        %v4194 = vunpack.c.l.b16 %v4092
        %v4195 = vunpack.c.h.b16 %v4092
        %v4196 = vunpack.c.l.b16 %v4093
        %v4197 = vunpack.c.h.b16 %v4093
        %v4198 = vunpack.c.l.b16 %v4094
        %v4199 = vunpack.c.h.b16 %v4094
        %v4200 = vunpack.c.l.b16 %v4095
        %v4201 = vunpack.c.h.b16 %v4095
        %v4202 = vunpack.c.l.b16 %v4096
        %v4203 = vunpack.c.h.b16 %v4096
        %v4204 = vunpack.c.l.b16 %v4097
        %v4205 = vunpack.c.h.b16 %v4097
        %v4206 = vpack.c.b16 %v4144, %v4142
        %v4207 = vpack.c.b16 %v4145, %v4143
        %v4208 = vpack.c.b16 %v4148, %v4146
        %v4209 = vpack.c.b16 %v4149, %v4147
        %v4210 = vpack.c.b16 %v4152, %v4150
        %v4211 = vpack.c.b16 %v4153, %v4151
        %v4212 = vpack.c.b16 %v4156, %v4154
        %v4213 = vpack.c.b16 %v4157, %v4155
        %v4214 = vpack.c.b16 %v4160, %v4158
        %v4215 = vpack.c.b16 %v4161, %v4159
        %v4216 = vpack.c.b16 %v4164, %v4162
        %v4217 = vpack.c.b16 %v4165, %v4163
        %v4218 = vpack.c.b16 %v4168, %v4166
        %v4219 = vpack.c.b16 %v4169, %v4167
        %v4220 = vpack.c.b16 %v4172, %v4170
        %v4221 = vpack.c.b16 %v4173, %v4171
        %v4222 = vpack.c.b16 %v4176, %v4174
        %v4223 = vpack.c.b16 %v4177, %v4175
        %v4224 = vpack.c.b16 %v4180, %v4178
        %v4225 = vpack.c.b16 %v4181, %v4179
        %v4226 = vpack.c.b16 %v4184, %v4182
        %v4227 = vpack.c.b16 %v4185, %v4183
        %v4228 = vpack.c.b16 %v4188, %v4186
        %v4229 = vpack.c.b16 %v4189, %v4187
        %v4230 = vpack.c.b16 %v4192, %v4190
        %v4231 = vpack.c.b16 %v4193, %v4191
        %v4232 = vpack.c.b16 %v4196, %v4194
        %v4233 = vpack.c.b16 %v4197, %v4195
        %v4234 = vpack.c.b16 %v4200, %v4198
        %v4235 = vpack.c.b16 %v4201, %v4199
        %v4236 = vpack.c.b16 %v4204, %v4202
        %v4237 = vpack.c.b16 %v4205, %v4203
        %4270 = vmatprep.subr.bf16.mxu0 %v4221
        %4271 = vmatpush1.bf16.msra.mxu0 %v4220
        %4272 = vmatprep.subr.bf16.mxu0 %v4219
        %4273 = vmatpush1.bf16.msra.mxu0 %v4218
        %4274 = vmatprep.subr.bf16.mxu0 %v4217
        %4275 = vmatpush1.bf16.msra.mxu0 %v4216
        %4276 = vmatprep.subr.bf16.mxu0 %v4215
        %4277 = vmatpush1.bf16.msra.mxu0 %v4214
        %4278 = vmatprep.subr.bf16.mxu0 %v4213
        %4279 = vmatpush1.bf16.msra.mxu0 %v4212
        %4280 = vmatprep.subr.bf16.mxu0 %v4211
        %4281 = vmatpush1.bf16.msra.mxu0 %v4210
        %4282 = vmatprep.subr.bf16.mxu0 %v4209
        %4283 = vmatpush1.bf16.msra.mxu0 %v4208
        %4284 = vmatprep.subr.bf16.mxu0 %v4207
        %4285 = vmatpush1.bf16.msra.mxu0 %v4206
        %4286 = vmatprep.subr.bf16.mxu0 %v4237
        %4287 = vmatpush2.bf16.msra.mxu0 %v4236
        %4288 = vmatprep.subr.bf16.mxu0 %v4235
        %4289 = vmatpush2.bf16.msra.mxu0 %v4234
        %4290 = vmatprep.subr.bf16.mxu0 %v4233
        %4291 = vmatpush2.bf16.msra.mxu0 %v4232
        %4292 = vmatprep.subr.bf16.mxu0 %v4231
        %4293 = vmatpush2.bf16.msra.mxu0 %v4230
        %4294 = vmatprep.subr.bf16.mxu0 %v4229
        %4295 = vmatpush2.bf16.msra.mxu0 %v4228
        %4296 = vmatprep.subr.bf16.mxu0 %v4227
        %4297 = vmatpush2.bf16.msra.mxu0 %v4226
        %4298 = vmatprep.subr.bf16.mxu0 %v4225
        %4299 = vmatpush2.bf16.msra.mxu0 %v4224
        %4300 = vmatprep.subr.bf16.mxu0 %v4223
        %4301 = vmatpush2.bf16.msra.mxu0 %v4222
        %4302 = vmatprep.mubr.bf16.mxu0 %v2569
        %4303 = vmatmul.mubr.bf16.gmra.mxu0 %v2568
        %v4304 = vpop.f32.mrf.mxu0
        %v4305 = vadd.f32 %v4103, %v4304
        %v4306 = vpop.f32.mrf.mxu0
        %v4307 = vadd.f32 %v4107, %v4306
        %v4308 = vpop.f32.mrf.mxu0
        %v4309 = vpop.f32.mrf.mxu0
        %4310 = vdwg.mxu0
        %v4311 = vpack.c.bf16 %v4305, %v4305
        %v4312 = vpack.c.bf16 %v4307, %v4307
        %v4313 = vmul.bf16 %v4311, 1056980736
        %v4314 = vmul.bf16 %v4312, 1056980736
        %v4315 = vmul.bf16 %v4311, 1027030327
        %v4316 = vmul.bf16 %v4312, 1027030327
        %v4317 = vmul.bf16 %v4315, %v4311
        %v4318 = vmul.bf16 %v4316, %v4312
        %v4319 = vmul.bf16 %v4317, %v4311
        %v4320 = vmul.bf16 %v4318, %v4312
        %v4321 = vadd.bf16 %v4311, %v4319
        %v4322 = vadd.bf16 %v4312, %v4320
        %v4323 = vmul.bf16 %v4321, 1061961548
        %v4324 = vmul.bf16 %v4322, 1061961548
        %v4325 = vtanh.bf16.pop %v4323
        %v4326 = vtanh.bf16.pop %v4324
        %v4327 = vadd.bf16 %v4325, 1065369472
        %v4328 = vadd.bf16 %v4326, 1065369472
        %v4329 = vmul.bf16 %v4313, %v4327
        %v4330 = vmul.bf16 %v4314, %v4328
        %v4331 = vld [vmem:[%s850 + $0x300] sm:$0xff]
        %v4332 = vld [vmem:[%s850 + $0x308] sm:$0xff]
        %v4333 = vld [vmem:[%s850 + $0x310] sm:$0xff]
        %v4334 = vld [vmem:[%s850 + $0x318] sm:$0xff]
        %v4335 = vld [vmem:[%s850 + $0x320] sm:$0xff]
        %v4336 = vld [vmem:[%s850 + $0x328] sm:$0xff]
        %v4337 = vld [vmem:[%s850 + $0x330] sm:$0xff]
        %v4338 = vld [vmem:[%s850 + $0x338] sm:$0xff]
        %v4339 = vld [vmem:[%s850 + $0x340] sm:$0xff]
        %v4340 = vld [vmem:[%s850 + $0x348] sm:$0xff]
        %v4341 = vld [vmem:[%s850 + $0x350] sm:$0xff]
        %v4342 = vld [vmem:[%s850 + $0x358] sm:$0xff]
        %v4343 = vld [vmem:[%s850 + $0x360] sm:$0xff]
        %v4344 = vld [vmem:[%s850 + $0x368] sm:$0xff]
        %v4345 = vld [vmem:[%s850 + $0x370] sm:$0xff]
        %v4346 = vld [vmem:[%s850 + $0x378] sm:$0xff]
        %v4347 = vld [vmem:[%s850 + $0x380] sm:$0xff]
        %v4348 = vld [vmem:[%s850 + $0x388] sm:$0xff]
        %v4349 = vld [vmem:[%s850 + $0x390] sm:$0xff]
        %v4350 = vld [vmem:[%s850 + $0x398] sm:$0xff]
        %v4351 = vld [vmem:[%s850 + $0x3a0] sm:$0xff]
        %v4352 = vld [vmem:[%s850 + $0x3a8] sm:$0xff]
        %v4353 = vld [vmem:[%s850 + $0x3b0] sm:$0xff]
        %v4354 = vld [vmem:[%s850 + $0x3b8] sm:$0xff]
        %v4355 = vld [vmem:[%s850 + $0x3c0] sm:$0xff]
        %v4356 = vld [vmem:[%s850 + $0x3c8] sm:$0xff]
        %v4357 = vld [vmem:[%s850 + $0x3d0] sm:$0xff]
        %v4358 = vld [vmem:[%s850 + $0x3d8] sm:$0xff]
        %v4359 = vld [vmem:[%s850 + $0x3e0] sm:$0xff]
        %v4360 = vld [vmem:[%s850 + $0x3e8] sm:$0xff]
        %v4361 = vld [vmem:[%s850 + $0x3f0] sm:$0xff]
        %v4362 = vld [vmem:[%s850 + $0x3f8] sm:$0xff]
        %v4395 = vunpack.c.l.b16 %v4331
        %v4396 = vunpack.c.h.b16 %v4331
        %v4397 = vunpack.c.l.b16 %v4332
        %v4398 = vunpack.c.h.b16 %v4332
        %v4399 = vunpack.c.l.b16 %v4333
        %v4400 = vunpack.c.h.b16 %v4333
        %v4401 = vunpack.c.l.b16 %v4334
        %v4402 = vunpack.c.h.b16 %v4334
        %v4403 = vunpack.c.l.b16 %v4335
        %v4404 = vunpack.c.h.b16 %v4335
        %v4405 = vunpack.c.l.b16 %v4336
        %v4406 = vunpack.c.h.b16 %v4336
        %v4407 = vunpack.c.l.b16 %v4337
        %v4408 = vunpack.c.h.b16 %v4337
        %v4409 = vunpack.c.l.b16 %v4338
        %v4410 = vunpack.c.h.b16 %v4338
        %v4411 = vunpack.c.l.b16 %v4339
        %v4412 = vunpack.c.h.b16 %v4339
        %v4413 = vunpack.c.l.b16 %v4340
        %v4414 = vunpack.c.h.b16 %v4340
        %v4415 = vunpack.c.l.b16 %v4341
        %v4416 = vunpack.c.h.b16 %v4341
        %v4417 = vunpack.c.l.b16 %v4342
        %v4418 = vunpack.c.h.b16 %v4342
        %v4419 = vunpack.c.l.b16 %v4343
        %v4420 = vunpack.c.h.b16 %v4343
        %v4421 = vunpack.c.l.b16 %v4344
        %v4422 = vunpack.c.h.b16 %v4344
        %v4423 = vunpack.c.l.b16 %v4345
        %v4424 = vunpack.c.h.b16 %v4345
        %v4425 = vunpack.c.l.b16 %v4346
        %v4426 = vunpack.c.h.b16 %v4346
        %v4427 = vunpack.c.l.b16 %v4347
        %v4428 = vunpack.c.h.b16 %v4347
        %v4429 = vunpack.c.l.b16 %v4348
        %v4430 = vunpack.c.h.b16 %v4348
        %v4431 = vunpack.c.l.b16 %v4349
        %v4432 = vunpack.c.h.b16 %v4349
        %v4433 = vunpack.c.l.b16 %v4350
        %v4434 = vunpack.c.h.b16 %v4350
        %v4435 = vunpack.c.l.b16 %v4351
        %v4436 = vunpack.c.h.b16 %v4351
        %v4437 = vunpack.c.l.b16 %v4352
        %v4438 = vunpack.c.h.b16 %v4352
        %v4439 = vunpack.c.l.b16 %v4353
        %v4440 = vunpack.c.h.b16 %v4353
        %v4441 = vunpack.c.l.b16 %v4354
        %v4442 = vunpack.c.h.b16 %v4354
        %v4443 = vunpack.c.l.b16 %v4355
        %v4444 = vunpack.c.h.b16 %v4355
        %v4445 = vunpack.c.l.b16 %v4356
        %v4446 = vunpack.c.h.b16 %v4356
        %v4447 = vunpack.c.l.b16 %v4357
        %v4448 = vunpack.c.h.b16 %v4357
        %v4449 = vunpack.c.l.b16 %v4358
        %v4450 = vunpack.c.h.b16 %v4358
        %v4451 = vunpack.c.l.b16 %v4359
        %v4452 = vunpack.c.h.b16 %v4359
        %v4453 = vunpack.c.l.b16 %v4360
        %v4454 = vunpack.c.h.b16 %v4360
        %v4455 = vunpack.c.l.b16 %v4361
        %v4456 = vunpack.c.h.b16 %v4361
        %v4457 = vunpack.c.l.b16 %v4362
        %v4458 = vunpack.c.h.b16 %v4362
        %v4459 = vpack.c.b16 %v4397, %v4395
        %v4460 = vpack.c.b16 %v4398, %v4396
        %v4461 = vpack.c.b16 %v4401, %v4399
        %v4462 = vpack.c.b16 %v4402, %v4400
        %v4463 = vpack.c.b16 %v4405, %v4403
        %v4464 = vpack.c.b16 %v4406, %v4404
        %v4465 = vpack.c.b16 %v4409, %v4407
        %v4466 = vpack.c.b16 %v4410, %v4408
        %v4467 = vpack.c.b16 %v4413, %v4411
        %v4468 = vpack.c.b16 %v4414, %v4412
        %v4469 = vpack.c.b16 %v4417, %v4415
        %v4470 = vpack.c.b16 %v4418, %v4416
        %v4471 = vpack.c.b16 %v4421, %v4419
        %v4472 = vpack.c.b16 %v4422, %v4420
        %v4473 = vpack.c.b16 %v4425, %v4423
        %v4474 = vpack.c.b16 %v4426, %v4424
        %v4475 = vpack.c.b16 %v4429, %v4427
        %v4476 = vpack.c.b16 %v4430, %v4428
        %v4477 = vpack.c.b16 %v4433, %v4431
        %v4478 = vpack.c.b16 %v4434, %v4432
        %v4479 = vpack.c.b16 %v4437, %v4435
        %v4480 = vpack.c.b16 %v4438, %v4436
        %v4481 = vpack.c.b16 %v4441, %v4439
        %v4482 = vpack.c.b16 %v4442, %v4440
        %v4483 = vpack.c.b16 %v4445, %v4443
        %v4484 = vpack.c.b16 %v4446, %v4444
        %v4485 = vpack.c.b16 %v4449, %v4447
        %v4486 = vpack.c.b16 %v4450, %v4448
        %v4487 = vpack.c.b16 %v4453, %v4451
        %v4488 = vpack.c.b16 %v4454, %v4452
        %v4489 = vpack.c.b16 %v4457, %v4455
        %v4490 = vpack.c.b16 %v4458, %v4456
        %4523 = vmatprep.subr.bf16.mxu0 %v4474
        %4524 = vmatpush1.bf16.msra.mxu0 %v4473
        %4525 = vmatprep.subr.bf16.mxu0 %v4472
        %4526 = vmatpush1.bf16.msra.mxu0 %v4471
        %4527 = vmatprep.subr.bf16.mxu0 %v4470
        %4528 = vmatpush1.bf16.msra.mxu0 %v4469
        %4529 = vmatprep.subr.bf16.mxu0 %v4468
        %4530 = vmatpush1.bf16.msra.mxu0 %v4467
        %4531 = vmatprep.subr.bf16.mxu0 %v4466
        %4532 = vmatpush1.bf16.msra.mxu0 %v4465
        %4533 = vmatprep.subr.bf16.mxu0 %v4464
        %4534 = vmatpush1.bf16.msra.mxu0 %v4463
        %4535 = vmatprep.subr.bf16.mxu0 %v4462
        %4536 = vmatpush1.bf16.msra.mxu0 %v4461
        %4537 = vmatprep.subr.bf16.mxu0 %v4460
        %4538 = vmatpush1.bf16.msra.mxu0 %v4459
        %4539 = vmatprep.subr.bf16.mxu0 %v4490
        %4540 = vmatpush2.bf16.msra.mxu0 %v4489
        %4541 = vmatprep.subr.bf16.mxu0 %v4488
        %4542 = vmatpush2.bf16.msra.mxu0 %v4487
        %4543 = vmatprep.subr.bf16.mxu0 %v4486
        %4544 = vmatpush2.bf16.msra.mxu0 %v4485
        %4545 = vmatprep.subr.bf16.mxu0 %v4484
        %4546 = vmatpush2.bf16.msra.mxu0 %v4483
        %4547 = vmatprep.subr.bf16.mxu0 %v4482
        %4548 = vmatpush2.bf16.msra.mxu0 %v4481
        %4549 = vmatprep.subr.bf16.mxu0 %v4480
        %4550 = vmatpush2.bf16.msra.mxu0 %v4479
        %4551 = vmatprep.subr.bf16.mxu0 %v4478
        %4552 = vmatpush2.bf16.msra.mxu0 %v4477
        %4553 = vmatprep.subr.bf16.mxu0 %v4476
        %4554 = vmatpush2.bf16.msra.mxu0 %v4475
        %4555 = vmatprep.mubr.bf16.mxu0 %v4330
        %4556 = vmatmul.mubr.bf16.gmra.mxu0 %v4329
        %v4557 = vpop.f32.mrf.mxu0
        %v4558 = vadd.f32 0.0, %v4557
        %v4559 = vpop.f32.mrf.mxu0
        %v4560 = vadd.f32 0.0, %v4559
        %v4561 = vpop.f32.mrf.mxu0
        %v4562 = vpop.f32.mrf.mxu0
        %4563 = vdwg.mxu0
        %v4564 = vadd.f32 %v4064, %v4558
        %v4565 = vadd.f32 %v4065, %v4560
        %v4566 = vld [vmem:[%s859] sm:$0x3]
        %v4568 = vlaneseq
        %v4569 = vshrl.u32 %v4568, 7
        %v4570 = vsub.s32 0, %v4569
        %v4571 = vrot.slane %v4566, %v4570
        %v4572 = vlaneseq
        %v4573 = vshrl.u32 %v4572, 7
        %v4574 = vsub.s32 1, %v4573
        %v4575 = vrot.slane %v4566, %v4574
        %v4578 = vadd.f32 %v4564, %v4571
        %v4579 = vadd.f32 %v4565, %v4575
        %v4580 = vadd.f32 %v4578, %v2566
        %v4581 = vadd.f32 %v4579, %v2567
        %v4582 = vld [vmem:[%s868] sm:$0x3]
        %v4583 = vld [vmem:[%s877] sm:$0x3]
        %v4584 = vadd.f32 %v4580, %v4581
        %4585 = vadd.xlane.f32.xlu0 %v4584
        %v4586 = vpop.xlane.xlu0 %4585
        %v4587 = vmul.f32 %v4586, %v2528
        %v4588 = vsub.f32 %v4580, %v4587
        %v4589 = vsub.f32 %v4581, %v4587
        %v4590 = vmul.f32 %v4588, %v4588
        %v4591 = vmul.f32 %v4589, %v4589
        %v4592 = vadd.f32 %v4590, %v4591
        %4593 = vadd.xlane.f32.xlu0 %v4592
        %v4594 = vpop.xlane.xlu0 %4593
        %v4595 = vmul.f32 %v4594, %v2528
        %v4596 = vadd.f32 %v4595, 1e-12
        %v4597 = vrsqrt.pop %v4596
        %v4598 = vmul.f32 %v4588, %v4597
        %v4599 = vmul.f32 %v4589, %v4597
        %v4601 = vlaneseq
        %v4602 = vshrl.u32 %v4601, 7
        %v4603 = vsub.s32 0, %v4602
        %v4604 = vrot.slane %v4582, %v4603
        %v4605 = vlaneseq
        %v4606 = vshrl.u32 %v4605, 7
        %v4607 = vsub.s32 1, %v4606
        %v4608 = vrot.slane %v4582, %v4607
        %v4611 = vmul.f32 %v4598, %v4604
        %v4612 = vmul.f32 %v4599, %v4608
        %v4614 = vlaneseq
        %v4615 = vshrl.u32 %v4614, 7
        %v4616 = vsub.s32 0, %v4615
        %v4617 = vrot.slane %v4583, %v4616
        %v4618 = vlaneseq
        %v4619 = vshrl.u32 %v4618, 7
        %v4620 = vsub.s32 1, %v4619
        %v4621 = vrot.slane %v4583, %v4620
        %v4624 = vadd.f32 %v4611, %v4617
        %v4625 = vadd.f32 %v4612, %v4621
        %v4626 = vpack.c.bf16 %v4624, %v4624
        %v4627 = vpack.c.bf16 %v4625, %v4625
        %v4630 = vunpack.c.l.b16 %v4626
        %v4631 = vunpack.c.l.b16 %v4627
        %v4632 = vpack.c.b16 %v4631, %v4630
        %4634 = vst [vmem:[%s1001] sm:$0xff] %v4632
        %p4635 = scmp.lt.s32.totalorder %s33, 1
        %s4636 = scalar_select %p4635, %s33, 1
        %s4637 = smul.addr %s4636, 2
        %s4638 = smul.addr %s4637, 4
        %s4639 = scalar_lea.vmem %s16, %s4638
        // Predicated region
        $region145: #{bert_fine_tune_mini_forward.1} parent=83 // pred_check
          %p4640 = pneg %p465
        $region146: #{bert_fine_tune_mini_forward.1} parent=83 // pred_check_branch
          %4642 = sbr.rel (%p4640) target = $region148
        $region147: #{bert_fine_tune_mini_forward.1} parent=83 // pred_region
          _
        $region148: #{bert_fine_tune_mini_forward.1} parent=83 // pred_fallthru
          _
      $region84: #{bert_fine_tune_mini_forward.1} parent=5 // pred_fallthru
        _
      %p4643 = scmp.le.s32.totalorder 2, %s24
      // Predicated region
      $region149: #{bert_fine_tune_mini_forward.1} parent=5 // pred_check
        %p4644 = pneg %p4643
      $region150: #{bert_fine_tune_mini_forward.1} parent=5 // pred_check_branch
        %4646 = sbr.rel (%p4644) target = $region152
      $region151: #{bert_fine_tune_mini_forward.1} parent=5 // pred_region
        %s4647 = ssub.s32 %s24, 2
        // Predicated region
        $region153: #{bert_fine_tune_mini_forward.1} parent=151 // pred_check
          %p4648 = pneg %p471
        $region154: #{bert_fine_tune_mini_forward.1} parent=151 // pred_check_branch
          %4650 = sbr.rel (%p4648) target = $region156
        $region155: #{bert_fine_tune_mini_forward.1} parent=151 // pred_region
          %p4651 = scmp.lt.s32.totalorder %s35, 1
          %s4652 = scalar_select %p4651, %s35, 1
          %s4653 = smul.addr %s4652, 2
          %s4654 = smul.addr %s4653, 4
          %s4655 = scalar_lea.vmem %s16, %s4654
        $region156: #{bert_fine_tune_mini_forward.1} parent=151 // pred_fallthru
          _
      $region152: #{bert_fine_tune_mini_forward.1} parent=5 // pred_fallthru
        _
    $region6: #{bert_fine_tune_mini_forward.1} parent=1 // loop_footer
      %s28 = sadd.s32 1, %s24
    $region7: #{bert_fine_tune_mini_forward.1} parent=1 // loop_footer_branch
      %23 = sbr.rel target = $region3
    $region8: #{bert_fine_tune_mini_forward.1} parent=1 // loop_exit
      _
    %4656 = vsyncpa [#allocation3], 1
    %s4657 = scalar_lea.sflag [#allocation3], 1
    %4658 = vsyncpa %s4657, 1
    %4659 = vsyncpa [#allocation5], 1

</llo_original>
